<compile_context>
chip_gen: v7x
topology: tpu7x:2x2x1
jax: 0.10.0
libtpu: 0.0.40
codegen_flags: <defaults>
</compile_context>

<pallas_src>
import functools
import jax
import jax.numpy as jnp
from jax.scipy.linalg import block_diag
from jax.experimental import pallas as pl
from jax.experimental.pallas import tpu as pltpu  # noqa: F401  (kept for memory-space APIs)

# ---------------- SIFlow_off hyperparameters (small instantiation) ----------------
U_DIM, X_DIM, Y_DIM = 2, 4, 3
HIDDEN_S, N_HIDDEN_S = 32, 2
H_RNN_S, H_LIN_S = 16, 16
SUMMARY_DIM = 8
N_BLOCKS = 3
HIDDEN_F, N_HIDDEN_F = 32, 2
H_RNN_F, H_LIN_F = 16, 16
HORIZON, WIN = 8, 8
DELTAT = 0.01

D_U = HORIZON * U_DIM          # flattened control dimension sampled by the flow
N_EXTRA = N_HIDDEN_F - 1       # extra hidden layers in the dynamics MLP


# ---------------------------------- fused Pallas kernel ----------------------------------
def _siflow_fused_kernel(
        yp_ref, yf_ref, z_ref,
        e1w_ref, e1b_ref, e2w_ref, e2b_ref,
        s0wx_ref, s0wy_ref, s0b_ref, smw_ref, smb_ref, sow_ref, sob_ref,
        bc1w_ref, bc1b_ref, bc2w_ref, bc2b_ref,
        w1u_ref, b1u_ref,
        w1x_ref, wl2f_ref,
        wh_ref, bh_ref,
        a_ref, cx_ref, byw_ref, cy_ref, bl2_ref,
        out_ref,
        *, n_mid, n_blocks, d_u, w2blk, horizon, n_extra, hidden_f, y_dim):
    """Whole forward pass in one launch; every ref is a whole-array VMEM block."""
    dot = lambda a, b: jnp.dot(a, b, preferred_element_type=jnp.float32)

    # ---- subnet.encoder(y_past): tanh linear -> linear -> x0 ----
    h = jnp.tanh(dot(yp_ref[...], e1w_ref[...]) + e1b_ref[...])
    x0 = dot(h, e2w_ref[...]) + e2b_ref[...]                        # (B, X_DIM)

    # ---- cnf summary/condition net over concat(x0, flatten(y)) (concat folded into
    #      split first-layer weights so no in-kernel concatenation) ----
    c = jnp.tanh(dot(x0, s0wx_ref[...]) + dot(yf_ref[...], s0wy_ref[...]) + s0b_ref[...])
    for j in range(n_mid):
        c = jnp.tanh(dot(c, smw_ref[j]) + smb_ref[j])
    c = dot(c, sow_ref[...]) + sob_ref[...]                         # (B, SUMMARY_DIM)

    # ---- N_BLOCKS conditioners batched into TWO dots ----
    #   hk_all = tanh(c @ [W1_0|W1_1|...] + [b1_0|b1_1|...])
    #   out2   = hk_all @ blockdiag(W2_0, W2_1, ...) + [b2_0|b2_1|...]
    hk_all = jnp.tanh(dot(c, bc1w_ref[...]) + bc1b_ref[...])        # (B, NB*HIDDEN_F)
    out2 = dot(hk_all, bc2w_ref[...]) + bc2b_ref[...]               # (B, NB*2*D_U)

    # Compose the affine blocks (forward order k = 0..NB-1) into a single (scale, shift).
    scale = None
    shift = None
    for k in range(n_blocks):
        base = k * w2blk
        ls = jnp.tanh(out2[:, base:base + d_u])
        sh = out2[:, base + d_u:base + w2blk]
        s = jnp.exp(ls)
        if scale is None:
            scale, shift = s, sh
        else:
            scale = scale * s
            shift = shift * s + sh

    # ---- affine flow applied to (noise[0], mean(noise)); exact for an affine flow ----
    z0 = z_ref[0]                                                   # (B, D_U)
    zm = jnp.mean(z_ref[...], axis=0)                               # (B, D_U)
    us0 = z0 * scale + shift
    u_mean = zm * scale + shift
    out_ref[:, 0:d_u] = us0                                         # us[0] output

    # ---- control projection for ALL steps in one dot: kron(I_H, W1u) block-diag ----
    up_all = dot(u_mean, w1u_ref[...]) + b1u_ref[...]               # (B, HORIZON*HIDDEN_F)

    # ---- Euler rollout in the (hx = x@W1x, yacc = x@Wl2_fold) basis; dt pre-folded ----
    hx = dot(x0, w1x_ref[...])                                      # (B, HIDDEN_F)
    yacc = dot(x0, wl2f_ref[...])                                   # (B, Y_DIM)
    for t in range(horizon):                                        # static unrolled loop
        h1 = jnp.tanh(hx + up_all[:, t * hidden_f:(t + 1) * hidden_f])
        for j in range(n_extra):
            h1 = jnp.tanh(dot(h1, wh_ref[j]) + bh_ref[j])
        hx = hx + dot(h1, a_ref[...]) + cx_ref[...]                 # x_{t+1} @ W1x
        yacc = yacc + dot(h1, byw_ref[...]) + cy_ref[...]           # x_{t+1} @ Wl2_fold
        out_ref[:, d_u + t * y_dim:d_u + (t + 1) * y_dim] = yacc + bl2_ref[...]


# ---------------------------------- parameter packing ----------------------------------
def pack_params(p):
    """One-time constant packing (OUTSIDE the per-call jit path)."""
    eps = 1e-5
    bn_scale = p["bn_gamma"] / jnp.sqrt(p["bn_var"] + eps)
    wl2f = bn_scale[:, None] * p["l2_w"]                                   # (X_DIM, Y_DIM)
    bl2f = (p["bn_beta"] - p["bn_mean"] * bn_scale) @ p["l2_w"] + p["l2_b"]  # (Y_DIM,)

    return dict(
        e1w=p["enc1_w"], e1b=p["enc1_b"].reshape(1, -1),
        e2w=p["enc2_w"], e2b=p["enc2_b"].reshape(1, -1),
        s0wx=p["sum0_w"][:X_DIM], s0wy=p["sum0_w"][X_DIM:],
        s0b=p["sum0_b"].reshape(1, -1),
        smw=jnp.stack([p[f"sum{i}_w"] for i in range(1, N_HIDDEN_S)]),
        smb=jnp.stack([p[f"sum{i}_b"].reshape(1, -1) for i in range(1, N_HIDDEN_S)]),
        sow=p["sum_out_w"], sob=p["sum_out_b"].reshape(1, -1),
        # conditioners: column-concat first layer, block-diagonal second layer
        bc1w=jnp.concatenate([p[f"blk{k}_1_w"] for k in range(N_BLOCKS)], axis=1),
        bc1b=jnp.concatenate([p[f"blk{k}_1_b"] for k in range(N_BLOCKS)]).reshape(1, -1),
        bc2w=block_diag(*[p[f"blk{k}_2_w"] for k in range(N_BLOCKS)]),
        bc2b=jnp.concatenate([p[f"blk{k}_2_b"] for k in range(N_BLOCKS)]).reshape(1, -1),
        # control projection for all HORIZON steps as one block-diagonal matmul
        w1u=jnp.kron(jnp.eye(HORIZON, dtype=jnp.float32), p["dyn1u_w"]),
        b1u=jnp.tile(p["dyn1_b"], HORIZON).reshape(1, -1),
        # rollout in the (hx, yacc) basis, dt and bn2 folded into the weights
        w1x=p["dyn1x_w"],
        wl2f=wl2f,
        wh=p["dynh_w"], bh=p["dynh_b"],
        a=DELTAT * (p["dyn2_w"] @ p["dyn1x_w"]),
        cx=(DELTAT * (p["dyn2_b"] @ p["dyn1x_w"])).reshape(1, -1),
        byw=DELTAT * (p["dyn2_w"] @ wl2f),
        cy=(DELTAT * (p["dyn2_b"] @ wl2f)).reshape(1, -1),
        bl2=bl2f.reshape(1, -1),
    )


# ---------------------------------- forward wrapper ----------------------------------
def siflow_off_forward(packed, y_past, y, noise):
    """SIFlow_off.forward(y_past, y, n_samples) -> (us[0], y_pred)."""
    b = y_past.shape[0]
    yp = y_past.reshape(b, WIN * Y_DIM)
    yf = y.reshape(b, HORIZON * Y_DIM)

    out = pl.pallas_call(
        functools.partial(_siflow_fused_kernel,
                          n_mid=N_HIDDEN_S - 1, n_blocks=N_BLOCKS,
                          d_u=D_U, w2blk=2 * D_U, horizon=HORIZON,
                          n_extra=N_EXTRA, hidden_f=HIDDEN_F, y_dim=Y_DIM),
        out_shape=jax.ShapeDtypeStruct((b, D_U + HORIZON * Y_DIM), jnp.float32),
    )(yp, yf, noise,
      packed["e1w"], packed["e1b"], packed["e2w"], packed["e2b"],
      packed["s0wx"], packed["s0wy"], packed["s0b"],
      packed["smw"], packed["smb"], packed["sow"], packed["sob"],
      packed["bc1w"], packed["bc1b"], packed["bc2w"], packed["bc2b"],
      packed["w1u"], packed["b1u"],
      packed["w1x"], packed["wl2f"],
      packed["wh"], packed["bh"],
      packed["a"], packed["cx"], packed["byw"], packed["cy"], packed["bl2"])

    us0 = out[:, :D_U].reshape(b, HORIZON, U_DIM)          # = us[0]
    y_pred = out[:, D_U:].reshape(b, HORIZON, Y_DIM)       # = subnet.test(x0, us.mean(0))
    return us0, y_pred


# ---------------------------------- pure-JAX reference ----------------------------------
def reference_forward(p, y_past, y, noise):
    """Unfused/unfolded reconstruction (same architecture) for a structural sanity check."""
    hp = lambda a, w: jnp.dot(a, w, precision=jax.lax.Precision.HIGHEST)
    b = y_past.shape[0]
    yp = y_past.reshape(b, -1)
    yf = y.reshape(b, -1)

    h = jnp.tanh(hp(yp, p["enc1_w"]) + p["enc1_b"])
    x0 = hp(h, p["enc2_w"]) + p["enc2_b"]
    c = jnp.concatenate([x0, yf], axis=-1)
    c = jnp.tanh(hp(c, p["sum0_w"]) + p["sum0_b"])
    for i in range(1, N_HIDDEN_S):
        c = jnp.tanh(hp(c, p[f"sum{i}_w"]) + p[f"sum{i}_b"])
    c = hp(c, p["sum_out_w"]) + p["sum_out_b"]

    def flow(z):
        u = z
        for k in range(N_BLOCKS):
            hk = jnp.tanh(hp(c, p[f"blk{k}_1_w"]) + p[f"blk{k}_1_b"])
            o = hp(hk, p[f"blk{k}_2_w"]) + p[f"blk{k}_2_b"]
            u = u * jnp.exp(jnp.tanh(o[:, :D_U])) + o[:, D_U:]
        return u

    us = jax.vmap(flow)(noise)
    us0 = us[0]
    um = us.mean(0)

    eps = 1e-5
    bn_scale = p["bn_gamma"] / jnp.sqrt(p["bn_var"] + eps)
    x = x0
    ys = []
    for t in range(HORIZON):
        u_t = um[:, t * U_DIM:(t + 1) * U_DIM]
        h1 = jnp.tanh(hp(x, p["dyn1x_w"]) + hp(u_t, p["dyn1u_w"]) + p["dyn1_b"])
        for j in range(N_EXTRA):
            h1 = jnp.tanh(hp(h1, p["dynh_w"][j]) + p["dynh_b"][j])
        dx = hp(h1, p["dyn2_w"]) + p["dyn2_b"]
        x = x + DELTAT * dx
        xb = (x - p["bn_mean"]) * bn_scale + p["bn_beta"]
        ys.append(hp(xb, p["l2_w"]) + p["l2_b"])
    return us0.reshape(b, HORIZON, U_DIM), jnp.stack(ys, axis=1)


# ---------------------------------- parameters ----------------------------------
def _xavier(key, shape):
    fan_in, fan_out = shape[-2], shape[-1]
    limit = (6.0 / (fan_in + fan_out)) ** 0.5
    return jax.random.uniform(key, shape, jnp.float32, -limit, limit)


def init_params(key):
    keys = iter(jax.random.split(key, 64))
    p = {}

    def lin(name, din, dout):
        p[name + "_w"] = _xavier(next(keys), (din, dout))
        p[name + "_b"] = jnp.full((dout,), 0.001, jnp.float32)  # init_bias = 0.001

    # subnet.encoder : flatten(y_past) -> h_linear_dim_f -> x_dim
    lin("enc1", WIN * Y_DIM, H_LIN_F)
    lin("enc2", H_LIN_F, X_DIM)
    # cnf summary/condition net : concat(x0, flatten(y)) -> summary_dim
    din = X_DIM + HORIZON * Y_DIM
    for i in range(N_HIDDEN_S):
        lin(f"sum{i}", din, HIDDEN_S)
        din = HIDDEN_S
    lin("sum_out", din, SUMMARY_DIM)
    # per flow-block conditioner : summary -> (log_scale | shift)
    for k in range(N_BLOCKS):
        lin(f"blk{k}_1", SUMMARY_DIM, HIDDEN_F)
        lin(f"blk{k}_2", HIDDEN_F, 2 * D_U)
    # dynamics MLP f(x, u)
    p["dyn1x_w"] = _xavier(next(keys), (X_DIM, HIDDEN_F))
    p["dyn1u_w"] = _xavier(next(keys), (U_DIM, HIDDEN_F))
    p["dyn1_b"] = jnp.full((HIDDEN_F,), 0.001, jnp.float32)
    p["dynh_w"] = _xavier(next(keys), (N_EXTRA, HIDDEN_F, HIDDEN_F))
    p["dynh_b"] = jnp.full((N_EXTRA, 1, HIDDEN_F), 0.001, jnp.float32)
    lin("dyn2", HIDDEN_F, X_DIM)
    # subnet.bn2 (affine, eval-mode running stats) + subnet.l2 (observation head)
    p["bn_gamma"] = jnp.ones((X_DIM,), jnp.float32)
    p["bn_beta"] = jnp.zeros((X_DIM,), jnp.float32)
    p["bn_mean"] = jnp.zeros((X_DIM,), jnp.float32)
    p["bn_var"] = jnp.ones((X_DIM,), jnp.float32)
    lin("l2", X_DIM, Y_DIM)
    return p


# ---------------------------------- main ----------------------------------
if __name__ == "__main__":
    key = jax.random.PRNGKey(0)
    kp, k1, k2, kn = jax.random.split(key, 4)
    params = init_params(kp)
    packed = pack_params(params)        # one-time packing, outside the per-call jit path

    B, N_SAMPLES = 2, 4                 # NOTE: B < 8 wastes sublanes; pad batch if it scales
    y_past = jax.random.normal(k1, (B, WIN, Y_DIM), jnp.float32)
    y = jax.random.normal(k2, (B, HORIZON, Y_DIM), jnp.float32)
    noise = jax.random.normal(kn, (N_SAMPLES, B, D_U), jnp.float32)

    fwd = jax.jit(siflow_off_forward)
    u0, y_pred = fwd(packed, y_past, y, noise)
    jax.block_until_ready((u0, y_pred))

    assert u0.shape == (B, HORIZON, U_DIM), u0.shape
    assert y_pred.shape == (B, HORIZON, Y_DIM), y_pred.shape
    assert bool(jnp.all(jnp.isfinite(u0))) and bool(jnp.all(jnp.isfinite(y_pred)))

    # Structural sanity check against the unfused / unfolded reference.
    u0_ref, y_ref = jax.jit(reference_forward)(params, y_past, y, noise)
    assert bool(jnp.allclose(u0, u0_ref, atol=1e-3, rtol=1e-2)), "us[0] mismatch vs reference"
    assert bool(jnp.allclose(y_pred, y_ref, atol=1e-3, rtol=1e-2)), "y_pred mismatch vs reference"

    print("KERNEL_OK")
</pallas_src>

<mosaic_0001>
module attributes {stable_mosaic.version = 11 : i64} {
  func.func @_siflow_fused_kernel(%arg0: memref<2x24xf32, #tpu.memory_space<vmem>>, %arg1: memref<2x24xf32, #tpu.memory_space<vmem>>, %arg2: memref<4x2x16xf32, #tpu.memory_space<vmem>>, %arg3: memref<24x16xf32, #tpu.memory_space<vmem>>, %arg4: memref<1x16xf32, #tpu.memory_space<vmem>>, %arg5: memref<16x4xf32, #tpu.memory_space<vmem>>, %arg6: memref<1x4xf32, #tpu.memory_space<vmem>>, %arg7: memref<4x32xf32, #tpu.memory_space<vmem>>, %arg8: memref<24x32xf32, #tpu.memory_space<vmem>>, %arg9: memref<1x32xf32, #tpu.memory_space<vmem>>, %arg10: memref<1x32x32xf32, #tpu.memory_space<vmem>>, %arg11: memref<1x1x32xf32, #tpu.memory_space<vmem>>, %arg12: memref<32x8xf32, #tpu.memory_space<vmem>>, %arg13: memref<1x8xf32, #tpu.memory_space<vmem>>, %arg14: memref<8x96xf32, #tpu.memory_space<vmem>>, %arg15: memref<1x96xf32, #tpu.memory_space<vmem>>, %arg16: memref<96x96xf32, #tpu.memory_space<vmem>>, %arg17: memref<1x96xf32, #tpu.memory_space<vmem>>, %arg18: memref<16x256xf32, #tpu.memory_space<vmem>>, %arg19: memref<1x256xf32, #tpu.memory_space<vmem>>, %arg20: memref<4x32xf32, #tpu.memory_space<vmem>>, %arg21: memref<4x3xf32, #tpu.memory_space<vmem>>, %arg22: memref<1x32x32xf32, #tpu.memory_space<vmem>>, %arg23: memref<1x1x32xf32, #tpu.memory_space<vmem>>, %arg24: memref<32x32xf32, #tpu.memory_space<vmem>>, %arg25: memref<1x32xf32, #tpu.memory_space<vmem>>, %arg26: memref<32x3xf32, #tpu.memory_space<vmem>>, %arg27: memref<1x3xf32, #tpu.memory_space<vmem>>, %arg28: memref<1x3xf32, #tpu.memory_space<vmem>>, %arg29: memref<2x40xf32, #tpu.memory_space<vmem>>) attributes {dimension_semantics = [], scalar_prefetch = 0 : i64, scratch_operands = 0 : i64, tpu.core_type = #tpu.core_type<tc>} {
    %c0 = arith.constant 0 : index
    %c0_0 = arith.constant 0 : index
    %0 = vector.load %arg0[%c0, %c0_0] : memref<2x24xf32, #tpu.memory_space<vmem>>, vector<2x24xf32>
    %c0_1 = arith.constant 0 : index
    %c0_2 = arith.constant 0 : index
    %1 = vector.load %arg3[%c0_1, %c0_2] : memref<24x16xf32, #tpu.memory_space<vmem>>, vector<24x16xf32>
    %cst = arith.constant dense<0.000000e+00> : vector<2x16xf32>
    %2 = tpu.matmul %0, %1, %cst {dimension_numbers = #tpu.dot_dimension_numbers<[1], [0], [0], [1], [0, 0, 1, 1], [], []>} : vector<2x24xf32>, vector<24x16xf32>, vector<2x16xf32> -> vector<2x16xf32>
    %c0_3 = arith.constant 0 : index
    %c0_4 = arith.constant 0 : index
    %3 = vector.load %arg4[%c0_3, %c0_4] : memref<1x16xf32, #tpu.memory_space<vmem>>, vector<1x16xf32>
    %4 = vector.broadcast %3 : vector<1x16xf32> to vector<2x16xf32>
    %5 = arith.addf %2, %4 : vector<2x16xf32>
    %6 = math.tanh %5 : vector<2x16xf32>
    %c0_5 = arith.constant 0 : index
    %c0_6 = arith.constant 0 : index
    %7 = vector.load %arg5[%c0_5, %c0_6] : memref<16x4xf32, #tpu.memory_space<vmem>>, vector<16x4xf32>
    %cst_7 = arith.constant dense<0.000000e+00> : vector<2x4xf32>
    %8 = tpu.matmul %6, %7, %cst_7 {dimension_numbers = #tpu.dot_dimension_numbers<[1], [0], [0], [1], [0, 0, 1, 1], [], []>} : vector<2x16xf32>, vector<16x4xf32>, vector<2x4xf32> -> vector<2x4xf32>
    %c0_8 = arith.constant 0 : index
    %c0_9 = arith.constant 0 : index
    %9 = vector.load %arg6[%c0_8, %c0_9] : memref<1x4xf32, #tpu.memory_space<vmem>>, vector<1x4xf32>
    %10 = vector.broadcast %9 : vector<1x4xf32> to vector<2x4xf32>
    %11 = arith.addf %8, %10 : vector<2x4xf32>
    %c0_10 = arith.constant 0 : index
    %c0_11 = arith.constant 0 : index
    %12 = vector.load %arg7[%c0_10, %c0_11] : memref<4x32xf32, #tpu.memory_space<vmem>>, vector<4x32xf32>
    %cst_12 = arith.constant dense<0.000000e+00> : vector<2x32xf32>
    %13 = tpu.matmul %11, %12, %cst_12 {dimension_numbers = #tpu.dot_dimension_numbers<[1], [0], [0], [1], [0, 0, 1, 1], [], []>} : vector<2x4xf32>, vector<4x32xf32>, vector<2x32xf32> -> vector<2x32xf32>
    %c0_13 = arith.constant 0 : index
    %c0_14 = arith.constant 0 : index
    %14 = vector.load %arg1[%c0_13, %c0_14] : memref<2x24xf32, #tpu.memory_space<vmem>>, vector<2x24xf32>
    %c0_15 = arith.constant 0 : index
    %c0_16 = arith.constant 0 : index
    %15 = vector.load %arg8[%c0_15, %c0_16] : memref<24x32xf32, #tpu.memory_space<vmem>>, vector<24x32xf32>
    %cst_17 = arith.constant dense<0.000000e+00> : vector<2x32xf32>
    %16 = tpu.matmul %14, %15, %cst_17 {dimension_numbers = #tpu.dot_dimension_numbers<[1], [0], [0], [1], [0, 0, 1, 1], [], []>} : vector<2x24xf32>, vector<24x32xf32>, vector<2x32xf32> -> vector<2x32xf32>
    %17 = arith.addf %13, %16 : vector<2x32xf32>
    %c0_18 = arith.constant 0 : index
    %c0_19 = arith.constant 0 : index
    %18 = vector.load %arg9[%c0_18, %c0_19] : memref<1x32xf32, #tpu.memory_space<vmem>>, vector<1x32xf32>
    %19 = vector.broadcast %18 : vector<1x32xf32> to vector<2x32xf32>
    %20 = arith.addf %17, %19 : vector<2x32xf32>
    %21 = math.tanh %20 : vector<2x32xf32>
    %c0_20 = arith.constant 0 : index
    %c0_21 = arith.constant 0 : index
    %c0_22 = arith.constant 0 : index
    %22 = vector.load %arg10[%c0_20, %c0_21, %c0_22] : memref<1x32x32xf32, #tpu.memory_space<vmem>>, vector<1x32x32xf32>
    %23 = vector.shape_cast %22 : vector<1x32x32xf32> to vector<32x32xf32>
    %cst_23 = arith.constant dense<0.000000e+00> : vector<2x32xf32>
    %24 = tpu.matmul %21, %23, %cst_23 {dimension_numbers = #tpu.dot_dimension_numbers<[1], [0], [0], [1], [0, 0, 1, 1], [], []>} : vector<2x32xf32>, vector<32x32xf32>, vector<2x32xf32> -> vector<2x32xf32>
    %c0_24 = arith.constant 0 : index
    %c0_25 = arith.constant 0 : index
    %c0_26 = arith.constant 0 : index
    %25 = vector.load %arg11[%c0_24, %c0_25, %c0_26] : memref<1x1x32xf32, #tpu.memory_space<vmem>>, vector<1x1x32xf32>
    %26 = vector.shape_cast %25 : vector<1x1x32xf32> to vector<1x32xf32>
    %27 = vector.broadcast %26 : vector<1x32xf32> to vector<2x32xf32>
    %28 = arith.addf %24, %27 : vector<2x32xf32>
    %29 = math.tanh %28 : vector<2x32xf32>
    %c0_27 = arith.constant 0 : index
    %c0_28 = arith.constant 0 : index
    %30 = vector.load %arg12[%c0_27, %c0_28] : memref<32x8xf32, #tpu.memory_space<vmem>>, vector<32x8xf32>
    %cst_29 = arith.constant dense<0.000000e+00> : vector<2x8xf32>
    %31 = tpu.matmul %29, %30, %cst_29 {dimension_numbers = #tpu.dot_dimension_numbers<[1], [0], [0], [1], [0, 0, 1, 1], [], []>} : vector<2x32xf32>, vector<32x8xf32>, vector<2x8xf32> -> vector<2x8xf32>
    %c0_30 = arith.constant 0 : index
    %c0_31 = arith.constant 0 : index
    %32 = vector.load %arg13[%c0_30, %c0_31] : memref<1x8xf32, #tpu.memory_space<vmem>>, vector<1x8xf32>
    %33 = vector.broadcast %32 : vector<1x8xf32> to vector<2x8xf32>
    %34 = arith.addf %31, %33 : vector<2x8xf32>
    %c0_32 = arith.constant 0 : index
    %c0_33 = arith.constant 0 : index
    %35 = vector.load %arg14[%c0_32, %c0_33] : memref<8x96xf32, #tpu.memory_space<vmem>>, vector<8x96xf32>
    %cst_34 = arith.constant dense<0.000000e+00> : vector<2x96xf32>
    %36 = tpu.matmul %34, %35, %cst_34 {dimension_numbers = #tpu.dot_dimension_numbers<[1], [0], [0], [1], [0, 0, 1, 1], [], []>} : vector<2x8xf32>, vector<8x96xf32>, vector<2x96xf32> -> vector<2x96xf32>
    %c0_35 = arith.constant 0 : index
    %c0_36 = arith.constant 0 : index
    %37 = vector.load %arg15[%c0_35, %c0_36] : memref<1x96xf32, #tpu.memory_space<vmem>>, vector<1x96xf32>
    %38 = vector.broadcast %37 : vector<1x96xf32> to vector<2x96xf32>
    %39 = arith.addf %36, %38 : vector<2x96xf32>
    %40 = math.tanh %39 : vector<2x96xf32>
    %c0_37 = arith.constant 0 : index
    %c0_38 = arith.constant 0 : index
    %41 = vector.load %arg16[%c0_37, %c0_38] : memref<96x96xf32, #tpu.memory_space<vmem>>, vector<96x96xf32>
    %cst_39 = arith.constant dense<0.000000e+00> : vector<2x96xf32>
    %42 = tpu.matmul %40, %41, %cst_39 {dimension_numbers = #tpu.dot_dimension_numbers<[1], [0], [0], [1], [0, 0, 1, 1], [], []>} : vector<2x96xf32>, vector<96x96xf32>, vector<2x96xf32> -> vector<2x96xf32>
    %c0_40 = arith.constant 0 : index
    %c0_41 = arith.constant 0 : index
    %43 = vector.load %arg17[%c0_40, %c0_41] : memref<1x96xf32, #tpu.memory_space<vmem>>, vector<1x96xf32>
    %44 = vector.broadcast %43 : vector<1x96xf32> to vector<2x96xf32>
    %45 = arith.addf %42, %44 : vector<2x96xf32>
    %46 = vector.extract_strided_slice %45 {offsets = [0, 0], sizes = [2, 16], strides = [1, 1]} : vector<2x96xf32> to vector<2x16xf32>
    %47 = math.tanh %46 : vector<2x16xf32>
    %48 = vector.extract_strided_slice %45 {offsets = [0, 16], sizes = [2, 16], strides = [1, 1]} : vector<2x96xf32> to vector<2x16xf32>
    %49 = math.exp %47 : vector<2x16xf32>
    %50 = vector.extract_strided_slice %45 {offsets = [0, 32], sizes = [2, 16], strides = [1, 1]} : vector<2x96xf32> to vector<2x16xf32>
    %51 = math.tanh %50 : vector<2x16xf32>
    %52 = vector.extract_strided_slice %45 {offsets = [0, 48], sizes = [2, 16], strides = [1, 1]} : vector<2x96xf32> to vector<2x16xf32>
    %53 = math.exp %51 : vector<2x16xf32>
    %54 = arith.mulf %49, %53 : vector<2x16xf32>
    %55 = arith.mulf %48, %53 : vector<2x16xf32>
    %56 = arith.addf %55, %52 : vector<2x16xf32>
    %57 = vector.extract_strided_slice %45 {offsets = [0, 64], sizes = [2, 16], strides = [1, 1]} : vector<2x96xf32> to vector<2x16xf32>
    %58 = math.tanh %57 : vector<2x16xf32>
    %59 = vector.extract_strided_slice %45 {offsets = [0, 80], sizes = [2, 16], strides = [1, 1]} : vector<2x96xf32> to vector<2x16xf32>
    %60 = math.exp %58 : vector<2x16xf32>
    %61 = arith.mulf %54, %60 : vector<2x16xf32>
    %62 = arith.mulf %56, %60 : vector<2x16xf32>
    %63 = arith.addf %62, %59 : vector<2x16xf32>
    %c0_42 = arith.constant 0 : index
    %c0_43 = arith.constant 0 : index
    %c0_44 = arith.constant 0 : index
    %64 = vector.load %arg2[%c0_42, %c0_43, %c0_44] : memref<4x2x16xf32, #tpu.memory_space<vmem>>, vector<1x2x16xf32>
    %65 = vector.shape_cast %64 : vector<1x2x16xf32> to vector<2x16xf32>
    %c0_45 = arith.constant 0 : index
    %c0_46 = arith.constant 0 : index
    %c0_47 = arith.constant 0 : index
    %66 = vector.load %arg2[%c0_45, %c0_46, %c0_47] : memref<4x2x16xf32, #tpu.memory_space<vmem>>, vector<4x2x16xf32>
    %cst_48 = arith.constant dense<0.000000e+00> : vector<2x16xf32>
    %67 = vector.multi_reduction <add>, %66, %cst_48 [0] : vector<4x2x16xf32> to vector<2x16xf32>
    %cst_49 = arith.constant 4.000000e+00 : f32
    %68 = vector.broadcast %cst_49 : f32 to vector<2x16xf32>
    %69 = arith.divf %67, %68 : vector<2x16xf32>
    %70 = arith.mulf %65, %61 : vector<2x16xf32>
    %71 = arith.addf %70, %63 : vector<2x16xf32>
    %72 = arith.mulf %69, %61 : vector<2x16xf32>
    %73 = arith.addf %72, %63 : vector<2x16xf32>
    %c0_50 = arith.constant 0 : index
    %c0_51 = arith.constant 0 : index
    %74 = vector.load %arg29[%c0_50, %c0_51] : memref<2x40xf32, #tpu.memory_space<vmem>>, vector<2x16xf32>
    tpu.vector_store %arg29[%c0_50, %c0_51], %71 {strides = array<i32>} : memref<2x40xf32, #tpu.memory_space<vmem>>, vector<2x16xf32>,
    %c0_52 = arith.constant 0 : index
    %c0_53 = arith.constant 0 : index
    %75 = vector.load %arg18[%c0_52, %c0_53] : memref<16x256xf32, #tpu.memory_space<vmem>>, vector<16x256xf32>
    %cst_54 = arith.constant dense<0.000000e+00> : vector<2x256xf32>
    %76 = tpu.matmul %73, %75, %cst_54 {dimension_numbers = #tpu.dot_dimension_numbers<[1], [0], [0], [1], [0, 0, 1, 1], [], []>} : vector<2x16xf32>, vector<16x256xf32>, vector<2x256xf32> -> vector<2x256xf32>
    %c0_55 = arith.constant 0 : index
    %c0_56 = arith.constant 0 : index
    %77 = vector.load %arg19[%c0_55, %c0_56] : memref<1x256xf32, #tpu.memory_space<vmem>>, vector<1x256xf32>
    %78 = vector.broadcast %77 : vector<1x256xf32> to vector<2x256xf32>
    %79 = arith.addf %76, %78 : vector<2x256xf32>
    %c0_57 = arith.constant 0 : index
    %c0_58 = arith.constant 0 : index
    %80 = vector.load %arg20[%c0_57, %c0_58] : memref<4x32xf32, #tpu.memory_space<vmem>>, vector<4x32xf32>
    %cst_59 = arith.constant dense<0.000000e+00> : vector<2x32xf32>
    %81 = tpu.matmul %11, %80, %cst_59 {dimension_numbers = #tpu.dot_dimension_numbers<[1], [0], [0], [1], [0, 0, 1, 1], [], []>} : vector<2x4xf32>, vector<4x32xf32>, vector<2x32xf32> -> vector<2x32xf32>
    %c0_60 = arith.constant 0 : index
    %c0_61 = arith.constant 0 : index
    %82 = vector.load %arg21[%c0_60, %c0_61] : memref<4x3xf32, #tpu.memory_space<vmem>>, vector<4x3xf32>
    %cst_62 = arith.constant dense<0.000000e+00> : vector<2x3xf32>
    %83 = tpu.matmul %11, %82, %cst_62 {dimension_numbers = #tpu.dot_dimension_numbers<[1], [0], [0], [1], [0, 0, 1, 1], [], []>} : vector<2x4xf32>, vector<4x3xf32>, vector<2x3xf32> -> vector<2x3xf32>
    %84 = vector.extract_strided_slice %79 {offsets = [0, 0], sizes = [2, 32], strides = [1, 1]} : vector<2x256xf32> to vector<2x32xf32>
    %85 = arith.addf %81, %84 : vector<2x32xf32>
    %86 = math.tanh %85 : vector<2x32xf32>
    %c0_63 = arith.constant 0 : index
    %c0_64 = arith.constant 0 : index
    %c0_65 = arith.constant 0 : index
    %87 = vector.load %arg22[%c0_63, %c0_64, %c0_65] : memref<1x32x32xf32, #tpu.memory_space<vmem>>, vector<1x32x32xf32>
    %88 = vector.shape_cast %87 : vector<1x32x32xf32> to vector<32x32xf32>
    %cst_66 = arith.constant dense<0.000000e+00> : vector<2x32xf32>
    %89 = tpu.matmul %86, %88, %cst_66 {dimension_numbers = #tpu.dot_dimension_numbers<[1], [0], [0], [1], [0, 0, 1, 1], [], []>} : vector<2x32xf32>, vector<32x32xf32>, vector<2x32xf32> -> vector<2x32xf32>
    %c0_67 = arith.constant 0 : index
    %c0_68 = arith.constant 0 : index
    %c0_69 = arith.constant 0 : index
    %90 = vector.load %arg23[%c0_67, %c0_68, %c0_69] : memref<1x1x32xf32, #tpu.memory_space<vmem>>, vector<1x1x32xf32>
    %91 = vector.shape_cast %90 : vector<1x1x32xf32> to vector<1x32xf32>
    %92 = vector.broadcast %91 : vector<1x32xf32> to vector<2x32xf32>
    %93 = arith.addf %89, %92 : vector<2x32xf32>
    %94 = math.tanh %93 : vector<2x32xf32>
    %c0_70 = arith.constant 0 : index
    %c0_71 = arith.constant 0 : index
    %95 = vector.load %arg24[%c0_70, %c0_71] : memref<32x32xf32, #tpu.memory_space<vmem>>, vector<32x32xf32>
    %cst_72 = arith.constant dense<0.000000e+00> : vector<2x32xf32>
    %96 = tpu.matmul %94, %95, %cst_72 {dimension_numbers = #tpu.dot_dimension_numbers<[1], [0], [0], [1], [0, 0, 1, 1], [], []>} : vector<2x32xf32>, vector<32x32xf32>, vector<2x32xf32> -> vector<2x32xf32>
    %97 = arith.addf %81, %96 : vector<2x32xf32>
    %c0_73 = arith.constant 0 : index
    %c0_74 = arith.constant 0 : index
    %98 = vector.load %arg25[%c0_73, %c0_74] : memref<1x32xf32, #tpu.memory_space<vmem>>, vector<1x32xf32>
    %99 = vector.broadcast %98 : vector<1x32xf32> to vector<2x32xf32>
    %100 = arith.addf %97, %99 : vector<2x32xf32>
    %c0_75 = arith.constant 0 : index
    %c0_76 = arith.constant 0 : index
    %101 = vector.load %arg26[%c0_75, %c0_76] : memref<32x3xf32, #tpu.memory_space<vmem>>, vector<32x3xf32>
    %cst_77 = arith.constant dense<0.000000e+00> : vector<2x3xf32>
    %102 = tpu.matmul %94, %101, %cst_77 {dimension_numbers = #tpu.dot_dimension_numbers<[1], [0], [0], [1], [0, 0, 1, 1], [], []>} : vector<2x32xf32>, vector<32x3xf32>, vector<2x3xf32> -> vector<2x3xf32>
    %103 = arith.addf %83, %102 : vector<2x3xf32>
    %c0_78 = arith.constant 0 : index
    %c0_79 = arith.constant 0 : index
    %104 = vector.load %arg27[%c0_78, %c0_79] : memref<1x3xf32, #tpu.memory_space<vmem>>, vector<1x3xf32>
    %105 = vector.broadcast %104 : vector<1x3xf32> to vector<2x3xf32>
    %106 = arith.addf %103, %105 : vector<2x3xf32>
    %c0_80 = arith.constant 0 : index
    %c0_81 = arith.constant 0 : index
    %107 = vector.load %arg28[%c0_80, %c0_81] : memref<1x3xf32, #tpu.memory_space<vmem>>, vector<1x3xf32>
    %108 = vector.broadcast %107 : vector<1x3xf32> to vector<2x3xf32>
    %109 = arith.addf %106, %108 : vector<2x3xf32>
    %c0_82 = arith.constant 0 : index
    %c16 = arith.constant 16 : index
    %110 = vector.load %arg29[%c0_82, %c16] : memref<2x40xf32, #tpu.memory_space<vmem>>, vector<2x3xf32>
    tpu.vector_store %arg29[%c0_82, %c16], %109 {strides = array<i32>} : memref<2x40xf32, #tpu.memory_space<vmem>>, vector<2x3xf32>,
    %111 = vector.extract_strided_slice %79 {offsets = [0, 32], sizes = [2, 32], strides = [1, 1]} : vector<2x256xf32> to vector<2x32xf32>
    %112 = arith.addf %100, %111 : vector<2x32xf32>
    %113 = math.tanh %112 : vector<2x32xf32>
    %c0_83 = arith.constant 0 : index
    %c0_84 = arith.constant 0 : index
    %c0_85 = arith.constant 0 : index
    %114 = vector.load %arg22[%c0_83, %c0_84, %c0_85] : memref<1x32x32xf32, #tpu.memory_space<vmem>>, vector<1x32x32xf32>
    %115 = vector.shape_cast %114 : vector<1x32x32xf32> to vector<32x32xf32>
    %cst_86 = arith.constant dense<0.000000e+00> : vector<2x32xf32>
    %116 = tpu.matmul %113, %115, %cst_86 {dimension_numbers = #tpu.dot_dimension_numbers<[1], [0], [0], [1], [0, 0, 1, 1], [], []>} : vector<2x32xf32>, vector<32x32xf32>, vector<2x32xf32> -> vector<2x32xf32>
    %c0_87 = arith.constant 0 : index
    %c0_88 = arith.constant 0 : index
    %c0_89 = arith.constant 0 : index
    %117 = vector.load %arg23[%c0_87, %c0_88, %c0_89] : memref<1x1x32xf32, #tpu.memory_space<vmem>>, vector<1x1x32xf32>
    %118 = vector.shape_cast %117 : vector<1x1x32xf32> to vector<1x32xf32>
    %119 = vector.broadcast %118 : vector<1x32xf32> to vector<2x32xf32>
    %120 = arith.addf %116, %119 : vector<2x32xf32>
    %121 = math.tanh %120 : vector<2x32xf32>
    %c0_90 = arith.constant 0 : index
    %c0_91 = arith.constant 0 : index
    %122 = vector.load %arg24[%c0_90, %c0_91] : memref<32x32xf32, #tpu.memory_space<vmem>>, vector<32x32xf32>
    %cst_92 = arith.constant dense<0.000000e+00> : vector<2x32xf32>
    %123 = tpu.matmul %121, %122, %cst_92 {dimension_numbers = #tpu.dot_dimension_numbers<[1], [0], [0], [1], [0, 0, 1, 1], [], []>} : vector<2x32xf32>, vector<32x32xf32>, vector<2x32xf32> -> vector<2x32xf32>
    %124 = arith.addf %100, %123 : vector<2x32xf32>
    %c0_93 = arith.constant 0 : index
    %c0_94 = arith.constant 0 : index
    %125 = vector.load %arg25[%c0_93, %c0_94] : memref<1x32xf32, #tpu.memory_space<vmem>>, vector<1x32xf32>
    %126 = vector.broadcast %125 : vector<1x32xf32> to vector<2x32xf32>
    %127 = arith.addf %124, %126 : vector<2x32xf32>
    %c0_95 = arith.constant 0 : index
    %c0_96 = arith.constant 0 : index
    %128 = vector.load %arg26[%c0_95, %c0_96] : memref<32x3xf32, #tpu.memory_space<vmem>>, vector<32x3xf32>
    %cst_97 = arith.constant dense<0.000000e+00> : vector<2x3xf32>
    %129 = tpu.matmul %121, %128, %cst_97 {dimension_numbers = #tpu.dot_dimension_numbers<[1], [0], [0], [1], [0, 0, 1, 1], [], []>} : vector<2x32xf32>, vector<32x3xf32>, vector<2x3xf32> -> vector<2x3xf32>
    %130 = arith.addf %106, %129 : vector<2x3xf32>
    %c0_98 = arith.constant 0 : index
    %c0_99 = arith.constant 0 : index
    %131 = vector.load %arg27[%c0_98, %c0_99] : memref<1x3xf32, #tpu.memory_space<vmem>>, vector<1x3xf32>
    %132 = vector.broadcast %131 : vector<1x3xf32> to vector<2x3xf32>
    %133 = arith.addf %130, %132 : vector<2x3xf32>
    %c0_100 = arith.constant 0 : index
    %c0_101 = arith.constant 0 : index
    %134 = vector.load %arg28[%c0_100, %c0_101] : memref<1x3xf32, #tpu.memory_space<vmem>>, vector<1x3xf32>
    %135 = vector.broadcast %134 : vector<1x3xf32> to vector<2x3xf32>
    %136 = arith.addf %133, %135 : vector<2x3xf32>
    %c0_102 = arith.constant 0 : index
    %c19 = arith.constant 19 : index
    %137 = vector.load %arg29[%c0_102, %c19] : memref<2x40xf32, #tpu.memory_space<vmem>>, vector<2x3xf32>
    tpu.vector_store %arg29[%c0_102, %c19], %136 {strides = array<i32>} : memref<2x40xf32, #tpu.memory_space<vmem>>, vector<2x3xf32>,
    %138 = vector.extract_strided_slice %79 {offsets = [0, 64], sizes = [2, 32], strides = [1, 1]} : vector<2x256xf32> to vector<2x32xf32>
    %139 = arith.addf %127, %138 : vector<2x32xf32>
    %140 = math.tanh %139 : vector<2x32xf32>
    %c0_103 = arith.constant 0 : index
    %c0_104 = arith.constant 0 : index
    %c0_105 = arith.constant 0 : index
    %141 = vector.load %arg22[%c0_103, %c0_104, %c0_105] : memref<1x32x32xf32, #tpu.memory_space<vmem>>, vector<1x32x32xf32>
    %142 = vector.shape_cast %141 : vector<1x32x32xf32> to vector<32x32xf32>
    %cst_106 = arith.constant dense<0.000000e+00> : vector<2x32xf32>
    %143 = tpu.matmul %140, %142, %cst_106 {dimension_numbers = #tpu.dot_dimension_numbers<[1], [0], [0], [1], [0, 0, 1, 1], [], []>} : vector<2x32xf32>, vector<32x32xf32>, vector<2x32xf32> -> vector<2x32xf32>
    %c0_107 = arith.constant 0 : index
    %c0_108 = arith.constant 0 : index
    %c0_109 = arith.constant 0 : index
    %144 = vector.load %arg23[%c0_107, %c0_108, %c0_109] : memref<1x1x32xf32, #tpu.memory_space<vmem>>, vector<1x1x32xf32>
    %145 = vector.shape_cast %144 : vector<1x1x32xf32> to vector<1x32xf32>
    %146 = vector.broadcast %145 : vector<1x32xf32> to vector<2x32xf32>
    %147 = arith.addf %143, %146 : vector<2x32xf32>
    %148 = math.tanh %147 : vector<2x32xf32>
    %c0_110 = arith.constant 0 : index
    %c0_111 = arith.constant 0 : index
    %149 = vector.load %arg24[%c0_110, %c0_111] : memref<32x32xf32, #tpu.memory_space<vmem>>, vector<32x32xf32>
    %cst_112 = arith.constant dense<0.000000e+00> : vector<2x32xf32>
    %150 = tpu.matmul %148, %149, %cst_112 {dimension_numbers = #tpu.dot_dimension_numbers<[1], [0], [0], [1], [0, 0, 1, 1], [], []>} : vector<2x32xf32>, vector<32x32xf32>, vector<2x32xf32> -> vector<2x32xf32>
    %151 = arith.addf %127, %150 : vector<2x32xf32>
    %c0_113 = arith.constant 0 : index
    %c0_114 = arith.constant 0 : index
    %152 = vector.load %arg25[%c0_113, %c0_114] : memref<1x32xf32, #tpu.memory_space<vmem>>, vector<1x32xf32>
    %153 = vector.broadcast %152 : vector<1x32xf32> to vector<2x32xf32>
    %154 = arith.addf %151, %153 : vector<2x32xf32>
    %c0_115 = arith.constant 0 : index
    %c0_116 = arith.constant 0 : index
    %155 = vector.load %arg26[%c0_115, %c0_116] : memref<32x3xf32, #tpu.memory_space<vmem>>, vector<32x3xf32>
    %cst_117 = arith.constant dense<0.000000e+00> : vector<2x3xf32>
    %156 = tpu.matmul %148, %155, %cst_117 {dimension_numbers = #tpu.dot_dimension_numbers<[1], [0], [0], [1], [0, 0, 1, 1], [], []>} : vector<2x32xf32>, vector<32x3xf32>, vector<2x3xf32> -> vector<2x3xf32>
    %157 = arith.addf %133, %156 : vector<2x3xf32>
    %c0_118 = arith.constant 0 : index
    %c0_119 = arith.constant 0 : index
    %158 = vector.load %arg27[%c0_118, %c0_119] : memref<1x3xf32, #tpu.memory_space<vmem>>, vector<1x3xf32>
    %159 = vector.broadcast %158 : vector<1x3xf32> to vector<2x3xf32>
    %160 = arith.addf %157, %159 : vector<2x3xf32>
    %c0_120 = arith.constant 0 : index
    %c0_121 = arith.constant 0 : index
    %161 = vector.load %arg28[%c0_120, %c0_121] : memref<1x3xf32, #tpu.memory_space<vmem>>, vector<1x3xf32>
    %162 = vector.broadcast %161 : vector<1x3xf32> to vector<2x3xf32>
    %163 = arith.addf %160, %162 : vector<2x3xf32>
    %c0_122 = arith.constant 0 : index
    %c22 = arith.constant 22 : index
    %164 = vector.load %arg29[%c0_122, %c22] : memref<2x40xf32, #tpu.memory_space<vmem>>, vector<2x3xf32>
    tpu.vector_store %arg29[%c0_122, %c22], %163 {strides = array<i32>} : memref<2x40xf32, #tpu.memory_space<vmem>>, vector<2x3xf32>,
    %165 = vector.extract_strided_slice %79 {offsets = [0, 96], sizes = [2, 32], strides = [1, 1]} : vector<2x256xf32> to vector<2x32xf32>
    %166 = arith.addf %154, %165 : vector<2x32xf32>
    %167 = math.tanh %166 : vector<2x32xf32>
    %c0_123 = arith.constant 0 : index
    %c0_124 = arith.constant 0 : index
    %c0_125 = arith.constant 0 : index
    %168 = vector.load %arg22[%c0_123, %c0_124, %c0_125] : memref<1x32x32xf32, #tpu.memory_space<vmem>>, vector<1x32x32xf32>
    %169 = vector.shape_cast %168 : vector<1x32x32xf32> to vector<32x32xf32>
    %cst_126 = arith.constant dense<0.000000e+00> : vector<2x32xf32>
    %170 = tpu.matmul %167, %169, %cst_126 {dimension_numbers = #tpu.dot_dimension_numbers<[1], [0], [0], [1], [0, 0, 1, 1], [], []>} : vector<2x32xf32>, vector<32x32xf32>, vector<2x32xf32> -> vector<2x32xf32>
    %c0_127 = arith.constant 0 : index
    %c0_128 = arith.constant 0 : index
    %c0_129 = arith.constant 0 : index
    %171 = vector.load %arg23[%c0_127, %c0_128, %c0_129] : memref<1x1x32xf32, #tpu.memory_space<vmem>>, vector<1x1x32xf32>
    %172 = vector.shape_cast %171 : vector<1x1x32xf32> to vector<1x32xf32>
    %173 = vector.broadcast %172 : vector<1x32xf32> to vector<2x32xf32>
    %174 = arith.addf %170, %173 : vector<2x32xf32>
    %175 = math.tanh %174 : vector<2x32xf32>
    %c0_130 = arith.constant 0 : index
    %c0_131 = arith.constant 0 : index
    %176 = vector.load %arg24[%c0_130, %c0_131] : memref<32x32xf32, #tpu.memory_space<vmem>>, vector<32x32xf32>
    %cst_132 = arith.constant dense<0.000000e+00> : vector<2x32xf32>
    %177 = tpu.matmul %175, %176, %cst_132 {dimension_numbers = #tpu.dot_dimension_numbers<[1], [0], [0], [1], [0, 0, 1, 1], [], []>} : vector<2x32xf32>, vector<32x32xf32>, vector<2x32xf32> -> vector<2x32xf32>
    %178 = arith.addf %154, %177 : vector<2x32xf32>
    %c0_133 = arith.constant 0 : index
    %c0_134 = arith.constant 0 : index
    %179 = vector.load %arg25[%c0_133, %c0_134] : memref<1x32xf32, #tpu.memory_space<vmem>>, vector<1x32xf32>
    %180 = vector.broadcast %179 : vector<1x32xf32> to vector<2x32xf32>
    %181 = arith.addf %178, %180 : vector<2x32xf32>
    %c0_135 = arith.constant 0 : index
    %c0_136 = arith.constant 0 : index
    %182 = vector.load %arg26[%c0_135, %c0_136] : memref<32x3xf32, #tpu.memory_space<vmem>>, vector<32x3xf32>
    %cst_137 = arith.constant dense<0.000000e+00> : vector<2x3xf32>
    %183 = tpu.matmul %175, %182, %cst_137 {dimension_numbers = #tpu.dot_dimension_numbers<[1], [0], [0], [1], [0, 0, 1, 1], [], []>} : vector<2x32xf32>, vector<32x3xf32>, vector<2x3xf32> -> vector<2x3xf32>
    %184 = arith.addf %160, %183 : vector<2x3xf32>
    %c0_138 = arith.constant 0 : index
    %c0_139 = arith.constant 0 : index
    %185 = vector.load %arg27[%c0_138, %c0_139] : memref<1x3xf32, #tpu.memory_space<vmem>>, vector<1x3xf32>
    %186 = vector.broadcast %185 : vector<1x3xf32> to vector<2x3xf32>
    %187 = arith.addf %184, %186 : vector<2x3xf32>
    %c0_140 = arith.constant 0 : index
    %c0_141 = arith.constant 0 : index
    %188 = vector.load %arg28[%c0_140, %c0_141] : memref<1x3xf32, #tpu.memory_space<vmem>>, vector<1x3xf32>
    %189 = vector.broadcast %188 : vector<1x3xf32> to vector<2x3xf32>
    %190 = arith.addf %187, %189 : vector<2x3xf32>
    %c0_142 = arith.constant 0 : index
    %c25 = arith.constant 25 : index
    %191 = vector.load %arg29[%c0_142, %c25] : memref<2x40xf32, #tpu.memory_space<vmem>>, vector<2x3xf32>
    tpu.vector_store %arg29[%c0_142, %c25], %190 {strides = array<i32>} : memref<2x40xf32, #tpu.memory_space<vmem>>, vector<2x3xf32>,
    %192 = vector.extract_strided_slice %79 {offsets = [0, 128], sizes = [2, 32], strides = [1, 1]} : vector<2x256xf32> to vector<2x32xf32>
    %193 = arith.addf %181, %192 : vector<2x32xf32>
    %194 = math.tanh %193 : vector<2x32xf32>
    %c0_143 = arith.constant 0 : index
    %c0_144 = arith.constant 0 : index
    %c0_145 = arith.constant 0 : index
    %195 = vector.load %arg22[%c0_143, %c0_144, %c0_145] : memref<1x32x32xf32, #tpu.memory_space<vmem>>, vector<1x32x32xf32>
    %196 = vector.shape_cast %195 : vector<1x32x32xf32> to vector<32x32xf32>
    %cst_146 = arith.constant dense<0.000000e+00> : vector<2x32xf32>
    %197 = tpu.matmul %194, %196, %cst_146 {dimension_numbers = #tpu.dot_dimension_numbers<[1], [0], [0], [1], [0, 0, 1, 1], [], []>} : vector<2x32xf32>, vector<32x32xf32>, vector<2x32xf32> -> vector<2x32xf32>
    %c0_147 = arith.constant 0 : index
    %c0_148 = arith.constant 0 : index
    %c0_149 = arith.constant 0 : index
    %198 = vector.load %arg23[%c0_147, %c0_148, %c0_149] : memref<1x1x32xf32, #tpu.memory_space<vmem>>, vector<1x1x32xf32>
    %199 = vector.shape_cast %198 : vector<1x1x32xf32> to vector<1x32xf32>
    %200 = vector.broadcast %199 : vector<1x32xf32> to vector<2x32xf32>
    %201 = arith.addf %197, %200 : vector<2x32xf32>
    %202 = math.tanh %201 : vector<2x32xf32>
    %c0_150 = arith.constant 0 : index
    %c0_151 = arith.constant 0 : index
    %203 = vector.load %arg24[%c0_150, %c0_151] : memref<32x32xf32, #tpu.memory_space<vmem>>, vector<32x32xf32>
    %cst_152 = arith.constant dense<0.000000e+00> : vector<2x32xf32>
    %204 = tpu.matmul %202, %203, %cst_152 {dimension_numbers = #tpu.dot_dimension_numbers<[1], [0], [0], [1], [0, 0, 1, 1], [], []>} : vector<2x32xf32>, vector<32x32xf32>, vector<2x32xf32> -> vector<2x32xf32>
    %205 = arith.addf %181, %204 : vector<2x32xf32>
    %c0_153 = arith.constant 0 : index
    %c0_154 = arith.constant 0 : index
    %206 = vector.load %arg25[%c0_153, %c0_154] : memref<1x32xf32, #tpu.memory_space<vmem>>, vector<1x32xf32>
    %207 = vector.broadcast %206 : vector<1x32xf32> to vector<2x32xf32>
    %208 = arith.addf %205, %207 : vector<2x32xf32>
    %c0_155 = arith.constant 0 : index
    %c0_156 = arith.constant 0 : index
    %209 = vector.load %arg26[%c0_155, %c0_156] : memref<32x3xf32, #tpu.memory_space<vmem>>, vector<32x3xf32>
    %cst_157 = arith.constant dense<0.000000e+00> : vector<2x3xf32>
    %210 = tpu.matmul %202, %209, %cst_157 {dimension_numbers = #tpu.dot_dimension_numbers<[1], [0], [0], [1], [0, 0, 1, 1], [], []>} : vector<2x32xf32>, vector<32x3xf32>, vector<2x3xf32> -> vector<2x3xf32>
    %211 = arith.addf %187, %210 : vector<2x3xf32>
    %c0_158 = arith.constant 0 : index
    %c0_159 = arith.constant 0 : index
    %212 = vector.load %arg27[%c0_158, %c0_159] : memref<1x3xf32, #tpu.memory_space<vmem>>, vector<1x3xf32>
    %213 = vector.broadcast %212 : vector<1x3xf32> to vector<2x3xf32>
    %214 = arith.addf %211, %213 : vector<2x3xf32>
    %c0_160 = arith.constant 0 : index
    %c0_161 = arith.constant 0 : index
    %215 = vector.load %arg28[%c0_160, %c0_161] : memref<1x3xf32, #tpu.memory_space<vmem>>, vector<1x3xf32>
    %216 = vector.broadcast %215 : vector<1x3xf32> to vector<2x3xf32>
    %217 = arith.addf %214, %216 : vector<2x3xf32>
    %c0_162 = arith.constant 0 : index
    %c28 = arith.constant 28 : index
    %218 = vector.load %arg29[%c0_162, %c28] : memref<2x40xf32, #tpu.memory_space<vmem>>, vector<2x3xf32>
    tpu.vector_store %arg29[%c0_162, %c28], %217 {strides = array<i32>} : memref<2x40xf32, #tpu.memory_space<vmem>>, vector<2x3xf32>,
    %219 = vector.extract_strided_slice %79 {offsets = [0, 160], sizes = [2, 32], strides = [1, 1]} : vector<2x256xf32> to vector<2x32xf32>
    %220 = arith.addf %208, %219 : vector<2x32xf32>
    %221 = math.tanh %220 : vector<2x32xf32>
    %c0_163 = arith.constant 0 : index
    %c0_164 = arith.constant 0 : index
    %c0_165 = arith.constant 0 : index
    %222 = vector.load %arg22[%c0_163, %c0_164, %c0_165] : memref<1x32x32xf32, #tpu.memory_space<vmem>>, vector<1x32x32xf32>
    %223 = vector.shape_cast %222 : vector<1x32x32xf32> to vector<32x32xf32>
    %cst_166 = arith.constant dense<0.000000e+00> : vector<2x32xf32>
    %224 = tpu.matmul %221, %223, %cst_166 {dimension_numbers = #tpu.dot_dimension_numbers<[1], [0], [0], [1], [0, 0, 1, 1], [], []>} : vector<2x32xf32>, vector<32x32xf32>, vector<2x32xf32> -> vector<2x32xf32>
    %c0_167 = arith.constant 0 : index
    %c0_168 = arith.constant 0 : index
    %c0_169 = arith.constant 0 : index
    %225 = vector.load %arg23[%c0_167, %c0_168, %c0_169] : memref<1x1x32xf32, #tpu.memory_space<vmem>>, vector<1x1x32xf32>
    %226 = vector.shape_cast %225 : vector<1x1x32xf32> to vector<1x32xf32>
    %227 = vector.broadcast %226 : vector<1x32xf32> to vector<2x32xf32>
    %228 = arith.addf %224, %227 : vector<2x32xf32>
    %229 = math.tanh %228 : vector<2x32xf32>
    %c0_170 = arith.constant 0 : index
    %c0_171 = arith.constant 0 : index
    %230 = vector.load %arg24[%c0_170, %c0_171] : memref<32x32xf32, #tpu.memory_space<vmem>>, vector<32x32xf32>
    %cst_172 = arith.constant dense<0.000000e+00> : vector<2x32xf32>
    %231 = tpu.matmul %229, %230, %cst_172 {dimension_numbers = #tpu.dot_dimension_numbers<[1], [0], [0], [1], [0, 0, 1, 1], [], []>} : vector<2x32xf32>, vector<32x32xf32>, vector<2x32xf32> -> vector<2x32xf32>
    %232 = arith.addf %208, %231 : vector<2x32xf32>
    %c0_173 = arith.constant 0 : index
    %c0_174 = arith.constant 0 : index
    %233 = vector.load %arg25[%c0_173, %c0_174] : memref<1x32xf32, #tpu.memory_space<vmem>>, vector<1x32xf32>
    %234 = vector.broadcast %233 : vector<1x32xf32> to vector<2x32xf32>
    %235 = arith.addf %232, %234 : vector<2x32xf32>
    %c0_175 = arith.constant 0 : index
    %c0_176 = arith.constant 0 : index
    %236 = vector.load %arg26[%c0_175, %c0_176] : memref<32x3xf32, #tpu.memory_space<vmem>>, vector<32x3xf32>
    %cst_177 = arith.constant dense<0.000000e+00> : vector<2x3xf32>
    %237 = tpu.matmul %229, %236, %cst_177 {dimension_numbers = #tpu.dot_dimension_numbers<[1], [0], [0], [1], [0, 0, 1, 1], [], []>} : vector<2x32xf32>, vector<32x3xf32>, vector<2x3xf32> -> vector<2x3xf32>
    %238 = arith.addf %214, %237 : vector<2x3xf32>
    %c0_178 = arith.constant 0 : index
    %c0_179 = arith.constant 0 : index
    %239 = vector.load %arg27[%c0_178, %c0_179] : memref<1x3xf32, #tpu.memory_space<vmem>>, vector<1x3xf32>
    %240 = vector.broadcast %239 : vector<1x3xf32> to vector<2x3xf32>
    %241 = arith.addf %238, %240 : vector<2x3xf32>
    %c0_180 = arith.constant 0 : index
    %c0_181 = arith.constant 0 : index
    %242 = vector.load %arg28[%c0_180, %c0_181] : memref<1x3xf32, #tpu.memory_space<vmem>>, vector<1x3xf32>
    %243 = vector.broadcast %242 : vector<1x3xf32> to vector<2x3xf32>
    %244 = arith.addf %241, %243 : vector<2x3xf32>
    %c0_182 = arith.constant 0 : index
    %c31 = arith.constant 31 : index
    %245 = vector.load %arg29[%c0_182, %c31] : memref<2x40xf32, #tpu.memory_space<vmem>>, vector<2x3xf32>
    tpu.vector_store %arg29[%c0_182, %c31], %244 {strides = array<i32>} : memref<2x40xf32, #tpu.memory_space<vmem>>, vector<2x3xf32>,
    %246 = vector.extract_strided_slice %79 {offsets = [0, 192], sizes = [2, 32], strides = [1, 1]} : vector<2x256xf32> to vector<2x32xf32>
    %247 = arith.addf %235, %246 : vector<2x32xf32>
    %248 = math.tanh %247 : vector<2x32xf32>
    %c0_183 = arith.constant 0 : index
    %c0_184 = arith.constant 0 : index
    %c0_185 = arith.constant 0 : index
    %249 = vector.load %arg22[%c0_183, %c0_184, %c0_185] : memref<1x32x32xf32, #tpu.memory_space<vmem>>, vector<1x32x32xf32>
    %250 = vector.shape_cast %249 : vector<1x32x32xf32> to vector<32x32xf32>
    %cst_186 = arith.constant dense<0.000000e+00> : vector<2x32xf32>
    %251 = tpu.matmul %248, %250, %cst_186 {dimension_numbers = #tpu.dot_dimension_numbers<[1], [0], [0], [1], [0, 0, 1, 1], [], []>} : vector<2x32xf32>, vector<32x32xf32>, vector<2x32xf32> -> vector<2x32xf32>
    %c0_187 = arith.constant 0 : index
    %c0_188 = arith.constant 0 : index
    %c0_189 = arith.constant 0 : index
    %252 = vector.load %arg23[%c0_187, %c0_188, %c0_189] : memref<1x1x32xf32, #tpu.memory_space<vmem>>, vector<1x1x32xf32>
    %253 = vector.shape_cast %252 : vector<1x1x32xf32> to vector<1x32xf32>
    %254 = vector.broadcast %253 : vector<1x32xf32> to vector<2x32xf32>
    %255 = arith.addf %251, %254 : vector<2x32xf32>
    %256 = math.tanh %255 : vector<2x32xf32>
    %c0_190 = arith.constant 0 : index
    %c0_191 = arith.constant 0 : index
    %257 = vector.load %arg24[%c0_190, %c0_191] : memref<32x32xf32, #tpu.memory_space<vmem>>, vector<32x32xf32>
    %cst_192 = arith.constant dense<0.000000e+00> : vector<2x32xf32>
    %258 = tpu.matmul %256, %257, %cst_192 {dimension_numbers = #tpu.dot_dimension_numbers<[1], [0], [0], [1], [0, 0, 1, 1], [], []>} : vector<2x32xf32>, vector<32x32xf32>, vector<2x32xf32> -> vector<2x32xf32>
    %259 = arith.addf %235, %258 : vector<2x32xf32>
    %c0_193 = arith.constant 0 : index
    %c0_194 = arith.constant 0 : index
    %260 = vector.load %arg25[%c0_193, %c0_194] : memref<1x32xf32, #tpu.memory_space<vmem>>, vector<1x32xf32>
    %261 = vector.broadcast %260 : vector<1x32xf32> to vector<2x32xf32>
    %262 = arith.addf %259, %261 : vector<2x32xf32>
    %c0_195 = arith.constant 0 : index
    %c0_196 = arith.constant 0 : index
    %263 = vector.load %arg26[%c0_195, %c0_196] : memref<32x3xf32, #tpu.memory_space<vmem>>, vector<32x3xf32>
    %cst_197 = arith.constant dense<0.000000e+00> : vector<2x3xf32>
    %264 = tpu.matmul %256, %263, %cst_197 {dimension_numbers = #tpu.dot_dimension_numbers<[1], [0], [0], [1], [0, 0, 1, 1], [], []>} : vector<2x32xf32>, vector<32x3xf32>, vector<2x3xf32> -> vector<2x3xf32>
    %265 = arith.addf %241, %264 : vector<2x3xf32>
    %c0_198 = arith.constant 0 : index
    %c0_199 = arith.constant 0 : index
    %266 = vector.load %arg27[%c0_198, %c0_199] : memref<1x3xf32, #tpu.memory_space<vmem>>, vector<1x3xf32>
    %267 = vector.broadcast %266 : vector<1x3xf32> to vector<2x3xf32>
    %268 = arith.addf %265, %267 : vector<2x3xf32>
    %c0_200 = arith.constant 0 : index
    %c0_201 = arith.constant 0 : index
    %269 = vector.load %arg28[%c0_200, %c0_201] : memref<1x3xf32, #tpu.memory_space<vmem>>, vector<1x3xf32>
    %270 = vector.broadcast %269 : vector<1x3xf32> to vector<2x3xf32>
    %271 = arith.addf %268, %270 : vector<2x3xf32>
    %c0_202 = arith.constant 0 : index
    %c34 = arith.constant 34 : index
    %272 = vector.load %arg29[%c0_202, %c34] : memref<2x40xf32, #tpu.memory_space<vmem>>, vector<2x3xf32>
    tpu.vector_store %arg29[%c0_202, %c34], %271 {strides = array<i32>} : memref<2x40xf32, #tpu.memory_space<vmem>>, vector<2x3xf32>,
    %273 = vector.extract_strided_slice %79 {offsets = [0, 224], sizes = [2, 32], strides = [1, 1]} : vector<2x256xf32> to vector<2x32xf32>
    %274 = arith.addf %262, %273 : vector<2x32xf32>
    %275 = math.tanh %274 : vector<2x32xf32>
    %c0_203 = arith.constant 0 : index
    %c0_204 = arith.constant 0 : index
    %c0_205 = arith.constant 0 : index
    %276 = vector.load %arg22[%c0_203, %c0_204, %c0_205] : memref<1x32x32xf32, #tpu.memory_space<vmem>>, vector<1x32x32xf32>
    %277 = vector.shape_cast %276 : vector<1x32x32xf32> to vector<32x32xf32>
    %cst_206 = arith.constant dense<0.000000e+00> : vector<2x32xf32>
    %278 = tpu.matmul %275, %277, %cst_206 {dimension_numbers = #tpu.dot_dimension_numbers<[1], [0], [0], [1], [0, 0, 1, 1], [], []>} : vector<2x32xf32>, vector<32x32xf32>, vector<2x32xf32> -> vector<2x32xf32>
    %c0_207 = arith.constant 0 : index
    %c0_208 = arith.constant 0 : index
    %c0_209 = arith.constant 0 : index
    %279 = vector.load %arg23[%c0_207, %c0_208, %c0_209] : memref<1x1x32xf32, #tpu.memory_space<vmem>>, vector<1x1x32xf32>
    %280 = vector.shape_cast %279 : vector<1x1x32xf32> to vector<1x32xf32>
    %281 = vector.broadcast %280 : vector<1x32xf32> to vector<2x32xf32>
    %282 = arith.addf %278, %281 : vector<2x32xf32>
    %283 = math.tanh %282 : vector<2x32xf32>
    %c0_210 = arith.constant 0 : index
    %c0_211 = arith.constant 0 : index
    %284 = vector.load %arg26[%c0_210, %c0_211] : memref<32x3xf32, #tpu.memory_space<vmem>>, vector<32x3xf32>
    %cst_212 = arith.constant dense<0.000000e+00> : vector<2x3xf32>
    %285 = tpu.matmul %283, %284, %cst_212 {dimension_numbers = #tpu.dot_dimension_numbers<[1], [0], [0], [1], [0, 0, 1, 1], [], []>} : vector<2x32xf32>, vector<32x3xf32>, vector<2x3xf32> -> vector<2x3xf32>
    %286 = arith.addf %268, %285 : vector<2x3xf32>
    %c0_213 = arith.constant 0 : index
    %c0_214 = arith.constant 0 : index
    %287 = vector.load %arg27[%c0_213, %c0_214] : memref<1x3xf32, #tpu.memory_space<vmem>>, vector<1x3xf32>
    %288 = vector.broadcast %287 : vector<1x3xf32> to vector<2x3xf32>
    %289 = arith.addf %286, %288 : vector<2x3xf32>
    %c0_215 = arith.constant 0 : index
    %c0_216 = arith.constant 0 : index
    %290 = vector.load %arg28[%c0_215, %c0_216] : memref<1x3xf32, #tpu.memory_space<vmem>>, vector<1x3xf32>
    %291 = vector.broadcast %290 : vector<1x3xf32> to vector<2x3xf32>
    %292 = arith.addf %289, %291 : vector<2x3xf32>
    %c0_217 = arith.constant 0 : index
    %c37 = arith.constant 37 : index
    %293 = vector.load %arg29[%c0_217, %c37] : memref<2x40xf32, #tpu.memory_space<vmem>>, vector<2x3xf32>
    tpu.vector_store %arg29[%c0_217, %c37], %292 {strides = array<i32>} : memref<2x40xf32, #tpu.memory_space<vmem>>, vector<2x3xf32>,
    return
  }
}

</mosaic_0001>

<llo_original>
// kernel: siflow_off_forward.1
$region0: #{siflow_off_forward.1}
  #allocation0 [shape = 'u32[]', space=smem, size = 0x4, offset = 0x4, fixed_abs, tag = 'smem constant byte address 0x4 - core index']
  #allocation1 [shape = 'u32[144,128]{1,0:T(1,128)}', space=vmem, size = 0x12000, scoped, tag = 'internal scratch']
  %s0 = inlined_call_operand.smem [shape: u32[30], index: -1, kind: input, shape index: {}]
  %s1 = sld [smem:[%s0]]
  %s2 = scalar_lea.smem %s0, 1
  %s3 = sld [smem:[%s2]]
  %s4 = scalar_lea.smem %s0, 2
  %s5 = sld [smem:[%s4]]
  %s6 = scalar_lea.smem %s0, 3
  %s7 = sld [smem:[%s6]]
  %s8 = scalar_lea.smem %s0, 4
  %s9 = sld [smem:[%s8]]
  %s10 = scalar_lea.smem %s0, 5
  %s11 = sld [smem:[%s10]]
  %s12 = scalar_lea.smem %s0, 6
  %s13 = sld [smem:[%s12]]
  %s14 = scalar_lea.smem %s0, 7
  %s15 = sld [smem:[%s14]]
  %s16 = scalar_lea.smem %s0, 8
  %s17 = sld [smem:[%s16]]
  %s18 = scalar_lea.smem %s0, 9
  %s19 = sld [smem:[%s18]]
  %s20 = scalar_lea.smem %s0, 10
  %s21 = sld [smem:[%s20]]
  %s22 = scalar_lea.smem %s0, 11
  %s23 = sld [smem:[%s22]]
  %s24 = scalar_lea.smem %s0, 12
  %s25 = sld [smem:[%s24]]
  %s26 = scalar_lea.smem %s0, 13
  %s27 = sld [smem:[%s26]]
  %s28 = scalar_lea.smem %s0, 14
  %s29 = sld [smem:[%s28]]
  %s30 = scalar_lea.smem %s0, 15
  %s31 = sld [smem:[%s30]]
  %s32 = scalar_lea.smem %s0, 16
  %s33 = sld [smem:[%s32]]
  %s34 = scalar_lea.smem %s0, 17
  %s35 = sld [smem:[%s34]]
  %s36 = scalar_lea.smem %s0, 18
  %s37 = sld [smem:[%s36]]
  %s38 = scalar_lea.smem %s0, 19
  %s39 = sld [smem:[%s38]]
  %s40 = scalar_lea.smem %s0, 20
  %s41 = sld [smem:[%s40]]
  %s42 = scalar_lea.smem %s0, 21
  %s43 = sld [smem:[%s42]]
  %s44 = scalar_lea.smem %s0, 22
  %s45 = sld [smem:[%s44]]
  %s46 = scalar_lea.smem %s0, 23
  %s47 = sld [smem:[%s46]]
  %s48 = scalar_lea.smem %s0, 24
  %s49 = sld [smem:[%s48]]
  %s50 = scalar_lea.smem %s0, 25
  %s51 = sld [smem:[%s50]]
  %s52 = scalar_lea.smem %s0, 26
  %s53 = sld [smem:[%s52]]
  %s54 = scalar_lea.smem %s0, 27
  %s55 = sld [smem:[%s54]]
  %s56 = scalar_lea.smem %s0, 28
  %s57 = sld [smem:[%s56]]
  %s58 = scalar_lea.smem %s0, 29
  %s59 = sld [smem:[%s58]]
  %s60 = sld [smem:[#allocation0]]
  $region174: #{siflow_off_forward.1} parent=0
    _
  %s62 = ssub.s32 1, %s60
  %s63 = scalar_select 0, %s62, %s60
  $region1: #{siflow_off_forward.1} parent=0
    #allocation2 [shape = 'u8[512]{0}', space=vmem, size = 0x400, scoped, tag = 'input window, operand 4, single buffered']
    #allocation3 [shape = 's32[1]{0}', space=sflag, size = 0x4, scoped, tag = 'scoped memory for siflow_off_forward.1']
    #allocation4 [shape = 'u8[512]{0}', space=vmem, size = 0x400, scoped, tag = 'input window, operand 6, single buffered']
    #allocation5 [shape = 's32[1]{0}', space=sflag, size = 0x4, scoped, tag = 'scoped memory for siflow_off_forward.1']
    #allocation6 [shape = 'u8[512]{0}', space=vmem, size = 0x400, scoped, tag = 'input window, operand 9, single buffered']
    #allocation7 [shape = 'u8[4096]{0}', space=vmem, size = 0x1000, scoped, tag = 'input window, operand 14, single buffered']
    #allocation8 [shape = 's32[1]{0}', space=sflag, size = 0x4, scoped, tag = 'scoped memory for siflow_off_forward.1']
    #allocation9 [shape = 'u8[512]{0}', space=vmem, size = 0x400, scoped, tag = 'input window, operand 15, single buffered']
    #allocation10 [shape = 'u8[512]{0}', space=vmem, size = 0x400, scoped, tag = 'input window, operand 17, single buffered']
    #allocation11 [shape = 's32[1]{0}', space=sflag, size = 0x4, scoped, tag = 'scoped memory for siflow_off_forward.1']
    #allocation12 [shape = 'u8[1024]{0}', space=vmem, size = 0x400, scoped, tag = 'input window, operand 19, single buffered']
    #allocation13 [shape = 'u8[512]{0}', space=vmem, size = 0x400, scoped, tag = 'input window, operand 23, single buffered']
    #allocation14 [shape = 's32[1]{0}', space=sflag, size = 0x4, scoped, tag = 'scoped memory for siflow_off_forward.1']
    #allocation15 [shape = 'u8[16384]{0}', space=vmem, size = 0x4000, scoped, tag = 'input window, operand 24, single buffered']
    #allocation16 [shape = 'u8[512]{0}', space=vmem, size = 0x400, scoped, tag = 'input window, operand 25, single buffered']
    #allocation17 [shape = 's32[1]{0}', space=sflag, size = 0x4, scoped, tag = 'scoped memory for siflow_off_forward.1']
    #allocation18 [shape = 'u8[512]{0}', space=vmem, size = 0x400, scoped, tag = 'input window, operand 27, single buffered']
    #allocation19 [shape = 'u8[512]{0}', space=vmem, size = 0x400, scoped, tag = 'input window, operand 28, single buffered']
    #allocation20 [shape = 's32[1]{0}', space=sflag, size = 0x4, scoped, tag = 'scoped memory for siflow_off_forward.1']
    %64 = vsyncpa [#allocation3], 0
    %65 = vsyncpa [#allocation5], 0
    %66 = vsyncpa [#allocation8], 0
    %67 = vsyncpa [#allocation11], 0
    %68 = vsyncpa [#allocation14], 0
    %69 = vsyncpa [#allocation17], 0
    %70 = vsyncpa [#allocation20], 0
    // Predicated region
    $region2: #{siflow_off_forward.1} parent=1 // pred_check
      _
    $region3: #{siflow_off_forward.1} parent=1 // pred_check_branch
      %72 = sbr.rel (0) target = $region5
    $region4: #{siflow_off_forward.1} parent=1 // pred_region
      _
    $region5: #{siflow_off_forward.1} parent=1 // pred_fallthru
      _
    // Predicated region
    $region6: #{siflow_off_forward.1} parent=1 // pred_check
      _
    $region7: #{siflow_off_forward.1} parent=1 // pred_check_branch
      %74 = sbr.rel (0) target = $region9
    $region8: #{siflow_off_forward.1} parent=1 // pred_region
      _
    $region9: #{siflow_off_forward.1} parent=1 // pred_fallthru
      _
    // Predicated region
    $region10: #{siflow_off_forward.1} parent=1 // pred_check
      _
    $region11: #{siflow_off_forward.1} parent=1 // pred_check_branch
      %76 = sbr.rel (0) target = $region13
    $region12: #{siflow_off_forward.1} parent=1 // pred_region
      _
    $region13: #{siflow_off_forward.1} parent=1 // pred_fallthru
      _
    // Predicated region
    $region14: #{siflow_off_forward.1} parent=1 // pred_check
      _
    $region15: #{siflow_off_forward.1} parent=1 // pred_check_branch
      %78 = sbr.rel (0) target = $region17
    $region16: #{siflow_off_forward.1} parent=1 // pred_region
      _
    $region17: #{siflow_off_forward.1} parent=1 // pred_fallthru
      _
    // Predicated region
    $region18: #{siflow_off_forward.1} parent=1 // pred_check
      _
    $region19: #{siflow_off_forward.1} parent=1 // pred_check_branch
      %80 = sbr.rel (0) target = $region21
    $region20: #{siflow_off_forward.1} parent=1 // pred_region
      %s82 = ssub.s32 16, 16
      %83 = vsyncadd [#allocation3], %s82
      %s85 = sshll.u32 [#allocation2], 4
      %s86 = int_to_ptr.vmem [resolvable:$true] %s85
      %88 = dma.hbm_to_vmem [thread:$0]  %s9, 16, %s86, [#allocation3]
    $region21: #{siflow_off_forward.1} parent=1 // pred_fallthru
      _
    // Predicated region
    $region22: #{siflow_off_forward.1} parent=1 // pred_check
      _
    $region23: #{siflow_off_forward.1} parent=1 // pred_check_branch
      %90 = sbr.rel (0) target = $region25
    $region24: #{siflow_off_forward.1} parent=1 // pred_region
      _
    $region25: #{siflow_off_forward.1} parent=1 // pred_fallthru
      _
    // Predicated region
    $region26: #{siflow_off_forward.1} parent=1 // pred_check
      _
    $region27: #{siflow_off_forward.1} parent=1 // pred_check_branch
      %92 = sbr.rel (0) target = $region29
    $region28: #{siflow_off_forward.1} parent=1 // pred_region
      %s94 = ssub.s32 16, 16
      %95 = vsyncadd [#allocation5], %s94
      %s97 = sshll.u32 [#allocation4], 4
      %s98 = int_to_ptr.vmem [resolvable:$true] %s97
      %100 = dma.hbm_to_vmem [thread:$0]  %s13, 16, %s98, [#allocation5]
    $region29: #{siflow_off_forward.1} parent=1 // pred_fallthru
      _
    // Predicated region
    $region30: #{siflow_off_forward.1} parent=1 // pred_check
      _
    $region31: #{siflow_off_forward.1} parent=1 // pred_check_branch
      %102 = sbr.rel (0) target = $region33
    $region32: #{siflow_off_forward.1} parent=1 // pred_region
      _
    $region33: #{siflow_off_forward.1} parent=1 // pred_fallthru
      _
    // Predicated region
    $region34: #{siflow_off_forward.1} parent=1 // pred_check
      _
    $region35: #{siflow_off_forward.1} parent=1 // pred_check_branch
      %104 = sbr.rel (0) target = $region37
    $region36: #{siflow_off_forward.1} parent=1 // pred_region
      _
    $region37: #{siflow_off_forward.1} parent=1 // pred_fallthru
      _
    // Predicated region
    $region38: #{siflow_off_forward.1} parent=1 // pred_check
      _
    $region39: #{siflow_off_forward.1} parent=1 // pred_check_branch
      %106 = sbr.rel (0) target = $region41
    $region40: #{siflow_off_forward.1} parent=1 // pred_region
      %s108 = ssub.s32 16, 16
      %109 = vsyncadd [#allocation5], %s108
      %s111 = sshll.u32 [#allocation6], 4
      %s112 = int_to_ptr.vmem [resolvable:$true] %s111
      %114 = dma.hbm_to_vmem [thread:$0]  %s19, 16, %s112, [#allocation5]
    $region41: #{siflow_off_forward.1} parent=1 // pred_fallthru
      _
    // Predicated region
    $region42: #{siflow_off_forward.1} parent=1 // pred_check
      _
    $region43: #{siflow_off_forward.1} parent=1 // pred_check_branch
      %116 = sbr.rel (0) target = $region45
    $region44: #{siflow_off_forward.1} parent=1 // pred_region
      _
    $region45: #{siflow_off_forward.1} parent=1 // pred_fallthru
      _
    // Predicated region
    $region46: #{siflow_off_forward.1} parent=1 // pred_check
      _
    $region47: #{siflow_off_forward.1} parent=1 // pred_check_branch
      %118 = sbr.rel (0) target = $region49
    $region48: #{siflow_off_forward.1} parent=1 // pred_region
      _
    $region49: #{siflow_off_forward.1} parent=1 // pred_fallthru
      _
    // Predicated region
    $region50: #{siflow_off_forward.1} parent=1 // pred_check
      _
    $region51: #{siflow_off_forward.1} parent=1 // pred_check_branch
      %120 = sbr.rel (0) target = $region53
    $region52: #{siflow_off_forward.1} parent=1 // pred_region
      _
    $region53: #{siflow_off_forward.1} parent=1 // pred_fallthru
      _
    // Predicated region
    $region54: #{siflow_off_forward.1} parent=1 // pred_check
      _
    $region55: #{siflow_off_forward.1} parent=1 // pred_check_branch
      %122 = sbr.rel (0) target = $region57
    $region56: #{siflow_off_forward.1} parent=1 // pred_region
      _
    $region57: #{siflow_off_forward.1} parent=1 // pred_fallthru
      _
    // Predicated region
    $region58: #{siflow_off_forward.1} parent=1 // pred_check
      _
    $region59: #{siflow_off_forward.1} parent=1 // pred_check_branch
      %124 = sbr.rel (0) target = $region61
    $region60: #{siflow_off_forward.1} parent=1 // pred_region
      %s126 = ssub.s32 128, 128
      %127 = vsyncadd [#allocation8], %s126
      %s129 = sshll.u32 [#allocation7], 4
      %s130 = int_to_ptr.vmem [resolvable:$true] %s129
      %132 = dma.hbm_to_vmem [thread:$0]  %s29, 128, %s130, [#allocation8]
    $region61: #{siflow_off_forward.1} parent=1 // pred_fallthru
      _
    // Predicated region
    $region62: #{siflow_off_forward.1} parent=1 // pred_check
      _
    $region63: #{siflow_off_forward.1} parent=1 // pred_check_branch
      %134 = sbr.rel (0) target = $region65
    $region64: #{siflow_off_forward.1} parent=1 // pred_region
      %s136 = ssub.s32 16, 16
      %137 = vsyncadd [#allocation8], %s136
      %s139 = sshll.u32 [#allocation9], 4
      %s140 = int_to_ptr.vmem [resolvable:$true] %s139
      %142 = dma.hbm_to_vmem [thread:$0]  %s31, 16, %s140, [#allocation8]
    $region65: #{siflow_off_forward.1} parent=1 // pred_fallthru
      _
    // Predicated region
    $region66: #{siflow_off_forward.1} parent=1 // pred_check
      _
    $region67: #{siflow_off_forward.1} parent=1 // pred_check_branch
      %144 = sbr.rel (0) target = $region69
    $region68: #{siflow_off_forward.1} parent=1 // pred_region
      _
    $region69: #{siflow_off_forward.1} parent=1 // pred_fallthru
      _
    // Predicated region
    $region70: #{siflow_off_forward.1} parent=1 // pred_check
      _
    $region71: #{siflow_off_forward.1} parent=1 // pred_check_branch
      %146 = sbr.rel (0) target = $region73
    $region72: #{siflow_off_forward.1} parent=1 // pred_region
      %s148 = ssub.s32 16, 16
      %149 = vsyncadd [#allocation11], %s148
      %s151 = sshll.u32 [#allocation10], 4
      %s152 = int_to_ptr.vmem [resolvable:$true] %s151
      %154 = dma.hbm_to_vmem [thread:$0]  %s35, 16, %s152, [#allocation11]
    $region73: #{siflow_off_forward.1} parent=1 // pred_fallthru
      _
    // Predicated region
    $region74: #{siflow_off_forward.1} parent=1 // pred_check
      _
    $region75: #{siflow_off_forward.1} parent=1 // pred_check_branch
      %156 = sbr.rel (0) target = $region77
    $region76: #{siflow_off_forward.1} parent=1 // pred_region
      _
    $region77: #{siflow_off_forward.1} parent=1 // pred_fallthru
      _
    // Predicated region
    $region78: #{siflow_off_forward.1} parent=1 // pred_check
      _
    $region79: #{siflow_off_forward.1} parent=1 // pred_check_branch
      %158 = sbr.rel (0) target = $region81
    $region80: #{siflow_off_forward.1} parent=1 // pred_region
      %s160 = ssub.s32 32, 32
      %161 = vsyncadd [#allocation11], %s160
      %s163 = sshll.u32 [#allocation12], 4
      %s164 = int_to_ptr.vmem [resolvable:$true] %s163
      %166 = dma.hbm_to_vmem [thread:$0]  %s39, 32, %s164, [#allocation11]
    $region81: #{siflow_off_forward.1} parent=1 // pred_fallthru
      _
    // Predicated region
    $region82: #{siflow_off_forward.1} parent=1 // pred_check
      _
    $region83: #{siflow_off_forward.1} parent=1 // pred_check_branch
      %168 = sbr.rel (0) target = $region85
    $region84: #{siflow_off_forward.1} parent=1 // pred_region
      _
    $region85: #{siflow_off_forward.1} parent=1 // pred_fallthru
      _
    // Predicated region
    $region86: #{siflow_off_forward.1} parent=1 // pred_check
      _
    $region87: #{siflow_off_forward.1} parent=1 // pred_check_branch
      %170 = sbr.rel (0) target = $region89
    $region88: #{siflow_off_forward.1} parent=1 // pred_region
      _
    $region89: #{siflow_off_forward.1} parent=1 // pred_fallthru
      _
    // Predicated region
    $region90: #{siflow_off_forward.1} parent=1 // pred_check
      _
    $region91: #{siflow_off_forward.1} parent=1 // pred_check_branch
      %172 = sbr.rel (0) target = $region93
    $region92: #{siflow_off_forward.1} parent=1 // pred_region
      _
    $region93: #{siflow_off_forward.1} parent=1 // pred_fallthru
      _
    // Predicated region
    $region94: #{siflow_off_forward.1} parent=1 // pred_check
      _
    $region95: #{siflow_off_forward.1} parent=1 // pred_check_branch
      %174 = sbr.rel (0) target = $region97
    $region96: #{siflow_off_forward.1} parent=1 // pred_region
      %s176 = ssub.s32 16, 16
      %177 = vsyncadd [#allocation14], %s176
      %s179 = sshll.u32 [#allocation13], 4
      %s180 = int_to_ptr.vmem [resolvable:$true] %s179
      %182 = dma.hbm_to_vmem [thread:$0]  %s47, 16, %s180, [#allocation14]
    $region97: #{siflow_off_forward.1} parent=1 // pred_fallthru
      _
    // Predicated region
    $region98: #{siflow_off_forward.1} parent=1 // pred_check
      _
    $region99: #{siflow_off_forward.1} parent=1 // pred_check_branch
      %184 = sbr.rel (0) target = $region101
    $region100: #{siflow_off_forward.1} parent=1 // pred_region
      %s186 = ssub.s32 512, 512
      %187 = vsyncadd [#allocation14], %s186
      %s188 = sshll.u32 [#allocation15], 4
      %s189 = int_to_ptr.vmem [resolvable:$true] %s188
      %194 = dma.hbm_to_vmem [thread:$0]  %s49, 512, %s189, [#allocation14], 128, 128, 8
    $region101: #{siflow_off_forward.1} parent=1 // pred_fallthru
      _
    // Predicated region
    $region102: #{siflow_off_forward.1} parent=1 // pred_check
      _
    $region103: #{siflow_off_forward.1} parent=1 // pred_check_branch
      %196 = sbr.rel (0) target = $region105
    $region104: #{siflow_off_forward.1} parent=1 // pred_region
      %s198 = ssub.s32 16, 16
      %199 = vsyncadd [#allocation17], %s198
      %s201 = sshll.u32 [#allocation16], 4
      %s202 = int_to_ptr.vmem [resolvable:$true] %s201
      %204 = dma.hbm_to_vmem [thread:$0]  %s51, 16, %s202, [#allocation17]
    $region105: #{siflow_off_forward.1} parent=1 // pred_fallthru
      _
    // Predicated region
    $region106: #{siflow_off_forward.1} parent=1 // pred_check
      _
    $region107: #{siflow_off_forward.1} parent=1 // pred_check_branch
      %206 = sbr.rel (0) target = $region109
    $region108: #{siflow_off_forward.1} parent=1 // pred_region
      _
    $region109: #{siflow_off_forward.1} parent=1 // pred_fallthru
      _
    // Predicated region
    $region110: #{siflow_off_forward.1} parent=1 // pred_check
      _
    $region111: #{siflow_off_forward.1} parent=1 // pred_check_branch
      %208 = sbr.rel (0) target = $region113
    $region112: #{siflow_off_forward.1} parent=1 // pred_region
      %s210 = ssub.s32 16, 16
      %211 = vsyncadd [#allocation17], %s210
      %s213 = sshll.u32 [#allocation18], 4
      %s214 = int_to_ptr.vmem [resolvable:$true] %s213
      %216 = dma.hbm_to_vmem [thread:$0]  %s55, 16, %s214, [#allocation17]
    $region113: #{siflow_off_forward.1} parent=1 // pred_fallthru
      _
    // Predicated region
    $region114: #{siflow_off_forward.1} parent=1 // pred_check
      _
    $region115: #{siflow_off_forward.1} parent=1 // pred_check_branch
      %218 = sbr.rel (0) target = $region117
    $region116: #{siflow_off_forward.1} parent=1 // pred_region
      %s220 = ssub.s32 16, 16
      %221 = vsyncadd [#allocation20], %s220
      %s223 = sshll.u32 [#allocation19], 4
      %s224 = int_to_ptr.vmem [resolvable:$true] %s223
      %226 = dma.hbm_to_vmem [thread:$0]  %s57, 16, %s224, [#allocation20]
    $region117: #{siflow_off_forward.1} parent=1 // pred_fallthru
      _
    // Predicated region
    $region118: #{siflow_off_forward.1} parent=1 // pred_check
      _
    $region119: #{siflow_off_forward.1} parent=1 // pred_check_branch
      %228 = sbr.rel (0) target = $region121
    $region120: #{siflow_off_forward.1} parent=1 // pred_region
      %229 = dma.done [#allocation3], 16
    $region121: #{siflow_off_forward.1} parent=1 // pred_fallthru
      _
    // Predicated region
    $region122: #{siflow_off_forward.1} parent=1 // pred_check
      _
    $region123: #{siflow_off_forward.1} parent=1 // pred_check_branch
      %231 = sbr.rel (0) target = $region125
    $region124: #{siflow_off_forward.1} parent=1 // pred_region
      %232 = dma.done [#allocation5], 16
    $region125: #{siflow_off_forward.1} parent=1 // pred_fallthru
      _
    // Predicated region
    $region126: #{siflow_off_forward.1} parent=1 // pred_check
      _
    $region127: #{siflow_off_forward.1} parent=1 // pred_check_branch
      %234 = sbr.rel (0) target = $region129
    $region128: #{siflow_off_forward.1} parent=1 // pred_region
      %235 = dma.done [#allocation5], 16
    $region129: #{siflow_off_forward.1} parent=1 // pred_fallthru
      _
    // Predicated region
    $region130: #{siflow_off_forward.1} parent=1 // pred_check
      _
    $region131: #{siflow_off_forward.1} parent=1 // pred_check_branch
      %237 = sbr.rel (0) target = $region133
    $region132: #{siflow_off_forward.1} parent=1 // pred_region
      %238 = dma.done [#allocation8], 128
    $region133: #{siflow_off_forward.1} parent=1 // pred_fallthru
      _
    // Predicated region
    $region134: #{siflow_off_forward.1} parent=1 // pred_check
      _
    $region135: #{siflow_off_forward.1} parent=1 // pred_check_branch
      %240 = sbr.rel (0) target = $region137
    $region136: #{siflow_off_forward.1} parent=1 // pred_region
      %241 = dma.done [#allocation8], 16
    $region137: #{siflow_off_forward.1} parent=1 // pred_fallthru
      _
    // Predicated region
    $region138: #{siflow_off_forward.1} parent=1 // pred_check
      _
    $region139: #{siflow_off_forward.1} parent=1 // pred_check_branch
      %243 = sbr.rel (0) target = $region141
    $region140: #{siflow_off_forward.1} parent=1 // pred_region
      %244 = dma.done [#allocation11], 16
    $region141: #{siflow_off_forward.1} parent=1 // pred_fallthru
      _
    // Predicated region
    $region142: #{siflow_off_forward.1} parent=1 // pred_check
      _
    $region143: #{siflow_off_forward.1} parent=1 // pred_check_branch
      %246 = sbr.rel (0) target = $region145
    $region144: #{siflow_off_forward.1} parent=1 // pred_region
      %247 = dma.done [#allocation11], 32
    $region145: #{siflow_off_forward.1} parent=1 // pred_fallthru
      _
    // Predicated region
    $region146: #{siflow_off_forward.1} parent=1 // pred_check
      _
    $region147: #{siflow_off_forward.1} parent=1 // pred_check_branch
      %249 = sbr.rel (0) target = $region149
    $region148: #{siflow_off_forward.1} parent=1 // pred_region
      %250 = dma.done [#allocation14], 16
    $region149: #{siflow_off_forward.1} parent=1 // pred_fallthru
      _
    // Predicated region
    $region150: #{siflow_off_forward.1} parent=1 // pred_check
      _
    $region151: #{siflow_off_forward.1} parent=1 // pred_check_branch
      %252 = sbr.rel (0) target = $region153
    $region152: #{siflow_off_forward.1} parent=1 // pred_region
      %253 = dma.done [#allocation14], 512
    $region153: #{siflow_off_forward.1} parent=1 // pred_fallthru
      _
    // Predicated region
    $region154: #{siflow_off_forward.1} parent=1 // pred_check
      _
    $region155: #{siflow_off_forward.1} parent=1 // pred_check_branch
      %255 = sbr.rel (0) target = $region157
    $region156: #{siflow_off_forward.1} parent=1 // pred_region
      %256 = dma.done [#allocation17], 16
    $region157: #{siflow_off_forward.1} parent=1 // pred_fallthru
      _
    // Predicated region
    $region158: #{siflow_off_forward.1} parent=1 // pred_check
      _
    $region159: #{siflow_off_forward.1} parent=1 // pred_check_branch
      %258 = sbr.rel (0) target = $region161
    $region160: #{siflow_off_forward.1} parent=1 // pred_region
      %259 = dma.done [#allocation17], 16
    $region161: #{siflow_off_forward.1} parent=1 // pred_fallthru
      _
    // Predicated region
    $region162: #{siflow_off_forward.1} parent=1 // pred_check
      _
    $region163: #{siflow_off_forward.1} parent=1 // pred_check_branch
      %261 = sbr.rel (0) target = $region165
    $region164: #{siflow_off_forward.1} parent=1 // pred_region
      %262 = dma.done [#allocation20], 16
    $region165: #{siflow_off_forward.1} parent=1 // pred_fallthru
      _
    %v263 = vld [vmem:[%s1] sm:$0x3]
    %v264 = vld [vmem:[%s7] sm:$0xff]
    %v265 = vld [vmem:[%s7 + $0x8] sm:$0xff]
    %v266 = vld [vmem:[%s7 + $0x10] sm:$0xff]
    %v267 = vld [vmem:[#allocation2] sm:$0x1]
    %v269 = vlaneseq
    %v270 = vshrl.u32 %v269, 7
    %v271 = vsub.s32 0, %v270
    %v272 = vrot.slane %v267, %v271
    %vm274 = vcmask 195584
    %v276 = vsel %vm274, %v263, 0
    %278 = vmatprep.subr.mxu0 0.0
    %279 = vmatpush1.msra.mxu0 %v264
    %280 = vmatprep.subr.mxu0 0.0
    %281 = vmatpush1.msra.mxu0 %v265
    %282 = vmatprep.subr.mxu0 0.0
    %283 = vmatpush1.msra.mxu0 %v266
    %284 = vmatprep.subr.mxu0 0.0
    %285 = vmatpush1.msra.mxu0 0.0
    %286 = vmatprep.subr.mxu0 0.0
    %287 = vmatpush1.msra.mxu0 0.0
    %288 = vmatprep.subr.mxu0 0.0
    %289 = vmatpush1.msra.mxu0 0.0
    %290 = vmatprep.subr.mxu0 0.0
    %291 = vmatpush1.msra.mxu0 0.0
    %292 = vmatprep.subr.mxu0 0.0
    %293 = vmatpush1.msra.mxu0 0.0
    %294 = vmatprep.subr.mxu0 0.0
    %295 = vmatpush1.msra.mxu0 0.0
    %296 = vmatprep.subr.mxu0 0.0
    %297 = vmatpush1.msra.mxu0 0.0
    %298 = vmatprep.subr.mxu0 0.0
    %299 = vmatpush1.msra.mxu0 0.0
    %300 = vmatprep.subr.mxu0 0.0
    %301 = vmatpush1.msra.mxu0 0.0
    %302 = vmatprep.subr.mxu0 0.0
    %303 = vmatpush1.msra.mxu0 0.0
    %304 = vmatprep.subr.mxu0 0.0
    %305 = vmatpush1.msra.mxu0 0.0
    %306 = vmatprep.subr.mxu0 0.0
    %307 = vmatpush1.msra.mxu0 0.0
    %308 = vmatprep.subr.mxu0 0.0
    %309 = vmatpush1.msra.mxu0 0.0
    %310 = vmatprep.subr.mxu0 0.0
    %311 = vmatpush1.msra.mxu0 0.0
    %312 = vmatprep.subr.mxu0 0.0
    %313 = vmatpush1.msra.mxu0 0.0
    %314 = vmatprep.subr.mxu0 0.0
    %315 = vmatpush1.msra.mxu0 0.0
    %316 = vmatprep.subr.mxu0 0.0
    %317 = vmatpush1.msra.mxu0 0.0
    %318 = vmatprep.subr.mxu0 0.0
    %319 = vmatpush1.msra.mxu0 0.0
    %320 = vmatprep.subr.mxu0 0.0
    %321 = vmatpush1.msra.mxu0 0.0
    %322 = vmatprep.subr.mxu0 0.0
    %323 = vmatpush1.msra.mxu0 0.0
    %324 = vmatprep.subr.mxu0 0.0
    %325 = vmatpush1.msra.mxu0 0.0
    %326 = vmatprep.subr.mxu0 0.0
    %327 = vmatpush1.msra.mxu0 0.0
    %328 = vmatprep.subr.mxu0 0.0
    %329 = vmatpush1.msra.mxu0 0.0
    %330 = vmatprep.subr.mxu0 0.0
    %331 = vmatpush1.msra.mxu0 0.0
    %332 = vmatprep.subr.mxu0 0.0
    %333 = vmatpush1.msra.mxu0 0.0
    %334 = vmatprep.subr.mxu0 0.0
    %335 = vmatpush1.msra.mxu0 0.0
    %336 = vmatprep.subr.mxu0 0.0
    %337 = vmatpush1.msra.mxu0 0.0
    %338 = vmatprep.subr.mxu0 0.0
    %339 = vmatpush1.msra.mxu0 0.0
    %340 = vmatprep.subr.mxu0 0.0
    %341 = vmatpush1.msra.mxu0 0.0
    %342 = vmatprep.mubr.f32.mxu0 0.0
    %343 = vmatmul.mubr.f32.gmra.mrb[0].mxu0 %v276
    %v344 = vpop.f32.mrb[0].mxu0
    %v345 = vadd.f32 %v272, %v344
    %v346 = vpop.f32.mrb[0].mxu0
    %347 = vdwg.mxu0
    %v348 = vtanh.pop %v345
    %v349 = vld [vmem:[%s11] sm:$0xff]
    %v350 = vld [vmem:[%s11 + $0x8] sm:$0xff]
    %v351 = vld [vmem:[#allocation4] sm:$0x1]
    %v353 = vlaneseq
    %v354 = vshrl.u32 %v353, 7
    %v355 = vsub.s32 0, %v354
    %v356 = vrot.slane %v351, %v355
    %vm358 = vcmask 130048
    %v360 = vsel %vm358, %v348, 0
    %362 = vmatprep.subr.mxu0 0.0
    %363 = vmatpush1.msra.mxu0 %v349
    %364 = vmatprep.subr.mxu0 0.0
    %365 = vmatpush1.msra.mxu0 %v350
    %366 = vmatprep.subr.mxu0 0.0
    %367 = vmatpush1.msra.mxu0 0.0
    %368 = vmatprep.subr.mxu0 0.0
    %369 = vmatpush1.msra.mxu0 0.0
    %370 = vmatprep.subr.mxu0 0.0
    %371 = vmatpush1.msra.mxu0 0.0
    %372 = vmatprep.subr.mxu0 0.0
    %373 = vmatpush1.msra.mxu0 0.0
    %374 = vmatprep.subr.mxu0 0.0
    %375 = vmatpush1.msra.mxu0 0.0
    %376 = vmatprep.subr.mxu0 0.0
    %377 = vmatpush1.msra.mxu0 0.0
    %378 = vmatprep.subr.mxu0 0.0
    %379 = vmatpush1.msra.mxu0 0.0
    %380 = vmatprep.subr.mxu0 0.0
    %381 = vmatpush1.msra.mxu0 0.0
    %382 = vmatprep.subr.mxu0 0.0
    %383 = vmatpush1.msra.mxu0 0.0
    %384 = vmatprep.subr.mxu0 0.0
    %385 = vmatpush1.msra.mxu0 0.0
    %386 = vmatprep.subr.mxu0 0.0
    %387 = vmatpush1.msra.mxu0 0.0
    %388 = vmatprep.subr.mxu0 0.0
    %389 = vmatpush1.msra.mxu0 0.0
    %390 = vmatprep.subr.mxu0 0.0
    %391 = vmatpush1.msra.mxu0 0.0
    %392 = vmatprep.subr.mxu0 0.0
    %393 = vmatpush1.msra.mxu0 0.0
    %394 = vmatprep.subr.mxu0 0.0
    %395 = vmatpush1.msra.mxu0 0.0
    %396 = vmatprep.subr.mxu0 0.0
    %397 = vmatpush1.msra.mxu0 0.0
    %398 = vmatprep.subr.mxu0 0.0
    %399 = vmatpush1.msra.mxu0 0.0
    %400 = vmatprep.subr.mxu0 0.0
    %401 = vmatpush1.msra.mxu0 0.0
    %402 = vmatprep.subr.mxu0 0.0
    %403 = vmatpush1.msra.mxu0 0.0
    %404 = vmatprep.subr.mxu0 0.0
    %405 = vmatpush1.msra.mxu0 0.0
    %406 = vmatprep.subr.mxu0 0.0
    %407 = vmatpush1.msra.mxu0 0.0
    %408 = vmatprep.subr.mxu0 0.0
    %409 = vmatpush1.msra.mxu0 0.0
    %410 = vmatprep.subr.mxu0 0.0
    %411 = vmatpush1.msra.mxu0 0.0
    %412 = vmatprep.subr.mxu0 0.0
    %413 = vmatpush1.msra.mxu0 0.0
    %414 = vmatprep.subr.mxu0 0.0
    %415 = vmatpush1.msra.mxu0 0.0
    %416 = vmatprep.subr.mxu0 0.0
    %417 = vmatpush1.msra.mxu0 0.0
    %418 = vmatprep.subr.mxu0 0.0
    %419 = vmatpush1.msra.mxu0 0.0
    %420 = vmatprep.subr.mxu0 0.0
    %421 = vmatpush1.msra.mxu0 0.0
    %422 = vmatprep.subr.mxu0 0.0
    %423 = vmatpush1.msra.mxu0 0.0
    %424 = vmatprep.subr.mxu0 0.0
    %425 = vmatpush1.msra.mxu0 0.0
    %426 = vmatprep.mubr.f32.mxu0 0.0
    %427 = vmatmul.mubr.f32.gmra.mrb[0].mxu0 %v360
    %v428 = vpop.f32.mrb[0].mxu0
    %v429 = vadd.f32 %v356, %v428
    %v430 = vpop.f32.mrb[0].mxu0
    %431 = vdwg.mxu0
    %v432 = vld [vmem:[%s15] sm:$0xf]
    %v433 = vld [vmem:[%s3] sm:$0x3]
    %v434 = vld [vmem:[%s17] sm:$0xff]
    %v435 = vld [vmem:[%s17 + $0x8] sm:$0xff]
    %v436 = vld [vmem:[%s17 + $0x10] sm:$0xff]
    %v438 = vsel %vm274, %v433, 0
    %440 = vmatprep.subr.mxu0 0.0
    %441 = vmatpush1.msra.mxu0 %v434
    %442 = vmatprep.subr.mxu0 0.0
    %443 = vmatpush1.msra.mxu0 %v435
    %444 = vmatprep.subr.mxu0 0.0
    %445 = vmatpush1.msra.mxu0 %v436
    %446 = vmatprep.subr.mxu0 0.0
    %447 = vmatpush1.msra.mxu0 0.0
    %448 = vmatprep.subr.mxu0 0.0
    %449 = vmatpush1.msra.mxu0 0.0
    %450 = vmatprep.subr.mxu0 0.0
    %451 = vmatpush1.msra.mxu0 0.0
    %452 = vmatprep.subr.mxu0 0.0
    %453 = vmatpush1.msra.mxu0 0.0
    %454 = vmatprep.subr.mxu0 0.0
    %455 = vmatpush1.msra.mxu0 0.0
    %456 = vmatprep.subr.mxu0 0.0
    %457 = vmatpush1.msra.mxu0 0.0
    %458 = vmatprep.subr.mxu0 0.0
    %459 = vmatpush1.msra.mxu0 0.0
    %460 = vmatprep.subr.mxu0 0.0
    %461 = vmatpush1.msra.mxu0 0.0
    %462 = vmatprep.subr.mxu0 0.0
    %463 = vmatpush1.msra.mxu0 0.0
    %464 = vmatprep.subr.mxu0 0.0
    %465 = vmatpush1.msra.mxu0 0.0
    %466 = vmatprep.subr.mxu0 0.0
    %467 = vmatpush1.msra.mxu0 0.0
    %468 = vmatprep.subr.mxu0 0.0
    %469 = vmatpush1.msra.mxu0 0.0
    %470 = vmatprep.subr.mxu0 0.0
    %471 = vmatpush1.msra.mxu0 0.0
    %472 = vmatprep.subr.mxu0 0.0
    %473 = vmatpush1.msra.mxu0 0.0
    %474 = vmatprep.subr.mxu0 0.0
    %475 = vmatpush1.msra.mxu0 0.0
    %476 = vmatprep.subr.mxu0 0.0
    %477 = vmatpush1.msra.mxu0 0.0
    %478 = vmatprep.subr.mxu0 0.0
    %479 = vmatpush1.msra.mxu0 0.0
    %480 = vmatprep.subr.mxu0 0.0
    %481 = vmatpush1.msra.mxu0 0.0
    %482 = vmatprep.subr.mxu0 0.0
    %483 = vmatpush1.msra.mxu0 0.0
    %484 = vmatprep.subr.mxu0 0.0
    %485 = vmatpush1.msra.mxu0 0.0
    %486 = vmatprep.subr.mxu0 0.0
    %487 = vmatpush1.msra.mxu0 0.0
    %488 = vmatprep.subr.mxu0 0.0
    %489 = vmatpush1.msra.mxu0 0.0
    %490 = vmatprep.subr.mxu0 0.0
    %491 = vmatpush1.msra.mxu0 0.0
    %492 = vmatprep.subr.mxu0 0.0
    %493 = vmatpush1.msra.mxu0 0.0
    %494 = vmatprep.subr.mxu0 0.0
    %495 = vmatpush1.msra.mxu0 0.0
    %496 = vmatprep.subr.mxu0 0.0
    %497 = vmatpush1.msra.mxu0 0.0
    %498 = vmatprep.subr.mxu0 0.0
    %499 = vmatpush1.msra.mxu0 0.0
    %500 = vmatprep.subr.mxu0 0.0
    %501 = vmatpush1.msra.mxu0 0.0
    %502 = vmatprep.subr.mxu0 0.0
    %503 = vmatpush1.msra.mxu0 0.0
    %504 = vmatprep.mubr.f32.mxu0 0.0
    %505 = vmatmul.mubr.f32.gmra.mrb[0].mxu0 %v438
    %v506 = vpop.f32.mrb[0].mxu0
    %v507 = vadd.f32 0.0, %v506
    %v508 = vpop.f32.mrb[0].mxu0
    %509 = vdwg.mxu0
    %vm510 = vcmask 31744
    %v512 = vsel %vm510, %v429, 0
    %vm514 = vcmask 1043456
    %v516 = vsel %vm514, %v432, 0
    %518 = vmatprep.subr.mxu0 0.0
    %519 = vmatpush1.msra.mxu0 %v516
    %520 = vmatprep.subr.mxu0 0.0
    %521 = vmatpush1.msra.mxu0 0.0
    %522 = vmatprep.subr.mxu0 0.0
    %523 = vmatpush1.msra.mxu0 0.0
    %524 = vmatprep.subr.mxu0 0.0
    %525 = vmatpush1.msra.mxu0 0.0
    %526 = vmatprep.subr.mxu0 0.0
    %527 = vmatpush1.msra.mxu0 0.0
    %528 = vmatprep.subr.mxu0 0.0
    %529 = vmatpush1.msra.mxu0 0.0
    %530 = vmatprep.subr.mxu0 0.0
    %531 = vmatpush1.msra.mxu0 0.0
    %532 = vmatprep.subr.mxu0 0.0
    %533 = vmatpush1.msra.mxu0 0.0
    %534 = vmatprep.subr.mxu0 0.0
    %535 = vmatpush1.msra.mxu0 0.0
    %536 = vmatprep.subr.mxu0 0.0
    %537 = vmatpush1.msra.mxu0 0.0
    %538 = vmatprep.subr.mxu0 0.0
    %539 = vmatpush1.msra.mxu0 0.0
    %540 = vmatprep.subr.mxu0 0.0
    %541 = vmatpush1.msra.mxu0 0.0
    %542 = vmatprep.subr.mxu0 0.0
    %543 = vmatpush1.msra.mxu0 0.0
    %544 = vmatprep.subr.mxu0 0.0
    %545 = vmatpush1.msra.mxu0 0.0
    %546 = vmatprep.subr.mxu0 0.0
    %547 = vmatpush1.msra.mxu0 0.0
    %548 = vmatprep.subr.mxu0 0.0
    %549 = vmatpush1.msra.mxu0 0.0
    %550 = vmatprep.subr.mxu0 0.0
    %551 = vmatpush1.msra.mxu0 0.0
    %552 = vmatprep.subr.mxu0 0.0
    %553 = vmatpush1.msra.mxu0 0.0
    %554 = vmatprep.subr.mxu0 0.0
    %555 = vmatpush1.msra.mxu0 0.0
    %556 = vmatprep.subr.mxu0 0.0
    %557 = vmatpush1.msra.mxu0 0.0
    %558 = vmatprep.subr.mxu0 0.0
    %559 = vmatpush1.msra.mxu0 0.0
    %560 = vmatprep.subr.mxu0 0.0
    %561 = vmatpush1.msra.mxu0 0.0
    %562 = vmatprep.subr.mxu0 0.0
    %563 = vmatpush1.msra.mxu0 0.0
    %564 = vmatprep.subr.mxu0 0.0
    %565 = vmatpush1.msra.mxu0 0.0
    %566 = vmatprep.subr.mxu0 0.0
    %567 = vmatpush1.msra.mxu0 0.0
    %568 = vmatprep.subr.mxu0 0.0
    %569 = vmatpush1.msra.mxu0 0.0
    %570 = vmatprep.subr.mxu0 0.0
    %571 = vmatpush1.msra.mxu0 0.0
    %572 = vmatprep.subr.mxu0 0.0
    %573 = vmatpush1.msra.mxu0 0.0
    %574 = vmatprep.subr.mxu0 0.0
    %575 = vmatpush1.msra.mxu0 0.0
    %576 = vmatprep.subr.mxu0 0.0
    %577 = vmatpush1.msra.mxu0 0.0
    %578 = vmatprep.subr.mxu0 0.0
    %579 = vmatpush1.msra.mxu0 0.0
    %580 = vmatprep.subr.mxu0 0.0
    %581 = vmatpush1.msra.mxu0 0.0
    %582 = vmatprep.mubr.f32.mxu0 0.0
    %583 = vmatmul.mubr.f32.gmra.mrb[0].mxu0 %v512
    %v584 = vpop.f32.mrb[0].mxu0
    %v585 = vadd.f32 %v507, %v584
    %v586 = vpop.f32.mrb[0].mxu0
    %587 = vdwg.mxu0
    %v588 = vld [vmem:[#allocation6] sm:$0x1]
    %v590 = vlaneseq
    %v591 = vshrl.u32 %v590, 7
    %v592 = vsub.s32 0, %v591
    %v593 = vrot.slane %v588, %v592
    %v595 = vadd.f32 %v585, %v593
    %v596 = vtanh.pop %v595
    %v597 = vld [vmem:[%s21] sm:$0xff]
    %v598 = vld [vmem:[%s21 + $0x8] sm:$0xff]
    %v599 = vld [vmem:[%s21 + $0x10] sm:$0xff]
    %v600 = vld [vmem:[%s21 + $0x18] sm:$0xff]
    %v601 = vld [vmem:[%s23] sm:$0x1]
    %v603 = vlaneseq
    %v604 = vshrl.u32 %v603, 7
    %v605 = vsub.s32 0, %v604
    %v606 = vrot.slane %v601, %v605
    %vm608 = vcmask 261120
    %v610 = vsel %vm608, %v596, 0
    %612 = vmatprep.subr.mxu0 0.0
    %613 = vmatpush1.msra.mxu0 %v597
    %614 = vmatprep.subr.mxu0 0.0
    %615 = vmatpush1.msra.mxu0 %v598
    %616 = vmatprep.subr.mxu0 0.0
    %617 = vmatpush1.msra.mxu0 %v599
    %618 = vmatprep.subr.mxu0 0.0
    %619 = vmatpush1.msra.mxu0 %v600
    %620 = vmatprep.subr.mxu0 0.0
    %621 = vmatpush1.msra.mxu0 0.0
    %622 = vmatprep.subr.mxu0 0.0
    %623 = vmatpush1.msra.mxu0 0.0
    %624 = vmatprep.subr.mxu0 0.0
    %625 = vmatpush1.msra.mxu0 0.0
    %626 = vmatprep.subr.mxu0 0.0
    %627 = vmatpush1.msra.mxu0 0.0
    %628 = vmatprep.subr.mxu0 0.0
    %629 = vmatpush1.msra.mxu0 0.0
    %630 = vmatprep.subr.mxu0 0.0
    %631 = vmatpush1.msra.mxu0 0.0
    %632 = vmatprep.subr.mxu0 0.0
    %633 = vmatpush1.msra.mxu0 0.0
    %634 = vmatprep.subr.mxu0 0.0
    %635 = vmatpush1.msra.mxu0 0.0
    %636 = vmatprep.subr.mxu0 0.0
    %637 = vmatpush1.msra.mxu0 0.0
    %638 = vmatprep.subr.mxu0 0.0
    %639 = vmatpush1.msra.mxu0 0.0
    %640 = vmatprep.subr.mxu0 0.0
    %641 = vmatpush1.msra.mxu0 0.0
    %642 = vmatprep.subr.mxu0 0.0
    %643 = vmatpush1.msra.mxu0 0.0
    %644 = vmatprep.subr.mxu0 0.0
    %645 = vmatpush1.msra.mxu0 0.0
    %646 = vmatprep.subr.mxu0 0.0
    %647 = vmatpush1.msra.mxu0 0.0
    %648 = vmatprep.subr.mxu0 0.0
    %649 = vmatpush1.msra.mxu0 0.0
    %650 = vmatprep.subr.mxu0 0.0
    %651 = vmatpush1.msra.mxu0 0.0
    %652 = vmatprep.subr.mxu0 0.0
    %653 = vmatpush1.msra.mxu0 0.0
    %654 = vmatprep.subr.mxu0 0.0
    %655 = vmatpush1.msra.mxu0 0.0
    %656 = vmatprep.subr.mxu0 0.0
    %657 = vmatpush1.msra.mxu0 0.0
    %658 = vmatprep.subr.mxu0 0.0
    %659 = vmatpush1.msra.mxu0 0.0
    %660 = vmatprep.subr.mxu0 0.0
    %661 = vmatpush1.msra.mxu0 0.0
    %662 = vmatprep.subr.mxu0 0.0
    %663 = vmatpush1.msra.mxu0 0.0
    %664 = vmatprep.subr.mxu0 0.0
    %665 = vmatpush1.msra.mxu0 0.0
    %666 = vmatprep.subr.mxu0 0.0
    %667 = vmatpush1.msra.mxu0 0.0
    %668 = vmatprep.subr.mxu0 0.0
    %669 = vmatpush1.msra.mxu0 0.0
    %670 = vmatprep.subr.mxu0 0.0
    %671 = vmatpush1.msra.mxu0 0.0
    %672 = vmatprep.subr.mxu0 0.0
    %673 = vmatpush1.msra.mxu0 0.0
    %674 = vmatprep.subr.mxu0 0.0
    %675 = vmatpush1.msra.mxu0 0.0
    %676 = vmatprep.mubr.f32.mxu0 0.0
    %677 = vmatmul.mubr.f32.gmra.mrb[0].mxu0 %v610
    %v678 = vpop.f32.mrb[0].mxu0
    %v679 = vadd.f32 %v606, %v678
    %v680 = vpop.f32.mrb[0].mxu0
    %681 = vdwg.mxu0
    %v682 = vtanh.pop %v679
    %v683 = vld [vmem:[%s25] sm:$0xff]
    %v684 = vld [vmem:[%s25 + $0x8] sm:$0xff]
    %v685 = vld [vmem:[%s25 + $0x10] sm:$0xff]
    %v686 = vld [vmem:[%s25 + $0x18] sm:$0xff]
    %v687 = vld [vmem:[%s27] sm:$0x1]
    %v689 = vlaneseq
    %v690 = vshrl.u32 %v689, 7
    %v691 = vsub.s32 0, %v690
    %v692 = vrot.slane %v687, %v691
    %v695 = vsel %vm608, %v682, 0
    %697 = vmatprep.subr.mxu0 0.0
    %698 = vmatpush1.msra.mxu0 %v683
    %699 = vmatprep.subr.mxu0 0.0
    %700 = vmatpush1.msra.mxu0 %v684
    %701 = vmatprep.subr.mxu0 0.0
    %702 = vmatpush1.msra.mxu0 %v685
    %703 = vmatprep.subr.mxu0 0.0
    %704 = vmatpush1.msra.mxu0 %v686
    %705 = vmatprep.subr.mxu0 0.0
    %706 = vmatpush1.msra.mxu0 0.0
    %707 = vmatprep.subr.mxu0 0.0
    %708 = vmatpush1.msra.mxu0 0.0
    %709 = vmatprep.subr.mxu0 0.0
    %710 = vmatpush1.msra.mxu0 0.0
    %711 = vmatprep.subr.mxu0 0.0
    %712 = vmatpush1.msra.mxu0 0.0
    %713 = vmatprep.subr.mxu0 0.0
    %714 = vmatpush1.msra.mxu0 0.0
    %715 = vmatprep.subr.mxu0 0.0
    %716 = vmatpush1.msra.mxu0 0.0
    %717 = vmatprep.subr.mxu0 0.0
    %718 = vmatpush1.msra.mxu0 0.0
    %719 = vmatprep.subr.mxu0 0.0
    %720 = vmatpush1.msra.mxu0 0.0
    %721 = vmatprep.subr.mxu0 0.0
    %722 = vmatpush1.msra.mxu0 0.0
    %723 = vmatprep.subr.mxu0 0.0
    %724 = vmatpush1.msra.mxu0 0.0
    %725 = vmatprep.subr.mxu0 0.0
    %726 = vmatpush1.msra.mxu0 0.0
    %727 = vmatprep.subr.mxu0 0.0
    %728 = vmatpush1.msra.mxu0 0.0
    %729 = vmatprep.subr.mxu0 0.0
    %730 = vmatpush1.msra.mxu0 0.0
    %731 = vmatprep.subr.mxu0 0.0
    %732 = vmatpush1.msra.mxu0 0.0
    %733 = vmatprep.subr.mxu0 0.0
    %734 = vmatpush1.msra.mxu0 0.0
    %735 = vmatprep.subr.mxu0 0.0
    %736 = vmatpush1.msra.mxu0 0.0
    %737 = vmatprep.subr.mxu0 0.0
    %738 = vmatpush1.msra.mxu0 0.0
    %739 = vmatprep.subr.mxu0 0.0
    %740 = vmatpush1.msra.mxu0 0.0
    %741 = vmatprep.subr.mxu0 0.0
    %742 = vmatpush1.msra.mxu0 0.0
    %743 = vmatprep.subr.mxu0 0.0
    %744 = vmatpush1.msra.mxu0 0.0
    %745 = vmatprep.subr.mxu0 0.0
    %746 = vmatpush1.msra.mxu0 0.0
    %747 = vmatprep.subr.mxu0 0.0
    %748 = vmatpush1.msra.mxu0 0.0
    %749 = vmatprep.subr.mxu0 0.0
    %750 = vmatpush1.msra.mxu0 0.0
    %751 = vmatprep.subr.mxu0 0.0
    %752 = vmatpush1.msra.mxu0 0.0
    %753 = vmatprep.subr.mxu0 0.0
    %754 = vmatpush1.msra.mxu0 0.0
    %755 = vmatprep.subr.mxu0 0.0
    %756 = vmatpush1.msra.mxu0 0.0
    %757 = vmatprep.subr.mxu0 0.0
    %758 = vmatpush1.msra.mxu0 0.0
    %759 = vmatprep.subr.mxu0 0.0
    %760 = vmatpush1.msra.mxu0 0.0
    %761 = vmatprep.mubr.f32.mxu0 0.0
    %762 = vmatmul.mubr.f32.gmra.mrb[0].mxu0 %v695
    %v763 = vpop.f32.mrb[0].mxu0
    %v764 = vadd.f32 %v692, %v763
    %v765 = vpop.f32.mrb[0].mxu0
    %766 = vdwg.mxu0
    %v767 = vld [vmem:[#allocation7] sm:$0xff]
    %v768 = vld [vmem:[#allocation9] sm:$0x1]
    %v770 = vlaneseq
    %v771 = vshrl.u32 %v770, 7
    %v772 = vsub.s32 0, %v771
    %v773 = vrot.slane %v768, %v772
    %vm775 = vcmask 64512
    %v777 = vsel %vm775, %v764, 0
    %779 = vmatprep.subr.mxu0 0.0
    %780 = vmatpush1.msra.mxu0 %v767
    %781 = vmatprep.subr.mxu0 0.0
    %782 = vmatpush1.msra.mxu0 0.0
    %783 = vmatprep.subr.mxu0 0.0
    %784 = vmatpush1.msra.mxu0 0.0
    %785 = vmatprep.subr.mxu0 0.0
    %786 = vmatpush1.msra.mxu0 0.0
    %787 = vmatprep.subr.mxu0 0.0
    %788 = vmatpush1.msra.mxu0 0.0
    %789 = vmatprep.subr.mxu0 0.0
    %790 = vmatpush1.msra.mxu0 0.0
    %791 = vmatprep.subr.mxu0 0.0
    %792 = vmatpush1.msra.mxu0 0.0
    %793 = vmatprep.subr.mxu0 0.0
    %794 = vmatpush1.msra.mxu0 0.0
    %795 = vmatprep.subr.mxu0 0.0
    %796 = vmatpush1.msra.mxu0 0.0
    %797 = vmatprep.subr.mxu0 0.0
    %798 = vmatpush1.msra.mxu0 0.0
    %799 = vmatprep.subr.mxu0 0.0
    %800 = vmatpush1.msra.mxu0 0.0
    %801 = vmatprep.subr.mxu0 0.0
    %802 = vmatpush1.msra.mxu0 0.0
    %803 = vmatprep.subr.mxu0 0.0
    %804 = vmatpush1.msra.mxu0 0.0
    %805 = vmatprep.subr.mxu0 0.0
    %806 = vmatpush1.msra.mxu0 0.0
    %807 = vmatprep.subr.mxu0 0.0
    %808 = vmatpush1.msra.mxu0 0.0
    %809 = vmatprep.subr.mxu0 0.0
    %810 = vmatpush1.msra.mxu0 0.0
    %811 = vmatprep.subr.mxu0 0.0
    %812 = vmatpush1.msra.mxu0 0.0
    %813 = vmatprep.subr.mxu0 0.0
    %814 = vmatpush1.msra.mxu0 0.0
    %815 = vmatprep.subr.mxu0 0.0
    %816 = vmatpush1.msra.mxu0 0.0
    %817 = vmatprep.subr.mxu0 0.0
    %818 = vmatpush1.msra.mxu0 0.0
    %819 = vmatprep.subr.mxu0 0.0
    %820 = vmatpush1.msra.mxu0 0.0
    %821 = vmatprep.subr.mxu0 0.0
    %822 = vmatpush1.msra.mxu0 0.0
    %823 = vmatprep.subr.mxu0 0.0
    %824 = vmatpush1.msra.mxu0 0.0
    %825 = vmatprep.subr.mxu0 0.0
    %826 = vmatpush1.msra.mxu0 0.0
    %827 = vmatprep.subr.mxu0 0.0
    %828 = vmatpush1.msra.mxu0 0.0
    %829 = vmatprep.subr.mxu0 0.0
    %830 = vmatpush1.msra.mxu0 0.0
    %831 = vmatprep.subr.mxu0 0.0
    %832 = vmatpush1.msra.mxu0 0.0
    %833 = vmatprep.subr.mxu0 0.0
    %834 = vmatpush1.msra.mxu0 0.0
    %835 = vmatprep.subr.mxu0 0.0
    %836 = vmatpush1.msra.mxu0 0.0
    %837 = vmatprep.subr.mxu0 0.0
    %838 = vmatpush1.msra.mxu0 0.0
    %839 = vmatprep.subr.mxu0 0.0
    %840 = vmatpush1.msra.mxu0 0.0
    %841 = vmatprep.subr.mxu0 0.0
    %842 = vmatpush1.msra.mxu0 0.0
    %843 = vmatprep.mubr.f32.mxu0 0.0
    %844 = vmatmul.mubr.f32.gmra.mrb[0].mxu0 %v777
    %v845 = vpop.f32.mrb[0].mxu0
    %v846 = vadd.f32 %v773, %v845
    %v847 = vpop.f32.mrb[0].mxu0
    %848 = vdwg.mxu0
    %v849 = vtanh.pop %v846
    %v850 = vld [vmem:[%s33] sm:$0xff]
    %v851 = vld [vmem:[%s33 + $0x8] sm:$0xff]
    %v852 = vld [vmem:[%s33 + $0x10] sm:$0xff]
    %v853 = vld [vmem:[%s33 + $0x18] sm:$0xff]
    %v854 = vld [vmem:[%s33 + $0x20] sm:$0xff]
    %v855 = vld [vmem:[%s33 + $0x28] sm:$0xff]
    %v856 = vld [vmem:[%s33 + $0x30] sm:$0xff]
    %v857 = vld [vmem:[%s33 + $0x38] sm:$0xff]
    %v858 = vld [vmem:[%s33 + $0x40] sm:$0xff]
    %v859 = vld [vmem:[%s33 + $0x48] sm:$0xff]
    %v860 = vld [vmem:[%s33 + $0x50] sm:$0xff]
    %v861 = vld [vmem:[%s33 + $0x58] sm:$0xff]
    %v862 = vld [vmem:[#allocation10] sm:$0x1]
    %v864 = vlaneseq
    %v865 = vshrl.u32 %v864, 7
    %v866 = vsub.s32 0, %v865
    %v867 = vrot.slane %v862, %v866
    %vm869 = vcmask 785408
    %v871 = vsel %vm869, %v849, 0
    %873 = vmatprep.subr.mxu0 0.0
    %874 = vmatpush1.msra.mxu0 %v850
    %875 = vmatprep.subr.mxu0 0.0
    %876 = vmatpush1.msra.mxu0 %v851
    %877 = vmatprep.subr.mxu0 0.0
    %878 = vmatpush1.msra.mxu0 %v852
    %879 = vmatprep.subr.mxu0 0.0
    %880 = vmatpush1.msra.mxu0 %v853
    %881 = vmatprep.subr.mxu0 0.0
    %882 = vmatpush1.msra.mxu0 %v854
    %883 = vmatprep.subr.mxu0 0.0
    %884 = vmatpush1.msra.mxu0 %v855
    %885 = vmatprep.subr.mxu0 0.0
    %886 = vmatpush1.msra.mxu0 %v856
    %887 = vmatprep.subr.mxu0 0.0
    %888 = vmatpush1.msra.mxu0 %v857
    %889 = vmatprep.subr.mxu0 0.0
    %890 = vmatpush1.msra.mxu0 %v858
    %891 = vmatprep.subr.mxu0 0.0
    %892 = vmatpush1.msra.mxu0 %v859
    %893 = vmatprep.subr.mxu0 0.0
    %894 = vmatpush1.msra.mxu0 %v860
    %895 = vmatprep.subr.mxu0 0.0
    %896 = vmatpush1.msra.mxu0 %v861
    %897 = vmatprep.subr.mxu0 0.0
    %898 = vmatpush1.msra.mxu0 0.0
    %899 = vmatprep.subr.mxu0 0.0
    %900 = vmatpush1.msra.mxu0 0.0
    %901 = vmatprep.subr.mxu0 0.0
    %902 = vmatpush1.msra.mxu0 0.0
    %903 = vmatprep.subr.mxu0 0.0
    %904 = vmatpush1.msra.mxu0 0.0
    %905 = vmatprep.subr.mxu0 0.0
    %906 = vmatpush1.msra.mxu0 0.0
    %907 = vmatprep.subr.mxu0 0.0
    %908 = vmatpush1.msra.mxu0 0.0
    %909 = vmatprep.subr.mxu0 0.0
    %910 = vmatpush1.msra.mxu0 0.0
    %911 = vmatprep.subr.mxu0 0.0
    %912 = vmatpush1.msra.mxu0 0.0
    %913 = vmatprep.subr.mxu0 0.0
    %914 = vmatpush1.msra.mxu0 0.0
    %915 = vmatprep.subr.mxu0 0.0
    %916 = vmatpush1.msra.mxu0 0.0
    %917 = vmatprep.subr.mxu0 0.0
    %918 = vmatpush1.msra.mxu0 0.0
    %919 = vmatprep.subr.mxu0 0.0
    %920 = vmatpush1.msra.mxu0 0.0
    %921 = vmatprep.subr.mxu0 0.0
    %922 = vmatpush1.msra.mxu0 0.0
    %923 = vmatprep.subr.mxu0 0.0
    %924 = vmatpush1.msra.mxu0 0.0
    %925 = vmatprep.subr.mxu0 0.0
    %926 = vmatpush1.msra.mxu0 0.0
    %927 = vmatprep.subr.mxu0 0.0
    %928 = vmatpush1.msra.mxu0 0.0
    %929 = vmatprep.subr.mxu0 0.0
    %930 = vmatpush1.msra.mxu0 0.0
    %931 = vmatprep.subr.mxu0 0.0
    %932 = vmatpush1.msra.mxu0 0.0
    %933 = vmatprep.subr.mxu0 0.0
    %934 = vmatpush1.msra.mxu0 0.0
    %935 = vmatprep.subr.mxu0 0.0
    %936 = vmatpush1.msra.mxu0 0.0
    %937 = vmatprep.mubr.f32.mxu0 0.0
    %938 = vmatmul.mubr.f32.gmra.mrb[0].mxu0 %v871
    %v939 = vpop.f32.mrb[0].mxu0
    %v940 = vadd.f32 %v867, %v939
    %v941 = vpop.f32.mrb[0].mxu0
    %942 = vdwg.mxu0
    %v943 = vtanh.pop %v940
    %v944 = vmul.f32 %v943, 1.442695
    %v945 = vpow.pop %v944
    %947 = vrot.lane.b32.xlu0 %v945, 96
    %v948 = vpop.permute.xlu0 %947
    %v950 = vmul.f32 %v945, %v948
    %951 = vrot.lane.b32.xlu0 %v945, 112
    %v952 = vpop.permute.xlu0 %951
    %v954 = vmul.f32 %v940, %v952
    %956 = vrot.lane.b32.xlu0 %v940, 96
    %v957 = vpop.permute.xlu0 %956
    %v959 = vadd.f32 %v954, %v957
    %960 = vrot.lane.b32.xlu0 %v945, 64
    %v961 = vpop.permute.xlu0 %960
    %v963 = vmul.f32 %v950, %v961
    %964 = vrot.lane.b32.xlu0 %v945, 80
    %v965 = vpop.permute.xlu0 %964
    %v967 = vmul.f32 %v959, %v965
    %968 = vrot.lane.b32.xlu0 %v940, 64
    %v969 = vpop.permute.xlu0 %968
    %v971 = vadd.f32 %v967, %v969
    %v972 = vld [vmem:[%s5] sm:$0x3]
    %v973 = vld [vmem:[%s5 + $0x2] sm:$0x3]
    %v974 = vld [vmem:[%s5 + $0x4] sm:$0x3]
    %v975 = vld [vmem:[%s5 + $0x6] sm:$0x3]
    %vm976 = vcmask 123904
    %v977 = vsel %vm976, %v972, 0.0
    %v978 = vsel %vm976, %v973, 0.0
    %v979 = vadd.f32 %v977, %v978
    %v980 = vsel %vm976, %v974, 0.0
    %v981 = vadd.f32 %v979, %v980
    %v982 = vsel %vm976, %v975, 0.0
    %v983 = vadd.f32 %v981, %v982
    %v984 = vrcp.pop 4.0
    %v985 = vmul.f32 %v983, %v984
    %v986 = vmul.f32 %v972, %v963
    %988 = vrot.lane.b32.xlu0 %v971, 112
    %v989 = vpop.permute.xlu0 %988
    %v991 = vadd.f32 %v986, %v989
    %v992 = vmul.f32 %v985, %v963
    %v993 = vadd.f32 %v992, %v989
    %994 = vst.msk [vmem:[%s59] sm:$0x3] %vm976, %v991
    %v995 = vld [vmem:[%s37] sm:$0xff]
    %v996 = vld [vmem:[%s37 + $0x8] sm:$0xff]
    %v997 = vld [vmem:[%s37 + $0x10] sm:$0xff]
    %v998 = vld [vmem:[%s37 + $0x18] sm:$0xff]
    %v999 = vld [vmem:[#allocation12] sm:$0x3]
    %v1001 = vlaneseq
    %v1002 = vshrl.u32 %v1001, 7
    %v1003 = vsub.s32 0, %v1002
    %v1004 = vrot.slane %v999, %v1003
    %v1005 = vlaneseq
    %v1006 = vshrl.u32 %v1005, 7
    %v1007 = vsub.s32 1, %v1006
    %v1008 = vrot.slane %v999, %v1007
    %v1012 = vsel %vm358, %v993, 0
    %1014 = vmatprep.subr.mxu0 %v996
    %1015 = vmatpush1.msra.mxu0 %v995
    %1016 = vmatprep.subr.mxu0 %v998
    %1017 = vmatpush1.msra.mxu0 %v997
    %1018 = vmatprep.subr.mxu0 0.0
    %1019 = vmatpush1.msra.mxu0 0.0
    %1020 = vmatprep.subr.mxu0 0.0
    %1021 = vmatpush1.msra.mxu0 0.0
    %1022 = vmatprep.subr.mxu0 0.0
    %1023 = vmatpush1.msra.mxu0 0.0
    %1024 = vmatprep.subr.mxu0 0.0
    %1025 = vmatpush1.msra.mxu0 0.0
    %1026 = vmatprep.subr.mxu0 0.0
    %1027 = vmatpush1.msra.mxu0 0.0
    %1028 = vmatprep.subr.mxu0 0.0
    %1029 = vmatpush1.msra.mxu0 0.0
    %1030 = vmatprep.subr.mxu0 0.0
    %1031 = vmatpush1.msra.mxu0 0.0
    %1032 = vmatprep.subr.mxu0 0.0
    %1033 = vmatpush1.msra.mxu0 0.0
    %1034 = vmatprep.subr.mxu0 0.0
    %1035 = vmatpush1.msra.mxu0 0.0
    %1036 = vmatprep.subr.mxu0 0.0
    %1037 = vmatpush1.msra.mxu0 0.0
    %1038 = vmatprep.subr.mxu0 0.0
    %1039 = vmatpush1.msra.mxu0 0.0
    %1040 = vmatprep.subr.mxu0 0.0
    %1041 = vmatpush1.msra.mxu0 0.0
    %1042 = vmatprep.subr.mxu0 0.0
    %1043 = vmatpush1.msra.mxu0 0.0
    %1044 = vmatprep.subr.mxu0 0.0
    %1045 = vmatpush1.msra.mxu0 0.0
    %1046 = vmatprep.subr.mxu0 0.0
    %1047 = vmatpush1.msra.mxu0 0.0
    %1048 = vmatprep.subr.mxu0 0.0
    %1049 = vmatpush1.msra.mxu0 0.0
    %1050 = vmatprep.subr.mxu0 0.0
    %1051 = vmatpush1.msra.mxu0 0.0
    %1052 = vmatprep.subr.mxu0 0.0
    %1053 = vmatpush1.msra.mxu0 0.0
    %1054 = vmatprep.subr.mxu0 0.0
    %1055 = vmatpush1.msra.mxu0 0.0
    %1056 = vmatprep.subr.mxu0 0.0
    %1057 = vmatpush1.msra.mxu0 0.0
    %1058 = vmatprep.subr.mxu0 0.0
    %1059 = vmatpush1.msra.mxu0 0.0
    %1060 = vmatprep.subr.mxu0 0.0
    %1061 = vmatpush1.msra.mxu0 0.0
    %1062 = vmatprep.subr.mxu0 0.0
    %1063 = vmatpush1.msra.mxu0 0.0
    %1064 = vmatprep.subr.mxu0 0.0
    %1065 = vmatpush1.msra.mxu0 0.0
    %1066 = vmatprep.subr.mxu0 0.0
    %1067 = vmatpush1.msra.mxu0 0.0
    %1068 = vmatprep.subr.mxu0 0.0
    %1069 = vmatpush1.msra.mxu0 0.0
    %1070 = vmatprep.subr.mxu0 0.0
    %1071 = vmatpush1.msra.mxu0 0.0
    %1072 = vmatprep.subr.mxu0 0.0
    %1073 = vmatpush1.msra.mxu0 0.0
    %1074 = vmatprep.subr.mxu0 0.0
    %1075 = vmatpush1.msra.mxu0 0.0
    %1076 = vmatprep.subr.mxu0 0.0
    %1077 = vmatpush1.msra.mxu0 0.0
    %1078 = vmatprep.mubr.f32.mxu0 0.0
    %1079 = vmatmul.mubr.f32.gmra.mrb[0].mxu0 %v1012
    %v1080 = vpop.f32.mrb[0].mxu0
    %v1081 = vadd.f32 %v1004, %v1080
    %v1082 = vpop.f32.mrb[0].mxu0
    %v1083 = vadd.f32 %v1008, %v1082
    %1084 = vdwg.mxu0
    %v1085 = vld [vmem:[%s41] sm:$0xf]
    %v1087 = vsel %vm514, %v1085, 0
    %1089 = vmatprep.subr.mxu0 0.0
    %1090 = vmatpush1.msra.mxu0 %v1087
    %1091 = vmatprep.subr.mxu0 0.0
    %1092 = vmatpush1.msra.mxu0 0.0
    %1093 = vmatprep.subr.mxu0 0.0
    %1094 = vmatpush1.msra.mxu0 0.0
    %1095 = vmatprep.subr.mxu0 0.0
    %1096 = vmatpush1.msra.mxu0 0.0
    %1097 = vmatprep.subr.mxu0 0.0
    %1098 = vmatpush1.msra.mxu0 0.0
    %1099 = vmatprep.subr.mxu0 0.0
    %1100 = vmatpush1.msra.mxu0 0.0
    %1101 = vmatprep.subr.mxu0 0.0
    %1102 = vmatpush1.msra.mxu0 0.0
    %1103 = vmatprep.subr.mxu0 0.0
    %1104 = vmatpush1.msra.mxu0 0.0
    %1105 = vmatprep.subr.mxu0 0.0
    %1106 = vmatpush1.msra.mxu0 0.0
    %1107 = vmatprep.subr.mxu0 0.0
    %1108 = vmatpush1.msra.mxu0 0.0
    %1109 = vmatprep.subr.mxu0 0.0
    %1110 = vmatpush1.msra.mxu0 0.0
    %1111 = vmatprep.subr.mxu0 0.0
    %1112 = vmatpush1.msra.mxu0 0.0
    %1113 = vmatprep.subr.mxu0 0.0
    %1114 = vmatpush1.msra.mxu0 0.0
    %1115 = vmatprep.subr.mxu0 0.0
    %1116 = vmatpush1.msra.mxu0 0.0
    %1117 = vmatprep.subr.mxu0 0.0
    %1118 = vmatpush1.msra.mxu0 0.0
    %1119 = vmatprep.subr.mxu0 0.0
    %1120 = vmatpush1.msra.mxu0 0.0
    %1121 = vmatprep.subr.mxu0 0.0
    %1122 = vmatpush1.msra.mxu0 0.0
    %1123 = vmatprep.subr.mxu0 0.0
    %1124 = vmatpush1.msra.mxu0 0.0
    %1125 = vmatprep.subr.mxu0 0.0
    %1126 = vmatpush1.msra.mxu0 0.0
    %1127 = vmatprep.subr.mxu0 0.0
    %1128 = vmatpush1.msra.mxu0 0.0
    %1129 = vmatprep.subr.mxu0 0.0
    %1130 = vmatpush1.msra.mxu0 0.0
    %1131 = vmatprep.subr.mxu0 0.0
    %1132 = vmatpush1.msra.mxu0 0.0
    %1133 = vmatprep.subr.mxu0 0.0
    %1134 = vmatpush1.msra.mxu0 0.0
    %1135 = vmatprep.subr.mxu0 0.0
    %1136 = vmatpush1.msra.mxu0 0.0
    %1137 = vmatprep.subr.mxu0 0.0
    %1138 = vmatpush1.msra.mxu0 0.0
    %1139 = vmatprep.subr.mxu0 0.0
    %1140 = vmatpush1.msra.mxu0 0.0
    %1141 = vmatprep.subr.mxu0 0.0
    %1142 = vmatpush1.msra.mxu0 0.0
    %1143 = vmatprep.subr.mxu0 0.0
    %1144 = vmatpush1.msra.mxu0 0.0
    %1145 = vmatprep.subr.mxu0 0.0
    %1146 = vmatpush1.msra.mxu0 0.0
    %1147 = vmatprep.subr.mxu0 0.0
    %1148 = vmatpush1.msra.mxu0 0.0
    %1149 = vmatprep.subr.mxu0 0.0
    %1150 = vmatpush1.msra.mxu0 0.0
    %1151 = vmatprep.subr.mxu0 0.0
    %1152 = vmatpush1.msra.mxu0 0.0
    %1153 = vmatprep.mubr.f32.mxu0 0.0
    %1154 = vmatmul.mubr.f32.gmra.mrb[0].mxu0 %v512
    %v1155 = vpop.f32.mrb[0].mxu0
    %v1156 = vadd.f32 0.0, %v1155
    %v1157 = vpop.f32.mrb[0].mxu0
    %1158 = vdwg.mxu0
    %v1159 = vld [vmem:[%s43] sm:$0xf]
    %v1160 = vadd.f32 %v1156, %v1081
    %v1161 = vtanh.pop %v1160
    %v1162 = vld [vmem:[%s45] sm:$0xff]
    %v1163 = vld [vmem:[%s45 + $0x8] sm:$0xff]
    %v1164 = vld [vmem:[%s45 + $0x10] sm:$0xff]
    %v1165 = vld [vmem:[%s45 + $0x18] sm:$0xff]
    %v1166 = vld [vmem:[#allocation13] sm:$0x1]
    %v1168 = vlaneseq
    %v1169 = vshrl.u32 %v1168, 7
    %v1170 = vsub.s32 0, %v1169
    %v1171 = vrot.slane %v1166, %v1170
    %v1174 = vsel %vm608, %v1161, 0
    %1176 = vmatprep.subr.mxu0 0.0
    %1177 = vmatpush1.msra.mxu0 %v1162
    %1178 = vmatprep.subr.mxu0 0.0
    %1179 = vmatpush1.msra.mxu0 %v1163
    %1180 = vmatprep.subr.mxu0 0.0
    %1181 = vmatpush1.msra.mxu0 %v1164
    %1182 = vmatprep.subr.mxu0 0.0
    %1183 = vmatpush1.msra.mxu0 %v1165
    %1184 = vmatprep.subr.mxu0 0.0
    %1185 = vmatpush1.msra.mxu0 0.0
    %1186 = vmatprep.subr.mxu0 0.0
    %1187 = vmatpush1.msra.mxu0 0.0
    %1188 = vmatprep.subr.mxu0 0.0
    %1189 = vmatpush1.msra.mxu0 0.0
    %1190 = vmatprep.subr.mxu0 0.0
    %1191 = vmatpush1.msra.mxu0 0.0
    %1192 = vmatprep.subr.mxu0 0.0
    %1193 = vmatpush1.msra.mxu0 0.0
    %1194 = vmatprep.subr.mxu0 0.0
    %1195 = vmatpush1.msra.mxu0 0.0
    %1196 = vmatprep.subr.mxu0 0.0
    %1197 = vmatpush1.msra.mxu0 0.0
    %1198 = vmatprep.subr.mxu0 0.0
    %1199 = vmatpush1.msra.mxu0 0.0
    %1200 = vmatprep.subr.mxu0 0.0
    %1201 = vmatpush1.msra.mxu0 0.0
    %1202 = vmatprep.subr.mxu0 0.0
    %1203 = vmatpush1.msra.mxu0 0.0
    %1204 = vmatprep.subr.mxu0 0.0
    %1205 = vmatpush1.msra.mxu0 0.0
    %1206 = vmatprep.subr.mxu0 0.0
    %1207 = vmatpush1.msra.mxu0 0.0
    %1208 = vmatprep.subr.mxu0 0.0
    %1209 = vmatpush1.msra.mxu0 0.0
    %1210 = vmatprep.subr.mxu0 0.0
    %1211 = vmatpush1.msra.mxu0 0.0
    %1212 = vmatprep.subr.mxu0 0.0
    %1213 = vmatpush1.msra.mxu0 0.0
    %1214 = vmatprep.subr.mxu0 0.0
    %1215 = vmatpush1.msra.mxu0 0.0
    %1216 = vmatprep.subr.mxu0 0.0
    %1217 = vmatpush1.msra.mxu0 0.0
    %1218 = vmatprep.subr.mxu0 0.0
    %1219 = vmatpush1.msra.mxu0 0.0
    %1220 = vmatprep.subr.mxu0 0.0
    %1221 = vmatpush1.msra.mxu0 0.0
    %1222 = vmatprep.subr.mxu0 0.0
    %1223 = vmatpush1.msra.mxu0 0.0
    %1224 = vmatprep.subr.mxu0 0.0
    %1225 = vmatpush1.msra.mxu0 0.0
    %1226 = vmatprep.subr.mxu0 0.0
    %1227 = vmatpush1.msra.mxu0 0.0
    %1228 = vmatprep.subr.mxu0 0.0
    %1229 = vmatpush1.msra.mxu0 0.0
    %1230 = vmatprep.subr.mxu0 0.0
    %1231 = vmatpush1.msra.mxu0 0.0
    %1232 = vmatprep.subr.mxu0 0.0
    %1233 = vmatpush1.msra.mxu0 0.0
    %1234 = vmatprep.subr.mxu0 0.0
    %1235 = vmatpush1.msra.mxu0 0.0
    %1236 = vmatprep.subr.mxu0 0.0
    %1237 = vmatpush1.msra.mxu0 0.0
    %1238 = vmatprep.subr.mxu0 0.0
    %1239 = vmatpush1.msra.mxu0 0.0
    %1240 = vmatprep.mubr.f32.mxu0 0.0
    %1241 = vmatmul.mubr.f32.gmra.mrb[0].mxu0 %v1174
    %v1242 = vpop.f32.mrb[0].mxu0
    %v1243 = vadd.f32 %v1171, %v1242
    %v1244 = vpop.f32.mrb[0].mxu0
    %1245 = vdwg.mxu0
    %v1246 = vtanh.pop %v1243
    %v1247 = vld [vmem:[#allocation15] sm:$0xff]
    %v1248 = vld [vmem:[#allocation15 + $0x8] sm:$0xff]
    %v1249 = vld [vmem:[#allocation15 + $0x10] sm:$0xff]
    %v1250 = vld [vmem:[#allocation15 + $0x18] sm:$0xff]
    %v1252 = vsel %vm608, %v1246, 0
    %1254 = vmatprep.subr.mxu0 0.0
    %1255 = vmatpush1.msra.mxu0 %v1247
    %1256 = vmatprep.subr.mxu0 0.0
    %1257 = vmatpush1.msra.mxu0 %v1248
    %1258 = vmatprep.subr.mxu0 0.0
    %1259 = vmatpush1.msra.mxu0 %v1249
    %1260 = vmatprep.subr.mxu0 0.0
    %1261 = vmatpush1.msra.mxu0 %v1250
    %1262 = vmatprep.subr.mxu0 0.0
    %1263 = vmatpush1.msra.mxu0 0.0
    %1264 = vmatprep.subr.mxu0 0.0
    %1265 = vmatpush1.msra.mxu0 0.0
    %1266 = vmatprep.subr.mxu0 0.0
    %1267 = vmatpush1.msra.mxu0 0.0
    %1268 = vmatprep.subr.mxu0 0.0
    %1269 = vmatpush1.msra.mxu0 0.0
    %1270 = vmatprep.subr.mxu0 0.0
    %1271 = vmatpush1.msra.mxu0 0.0
    %1272 = vmatprep.subr.mxu0 0.0
    %1273 = vmatpush1.msra.mxu0 0.0
    %1274 = vmatprep.subr.mxu0 0.0
    %1275 = vmatpush1.msra.mxu0 0.0
    %1276 = vmatprep.subr.mxu0 0.0
    %1277 = vmatpush1.msra.mxu0 0.0
    %1278 = vmatprep.subr.mxu0 0.0
    %1279 = vmatpush1.msra.mxu0 0.0
    %1280 = vmatprep.subr.mxu0 0.0
    %1281 = vmatpush1.msra.mxu0 0.0
    %1282 = vmatprep.subr.mxu0 0.0
    %1283 = vmatpush1.msra.mxu0 0.0
    %1284 = vmatprep.subr.mxu0 0.0
    %1285 = vmatpush1.msra.mxu0 0.0
    %1286 = vmatprep.subr.mxu0 0.0
    %1287 = vmatpush1.msra.mxu0 0.0
    %1288 = vmatprep.subr.mxu0 0.0
    %1289 = vmatpush1.msra.mxu0 0.0
    %1290 = vmatprep.subr.mxu0 0.0
    %1291 = vmatpush1.msra.mxu0 0.0
    %1292 = vmatprep.subr.mxu0 0.0
    %1293 = vmatpush1.msra.mxu0 0.0
    %1294 = vmatprep.subr.mxu0 0.0
    %1295 = vmatpush1.msra.mxu0 0.0
    %1296 = vmatprep.subr.mxu0 0.0
    %1297 = vmatpush1.msra.mxu0 0.0
    %1298 = vmatprep.subr.mxu0 0.0
    %1299 = vmatpush1.msra.mxu0 0.0
    %1300 = vmatprep.subr.mxu0 0.0
    %1301 = vmatpush1.msra.mxu0 0.0
    %1302 = vmatprep.subr.mxu0 0.0
    %1303 = vmatpush1.msra.mxu0 0.0
    %1304 = vmatprep.subr.mxu0 0.0
    %1305 = vmatpush1.msra.mxu0 0.0
    %1306 = vmatprep.subr.mxu0 0.0
    %1307 = vmatpush1.msra.mxu0 0.0
    %1308 = vmatprep.subr.mxu0 0.0
    %1309 = vmatpush1.msra.mxu0 0.0
    %1310 = vmatprep.subr.mxu0 0.0
    %1311 = vmatpush1.msra.mxu0 0.0
    %1312 = vmatprep.subr.mxu0 0.0
    %1313 = vmatpush1.msra.mxu0 0.0
    %1314 = vmatprep.subr.mxu0 0.0
    %1315 = vmatpush1.msra.mxu0 0.0
    %1316 = vmatprep.subr.mxu0 0.0
    %1317 = vmatpush1.msra.mxu0 0.0
    %1318 = vmatprep.mubr.f32.mxu0 0.0
    %1319 = vmatmul.mubr.f32.gmra.mrb[0].mxu0 %v1252
    %v1320 = vpop.f32.mrb[0].mxu0
    %v1321 = vadd.f32 0.0, %v1320
    %v1322 = vpop.f32.mrb[0].mxu0
    %1323 = vdwg.mxu0
    %v1324 = vadd.f32 %v1156, %v1321
    %v1325 = vld [vmem:[#allocation16] sm:$0x1]
    %v1327 = vlaneseq
    %v1328 = vshrl.u32 %v1327, 7
    %v1329 = vsub.s32 0, %v1328
    %v1330 = vrot.slane %v1325, %v1329
    %v1332 = vadd.f32 %v1324, %v1330
    %v1333 = vld [vmem:[%s53] sm:$0xff]
    %v1334 = vld [vmem:[%s53 + $0x8] sm:$0xff]
    %v1335 = vld [vmem:[%s53 + $0x10] sm:$0xff]
    %v1336 = vld [vmem:[%s53 + $0x18] sm:$0xff]
    %1337 = vmatprep.subr.mxu0 0.0
    %1338 = vmatpush1.msra.mxu0 %v1333
    %1339 = vmatprep.subr.mxu0 0.0
    %1340 = vmatpush1.msra.mxu0 %v1334
    %1341 = vmatprep.subr.mxu0 0.0
    %1342 = vmatpush1.msra.mxu0 %v1335
    %1343 = vmatprep.subr.mxu0 0.0
    %1344 = vmatpush1.msra.mxu0 %v1336
    %1345 = vmatprep.subr.mxu0 0.0
    %1346 = vmatpush1.msra.mxu0 0.0
    %1347 = vmatprep.subr.mxu0 0.0
    %1348 = vmatpush1.msra.mxu0 0.0
    %1349 = vmatprep.subr.mxu0 0.0
    %1350 = vmatpush1.msra.mxu0 0.0
    %1351 = vmatprep.subr.mxu0 0.0
    %1352 = vmatpush1.msra.mxu0 0.0
    %1353 = vmatprep.subr.mxu0 0.0
    %1354 = vmatpush1.msra.mxu0 0.0
    %1355 = vmatprep.subr.mxu0 0.0
    %1356 = vmatpush1.msra.mxu0 0.0
    %1357 = vmatprep.subr.mxu0 0.0
    %1358 = vmatpush1.msra.mxu0 0.0
    %1359 = vmatprep.subr.mxu0 0.0
    %1360 = vmatpush1.msra.mxu0 0.0
    %1361 = vmatprep.subr.mxu0 0.0
    %1362 = vmatpush1.msra.mxu0 0.0
    %1363 = vmatprep.subr.mxu0 0.0
    %1364 = vmatpush1.msra.mxu0 0.0
    %1365 = vmatprep.subr.mxu0 0.0
    %1366 = vmatpush1.msra.mxu0 0.0
    %1367 = vmatprep.subr.mxu0 0.0
    %1368 = vmatpush1.msra.mxu0 0.0
    %1369 = vmatprep.subr.mxu0 0.0
    %1370 = vmatpush1.msra.mxu0 0.0
    %1371 = vmatprep.subr.mxu0 0.0
    %1372 = vmatpush1.msra.mxu0 0.0
    %1373 = vmatprep.subr.mxu0 0.0
    %1374 = vmatpush1.msra.mxu0 0.0
    %1375 = vmatprep.subr.mxu0 0.0
    %1376 = vmatpush1.msra.mxu0 0.0
    %1377 = vmatprep.subr.mxu0 0.0
    %1378 = vmatpush1.msra.mxu0 0.0
    %1379 = vmatprep.subr.mxu0 0.0
    %1380 = vmatpush1.msra.mxu0 0.0
    %1381 = vmatprep.subr.mxu0 0.0
    %1382 = vmatpush1.msra.mxu0 0.0
    %1383 = vmatprep.subr.mxu0 0.0
    %1384 = vmatpush1.msra.mxu0 0.0
    %1385 = vmatprep.subr.mxu0 0.0
    %1386 = vmatpush1.msra.mxu0 0.0
    %1387 = vmatprep.subr.mxu0 0.0
    %1388 = vmatpush1.msra.mxu0 0.0
    %1389 = vmatprep.subr.mxu0 0.0
    %1390 = vmatpush1.msra.mxu0 0.0
    %1391 = vmatprep.subr.mxu0 0.0
    %1392 = vmatpush1.msra.mxu0 0.0
    %1393 = vmatprep.subr.mxu0 0.0
    %1394 = vmatpush1.msra.mxu0 0.0
    %1395 = vmatprep.subr.mxu0 0.0
    %1396 = vmatpush1.msra.mxu0 0.0
    %1397 = vmatprep.subr.mxu0 0.0
    %1398 = vmatpush1.msra.mxu0 0.0
    %1399 = vmatprep.subr.mxu0 0.0
    %1400 = vmatpush1.msra.mxu0 0.0
    %1401 = vmatprep.mubr.f32.mxu0 0.0
    %1402 = vmatmul.mubr.f32.gmra.mrb[0].mxu0 %v1252
    %v1403 = vpop.f32.mrb[0].mxu0
    %v1404 = vadd.f32 0.0, %v1403
    %v1405 = vpop.f32.mrb[0].mxu0
    %1406 = vdwg.mxu0
    %v1408 = vsel %vm514, %v1159, 0
    %1410 = vmatprep.subr.mxu0 0.0
    %1411 = vmatpush1.msra.mxu0 %v1408
    %1412 = vmatprep.subr.mxu0 0.0
    %1413 = vmatpush1.msra.mxu0 0.0
    %1414 = vmatprep.subr.mxu0 0.0
    %1415 = vmatpush1.msra.mxu0 0.0
    %1416 = vmatprep.subr.mxu0 0.0
    %1417 = vmatpush1.msra.mxu0 0.0
    %1418 = vmatprep.subr.mxu0 0.0
    %1419 = vmatpush1.msra.mxu0 0.0
    %1420 = vmatprep.subr.mxu0 0.0
    %1421 = vmatpush1.msra.mxu0 0.0
    %1422 = vmatprep.subr.mxu0 0.0
    %1423 = vmatpush1.msra.mxu0 0.0
    %1424 = vmatprep.subr.mxu0 0.0
    %1425 = vmatpush1.msra.mxu0 0.0
    %1426 = vmatprep.subr.mxu0 0.0
    %1427 = vmatpush1.msra.mxu0 0.0
    %1428 = vmatprep.subr.mxu0 0.0
    %1429 = vmatpush1.msra.mxu0 0.0
    %1430 = vmatprep.subr.mxu0 0.0
    %1431 = vmatpush1.msra.mxu0 0.0
    %1432 = vmatprep.subr.mxu0 0.0
    %1433 = vmatpush1.msra.mxu0 0.0
    %1434 = vmatprep.subr.mxu0 0.0
    %1435 = vmatpush1.msra.mxu0 0.0
    %1436 = vmatprep.subr.mxu0 0.0
    %1437 = vmatpush1.msra.mxu0 0.0
    %1438 = vmatprep.subr.mxu0 0.0
    %1439 = vmatpush1.msra.mxu0 0.0
    %1440 = vmatprep.subr.mxu0 0.0
    %1441 = vmatpush1.msra.mxu0 0.0
    %1442 = vmatprep.subr.mxu0 0.0
    %1443 = vmatpush1.msra.mxu0 0.0
    %1444 = vmatprep.subr.mxu0 0.0
    %1445 = vmatpush1.msra.mxu0 0.0
    %1446 = vmatprep.subr.mxu0 0.0
    %1447 = vmatpush1.msra.mxu0 0.0
    %1448 = vmatprep.subr.mxu0 0.0
    %1449 = vmatpush1.msra.mxu0 0.0
    %1450 = vmatprep.subr.mxu0 0.0
    %1451 = vmatpush1.msra.mxu0 0.0
    %1452 = vmatprep.subr.mxu0 0.0
    %1453 = vmatpush1.msra.mxu0 0.0
    %1454 = vmatprep.subr.mxu0 0.0
    %1455 = vmatpush1.msra.mxu0 0.0
    %1456 = vmatprep.subr.mxu0 0.0
    %1457 = vmatpush1.msra.mxu0 0.0
    %1458 = vmatprep.subr.mxu0 0.0
    %1459 = vmatpush1.msra.mxu0 0.0
    %1460 = vmatprep.subr.mxu0 0.0
    %1461 = vmatpush1.msra.mxu0 0.0
    %1462 = vmatprep.subr.mxu0 0.0
    %1463 = vmatpush1.msra.mxu0 0.0
    %1464 = vmatprep.subr.mxu0 0.0
    %1465 = vmatpush1.msra.mxu0 0.0
    %1466 = vmatprep.subr.mxu0 0.0
    %1467 = vmatpush1.msra.mxu0 0.0
    %1468 = vmatprep.subr.mxu0 0.0
    %1469 = vmatpush1.msra.mxu0 0.0
    %1470 = vmatprep.subr.mxu0 0.0
    %1471 = vmatpush1.msra.mxu0 0.0
    %1472 = vmatprep.subr.mxu0 0.0
    %1473 = vmatpush1.msra.mxu0 0.0
    %1474 = vmatprep.mubr.f32.mxu0 0.0
    %1475 = vmatmul.mubr.f32.gmra.mrb[0].mxu0 %v512
    %v1476 = vpop.f32.mrb[0].mxu0
    %v1477 = vadd.f32 %v1404, %v1476
    %v1478 = vpop.f32.mrb[0].mxu0
    %1479 = vdwg.mxu0
    %v1480 = vld [vmem:[#allocation18] sm:$0x1]
    %v1482 = vlaneseq
    %v1483 = vshrl.u32 %v1482, 7
    %v1484 = vsub.s32 0, %v1483
    %v1485 = vrot.slane %v1480, %v1484
    %v1487 = vadd.f32 %v1477, %v1485
    %v1488 = vld [vmem:[#allocation19] sm:$0x1]
    %v1490 = vlaneseq
    %v1491 = vshrl.u32 %v1490, 7
    %v1492 = vsub.s32 0, %v1491
    %v1493 = vrot.slane %v1488, %v1492
    %v1495 = vadd.f32 %v1487, %v1493
    %1497 = vrot.lane.b32.xlu0 %v1495, 16
    %v1498 = vpop.permute.xlu0 %1497
    %vm1500 = vcmask 148608
    %1501 = vst.msk [vmem:[%s59] sm:$0x3] %vm1500, %v1498
    %1503 = vrot.lane.b32.xlu0 %v1081, 96
    %v1504 = vpop.permute.xlu0 %1503
    %v1506 = vadd.f32 %v1332, %v1504
    %v1507 = vtanh.pop %v1506
    %v1508 = vld [vmem:[%s45] sm:$0xff]
    %v1509 = vld [vmem:[%s45 + $0x8] sm:$0xff]
    %v1510 = vld [vmem:[%s45 + $0x10] sm:$0xff]
    %v1511 = vld [vmem:[%s45 + $0x18] sm:$0xff]
    %v1512 = vld [vmem:[#allocation13] sm:$0x1]
    %v1514 = vlaneseq
    %v1515 = vshrl.u32 %v1514, 7
    %v1516 = vsub.s32 0, %v1515
    %v1517 = vrot.slane %v1512, %v1516
    %v1520 = vsel %vm608, %v1507, 0
    %1522 = vmatprep.subr.mxu0 0.0
    %1523 = vmatpush1.msra.mxu0 %v1508
    %1524 = vmatprep.subr.mxu0 0.0
    %1525 = vmatpush1.msra.mxu0 %v1509
    %1526 = vmatprep.subr.mxu0 0.0
    %1527 = vmatpush1.msra.mxu0 %v1510
    %1528 = vmatprep.subr.mxu0 0.0
    %1529 = vmatpush1.msra.mxu0 %v1511
    %1530 = vmatprep.subr.mxu0 0.0
    %1531 = vmatpush1.msra.mxu0 0.0
    %1532 = vmatprep.subr.mxu0 0.0
    %1533 = vmatpush1.msra.mxu0 0.0
    %1534 = vmatprep.subr.mxu0 0.0
    %1535 = vmatpush1.msra.mxu0 0.0
    %1536 = vmatprep.subr.mxu0 0.0
    %1537 = vmatpush1.msra.mxu0 0.0
    %1538 = vmatprep.subr.mxu0 0.0
    %1539 = vmatpush1.msra.mxu0 0.0
    %1540 = vmatprep.subr.mxu0 0.0
    %1541 = vmatpush1.msra.mxu0 0.0
    %1542 = vmatprep.subr.mxu0 0.0
    %1543 = vmatpush1.msra.mxu0 0.0
    %1544 = vmatprep.subr.mxu0 0.0
    %1545 = vmatpush1.msra.mxu0 0.0
    %1546 = vmatprep.subr.mxu0 0.0
    %1547 = vmatpush1.msra.mxu0 0.0
    %1548 = vmatprep.subr.mxu0 0.0
    %1549 = vmatpush1.msra.mxu0 0.0
    %1550 = vmatprep.subr.mxu0 0.0
    %1551 = vmatpush1.msra.mxu0 0.0
    %1552 = vmatprep.subr.mxu0 0.0
    %1553 = vmatpush1.msra.mxu0 0.0
    %1554 = vmatprep.subr.mxu0 0.0
    %1555 = vmatpush1.msra.mxu0 0.0
    %1556 = vmatprep.subr.mxu0 0.0
    %1557 = vmatpush1.msra.mxu0 0.0
    %1558 = vmatprep.subr.mxu0 0.0
    %1559 = vmatpush1.msra.mxu0 0.0
    %1560 = vmatprep.subr.mxu0 0.0
    %1561 = vmatpush1.msra.mxu0 0.0
    %1562 = vmatprep.subr.mxu0 0.0
    %1563 = vmatpush1.msra.mxu0 0.0
    %1564 = vmatprep.subr.mxu0 0.0
    %1565 = vmatpush1.msra.mxu0 0.0
    %1566 = vmatprep.subr.mxu0 0.0
    %1567 = vmatpush1.msra.mxu0 0.0
    %1568 = vmatprep.subr.mxu0 0.0
    %1569 = vmatpush1.msra.mxu0 0.0
    %1570 = vmatprep.subr.mxu0 0.0
    %1571 = vmatpush1.msra.mxu0 0.0
    %1572 = vmatprep.subr.mxu0 0.0
    %1573 = vmatpush1.msra.mxu0 0.0
    %1574 = vmatprep.subr.mxu0 0.0
    %1575 = vmatpush1.msra.mxu0 0.0
    %1576 = vmatprep.subr.mxu0 0.0
    %1577 = vmatpush1.msra.mxu0 0.0
    %1578 = vmatprep.subr.mxu0 0.0
    %1579 = vmatpush1.msra.mxu0 0.0
    %1580 = vmatprep.subr.mxu0 0.0
    %1581 = vmatpush1.msra.mxu0 0.0
    %1582 = vmatprep.subr.mxu0 0.0
    %1583 = vmatpush1.msra.mxu0 0.0
    %1584 = vmatprep.subr.mxu0 0.0
    %1585 = vmatpush1.msra.mxu0 0.0
    %1586 = vmatprep.mubr.f32.mxu0 0.0
    %1587 = vmatmul.mubr.f32.gmra.mrb[0].mxu0 %v1520
    %v1588 = vpop.f32.mrb[0].mxu0
    %v1589 = vadd.f32 %v1517, %v1588
    %v1590 = vpop.f32.mrb[0].mxu0
    %1591 = vdwg.mxu0
    %v1592 = vtanh.pop %v1589
    %v1593 = vld [vmem:[#allocation15] sm:$0xff]
    %v1594 = vld [vmem:[#allocation15 + $0x8] sm:$0xff]
    %v1595 = vld [vmem:[#allocation15 + $0x10] sm:$0xff]
    %v1596 = vld [vmem:[#allocation15 + $0x18] sm:$0xff]
    %v1598 = vsel %vm608, %v1592, 0
    %1600 = vmatprep.subr.mxu0 0.0
    %1601 = vmatpush1.msra.mxu0 %v1593
    %1602 = vmatprep.subr.mxu0 0.0
    %1603 = vmatpush1.msra.mxu0 %v1594
    %1604 = vmatprep.subr.mxu0 0.0
    %1605 = vmatpush1.msra.mxu0 %v1595
    %1606 = vmatprep.subr.mxu0 0.0
    %1607 = vmatpush1.msra.mxu0 %v1596
    %1608 = vmatprep.subr.mxu0 0.0
    %1609 = vmatpush1.msra.mxu0 0.0
    %1610 = vmatprep.subr.mxu0 0.0
    %1611 = vmatpush1.msra.mxu0 0.0
    %1612 = vmatprep.subr.mxu0 0.0
    %1613 = vmatpush1.msra.mxu0 0.0
    %1614 = vmatprep.subr.mxu0 0.0
    %1615 = vmatpush1.msra.mxu0 0.0
    %1616 = vmatprep.subr.mxu0 0.0
    %1617 = vmatpush1.msra.mxu0 0.0
    %1618 = vmatprep.subr.mxu0 0.0
    %1619 = vmatpush1.msra.mxu0 0.0
    %1620 = vmatprep.subr.mxu0 0.0
    %1621 = vmatpush1.msra.mxu0 0.0
    %1622 = vmatprep.subr.mxu0 0.0
    %1623 = vmatpush1.msra.mxu0 0.0
    %1624 = vmatprep.subr.mxu0 0.0
    %1625 = vmatpush1.msra.mxu0 0.0
    %1626 = vmatprep.subr.mxu0 0.0
    %1627 = vmatpush1.msra.mxu0 0.0
    %1628 = vmatprep.subr.mxu0 0.0
    %1629 = vmatpush1.msra.mxu0 0.0
    %1630 = vmatprep.subr.mxu0 0.0
    %1631 = vmatpush1.msra.mxu0 0.0
    %1632 = vmatprep.subr.mxu0 0.0
    %1633 = vmatpush1.msra.mxu0 0.0
    %1634 = vmatprep.subr.mxu0 0.0
    %1635 = vmatpush1.msra.mxu0 0.0
    %1636 = vmatprep.subr.mxu0 0.0
    %1637 = vmatpush1.msra.mxu0 0.0
    %1638 = vmatprep.subr.mxu0 0.0
    %1639 = vmatpush1.msra.mxu0 0.0
    %1640 = vmatprep.subr.mxu0 0.0
    %1641 = vmatpush1.msra.mxu0 0.0
    %1642 = vmatprep.subr.mxu0 0.0
    %1643 = vmatpush1.msra.mxu0 0.0
    %1644 = vmatprep.subr.mxu0 0.0
    %1645 = vmatpush1.msra.mxu0 0.0
    %1646 = vmatprep.subr.mxu0 0.0
    %1647 = vmatpush1.msra.mxu0 0.0
    %1648 = vmatprep.subr.mxu0 0.0
    %1649 = vmatpush1.msra.mxu0 0.0
    %1650 = vmatprep.subr.mxu0 0.0
    %1651 = vmatpush1.msra.mxu0 0.0
    %1652 = vmatprep.subr.mxu0 0.0
    %1653 = vmatpush1.msra.mxu0 0.0
    %1654 = vmatprep.subr.mxu0 0.0
    %1655 = vmatpush1.msra.mxu0 0.0
    %1656 = vmatprep.subr.mxu0 0.0
    %1657 = vmatpush1.msra.mxu0 0.0
    %1658 = vmatprep.subr.mxu0 0.0
    %1659 = vmatpush1.msra.mxu0 0.0
    %1660 = vmatprep.subr.mxu0 0.0
    %1661 = vmatpush1.msra.mxu0 0.0
    %1662 = vmatprep.subr.mxu0 0.0
    %1663 = vmatpush1.msra.mxu0 0.0
    %1664 = vmatprep.mubr.f32.mxu0 0.0
    %1665 = vmatmul.mubr.f32.gmra.mrb[0].mxu0 %v1598
    %v1666 = vpop.f32.mrb[0].mxu0
    %v1667 = vadd.f32 0.0, %v1666
    %v1668 = vpop.f32.mrb[0].mxu0
    %1669 = vdwg.mxu0
    %v1670 = vadd.f32 %v1332, %v1667
    %v1671 = vld [vmem:[#allocation16] sm:$0x1]
    %v1673 = vlaneseq
    %v1674 = vshrl.u32 %v1673, 7
    %v1675 = vsub.s32 0, %v1674
    %v1676 = vrot.slane %v1671, %v1675
    %v1678 = vadd.f32 %v1670, %v1676
    %v1679 = vld [vmem:[%s53] sm:$0xff]
    %v1680 = vld [vmem:[%s53 + $0x8] sm:$0xff]
    %v1681 = vld [vmem:[%s53 + $0x10] sm:$0xff]
    %v1682 = vld [vmem:[%s53 + $0x18] sm:$0xff]
    %1683 = vmatprep.subr.mxu0 0.0
    %1684 = vmatpush1.msra.mxu0 %v1679
    %1685 = vmatprep.subr.mxu0 0.0
    %1686 = vmatpush1.msra.mxu0 %v1680
    %1687 = vmatprep.subr.mxu0 0.0
    %1688 = vmatpush1.msra.mxu0 %v1681
    %1689 = vmatprep.subr.mxu0 0.0
    %1690 = vmatpush1.msra.mxu0 %v1682
    %1691 = vmatprep.subr.mxu0 0.0
    %1692 = vmatpush1.msra.mxu0 0.0
    %1693 = vmatprep.subr.mxu0 0.0
    %1694 = vmatpush1.msra.mxu0 0.0
    %1695 = vmatprep.subr.mxu0 0.0
    %1696 = vmatpush1.msra.mxu0 0.0
    %1697 = vmatprep.subr.mxu0 0.0
    %1698 = vmatpush1.msra.mxu0 0.0
    %1699 = vmatprep.subr.mxu0 0.0
    %1700 = vmatpush1.msra.mxu0 0.0
    %1701 = vmatprep.subr.mxu0 0.0
    %1702 = vmatpush1.msra.mxu0 0.0
    %1703 = vmatprep.subr.mxu0 0.0
    %1704 = vmatpush1.msra.mxu0 0.0
    %1705 = vmatprep.subr.mxu0 0.0
    %1706 = vmatpush1.msra.mxu0 0.0
    %1707 = vmatprep.subr.mxu0 0.0
    %1708 = vmatpush1.msra.mxu0 0.0
    %1709 = vmatprep.subr.mxu0 0.0
    %1710 = vmatpush1.msra.mxu0 0.0
    %1711 = vmatprep.subr.mxu0 0.0
    %1712 = vmatpush1.msra.mxu0 0.0
    %1713 = vmatprep.subr.mxu0 0.0
    %1714 = vmatpush1.msra.mxu0 0.0
    %1715 = vmatprep.subr.mxu0 0.0
    %1716 = vmatpush1.msra.mxu0 0.0
    %1717 = vmatprep.subr.mxu0 0.0
    %1718 = vmatpush1.msra.mxu0 0.0
    %1719 = vmatprep.subr.mxu0 0.0
    %1720 = vmatpush1.msra.mxu0 0.0
    %1721 = vmatprep.subr.mxu0 0.0
    %1722 = vmatpush1.msra.mxu0 0.0
    %1723 = vmatprep.subr.mxu0 0.0
    %1724 = vmatpush1.msra.mxu0 0.0
    %1725 = vmatprep.subr.mxu0 0.0
    %1726 = vmatpush1.msra.mxu0 0.0
    %1727 = vmatprep.subr.mxu0 0.0
    %1728 = vmatpush1.msra.mxu0 0.0
    %1729 = vmatprep.subr.mxu0 0.0
    %1730 = vmatpush1.msra.mxu0 0.0
    %1731 = vmatprep.subr.mxu0 0.0
    %1732 = vmatpush1.msra.mxu0 0.0
    %1733 = vmatprep.subr.mxu0 0.0
    %1734 = vmatpush1.msra.mxu0 0.0
    %1735 = vmatprep.subr.mxu0 0.0
    %1736 = vmatpush1.msra.mxu0 0.0
    %1737 = vmatprep.subr.mxu0 0.0
    %1738 = vmatpush1.msra.mxu0 0.0
    %1739 = vmatprep.subr.mxu0 0.0
    %1740 = vmatpush1.msra.mxu0 0.0
    %1741 = vmatprep.subr.mxu0 0.0
    %1742 = vmatpush1.msra.mxu0 0.0
    %1743 = vmatprep.subr.mxu0 0.0
    %1744 = vmatpush1.msra.mxu0 0.0
    %1745 = vmatprep.subr.mxu0 0.0
    %1746 = vmatpush1.msra.mxu0 0.0
    %1747 = vmatprep.mubr.f32.mxu0 0.0
    %1748 = vmatmul.mubr.f32.gmra.mrb[0].mxu0 %v1598
    %v1749 = vpop.f32.mrb[0].mxu0
    %v1750 = vadd.f32 0.0, %v1749
    %v1751 = vpop.f32.mrb[0].mxu0
    %1752 = vdwg.mxu0
    %v1753 = vadd.f32 %v1487, %v1750
    %v1754 = vld [vmem:[#allocation18] sm:$0x1]
    %v1756 = vlaneseq
    %v1757 = vshrl.u32 %v1756, 7
    %v1758 = vsub.s32 0, %v1757
    %v1759 = vrot.slane %v1754, %v1758
    %v1761 = vadd.f32 %v1753, %v1759
    %v1762 = vld [vmem:[#allocation19] sm:$0x1]
    %v1764 = vlaneseq
    %v1765 = vshrl.u32 %v1764, 7
    %v1766 = vsub.s32 0, %v1765
    %v1767 = vrot.slane %v1762, %v1766
    %v1769 = vadd.f32 %v1761, %v1767
    %1771 = vrot.lane.b32.xlu0 %v1769, 19
    %v1772 = vpop.permute.xlu0 %1771
    %vm1774 = vcmask 173208
    %1775 = vst.msk [vmem:[%s59] sm:$0x3] %vm1774, %v1772
    %1776 = vrot.lane.b32.xlu0 %v1081, 64
    %v1777 = vpop.permute.xlu0 %1776
    %v1779 = vadd.f32 %v1678, %v1777
    %v1780 = vtanh.pop %v1779
    %v1781 = vld [vmem:[%s45] sm:$0xff]
    %v1782 = vld [vmem:[%s45 + $0x8] sm:$0xff]
    %v1783 = vld [vmem:[%s45 + $0x10] sm:$0xff]
    %v1784 = vld [vmem:[%s45 + $0x18] sm:$0xff]
    %v1785 = vld [vmem:[#allocation13] sm:$0x1]
    %v1787 = vlaneseq
    %v1788 = vshrl.u32 %v1787, 7
    %v1789 = vsub.s32 0, %v1788
    %v1790 = vrot.slane %v1785, %v1789
    %v1793 = vsel %vm608, %v1780, 0
    %1795 = vmatprep.subr.mxu0 0.0
    %1796 = vmatpush1.msra.mxu0 %v1781
    %1797 = vmatprep.subr.mxu0 0.0
    %1798 = vmatpush1.msra.mxu0 %v1782
    %1799 = vmatprep.subr.mxu0 0.0
    %1800 = vmatpush1.msra.mxu0 %v1783
    %1801 = vmatprep.subr.mxu0 0.0
    %1802 = vmatpush1.msra.mxu0 %v1784
    %1803 = vmatprep.subr.mxu0 0.0
    %1804 = vmatpush1.msra.mxu0 0.0
    %1805 = vmatprep.subr.mxu0 0.0
    %1806 = vmatpush1.msra.mxu0 0.0
    %1807 = vmatprep.subr.mxu0 0.0
    %1808 = vmatpush1.msra.mxu0 0.0
    %1809 = vmatprep.subr.mxu0 0.0
    %1810 = vmatpush1.msra.mxu0 0.0
    %1811 = vmatprep.subr.mxu0 0.0
    %1812 = vmatpush1.msra.mxu0 0.0
    %1813 = vmatprep.subr.mxu0 0.0
    %1814 = vmatpush1.msra.mxu0 0.0
    %1815 = vmatprep.subr.mxu0 0.0
    %1816 = vmatpush1.msra.mxu0 0.0
    %1817 = vmatprep.subr.mxu0 0.0
    %1818 = vmatpush1.msra.mxu0 0.0
    %1819 = vmatprep.subr.mxu0 0.0
    %1820 = vmatpush1.msra.mxu0 0.0
    %1821 = vmatprep.subr.mxu0 0.0
    %1822 = vmatpush1.msra.mxu0 0.0
    %1823 = vmatprep.subr.mxu0 0.0
    %1824 = vmatpush1.msra.mxu0 0.0
    %1825 = vmatprep.subr.mxu0 0.0
    %1826 = vmatpush1.msra.mxu0 0.0
    %1827 = vmatprep.subr.mxu0 0.0
    %1828 = vmatpush1.msra.mxu0 0.0
    %1829 = vmatprep.subr.mxu0 0.0
    %1830 = vmatpush1.msra.mxu0 0.0
    %1831 = vmatprep.subr.mxu0 0.0
    %1832 = vmatpush1.msra.mxu0 0.0
    %1833 = vmatprep.subr.mxu0 0.0
    %1834 = vmatpush1.msra.mxu0 0.0
    %1835 = vmatprep.subr.mxu0 0.0
    %1836 = vmatpush1.msra.mxu0 0.0
    %1837 = vmatprep.subr.mxu0 0.0
    %1838 = vmatpush1.msra.mxu0 0.0
    %1839 = vmatprep.subr.mxu0 0.0
    %1840 = vmatpush1.msra.mxu0 0.0
    %1841 = vmatprep.subr.mxu0 0.0
    %1842 = vmatpush1.msra.mxu0 0.0
    %1843 = vmatprep.subr.mxu0 0.0
    %1844 = vmatpush1.msra.mxu0 0.0
    %1845 = vmatprep.subr.mxu0 0.0
    %1846 = vmatpush1.msra.mxu0 0.0
    %1847 = vmatprep.subr.mxu0 0.0
    %1848 = vmatpush1.msra.mxu0 0.0
    %1849 = vmatprep.subr.mxu0 0.0
    %1850 = vmatpush1.msra.mxu0 0.0
    %1851 = vmatprep.subr.mxu0 0.0
    %1852 = vmatpush1.msra.mxu0 0.0
    %1853 = vmatprep.subr.mxu0 0.0
    %1854 = vmatpush1.msra.mxu0 0.0
    %1855 = vmatprep.subr.mxu0 0.0
    %1856 = vmatpush1.msra.mxu0 0.0
    %1857 = vmatprep.subr.mxu0 0.0
    %1858 = vmatpush1.msra.mxu0 0.0
    %1859 = vmatprep.mubr.f32.mxu0 0.0
    %1860 = vmatmul.mubr.f32.gmra.mrb[0].mxu0 %v1793
    %v1861 = vpop.f32.mrb[0].mxu0
    %v1862 = vadd.f32 %v1790, %v1861
    %v1863 = vpop.f32.mrb[0].mxu0
    %1864 = vdwg.mxu0
    %v1865 = vtanh.pop %v1862
    %v1866 = vld [vmem:[#allocation15] sm:$0xff]
    %v1867 = vld [vmem:[#allocation15 + $0x8] sm:$0xff]
    %v1868 = vld [vmem:[#allocation15 + $0x10] sm:$0xff]
    %v1869 = vld [vmem:[#allocation15 + $0x18] sm:$0xff]
    %v1871 = vsel %vm608, %v1865, 0
    %1873 = vmatprep.subr.mxu0 0.0
    %1874 = vmatpush1.msra.mxu0 %v1866
    %1875 = vmatprep.subr.mxu0 0.0
    %1876 = vmatpush1.msra.mxu0 %v1867
    %1877 = vmatprep.subr.mxu0 0.0
    %1878 = vmatpush1.msra.mxu0 %v1868
    %1879 = vmatprep.subr.mxu0 0.0
    %1880 = vmatpush1.msra.mxu0 %v1869
    %1881 = vmatprep.subr.mxu0 0.0
    %1882 = vmatpush1.msra.mxu0 0.0
    %1883 = vmatprep.subr.mxu0 0.0
    %1884 = vmatpush1.msra.mxu0 0.0
    %1885 = vmatprep.subr.mxu0 0.0
    %1886 = vmatpush1.msra.mxu0 0.0
    %1887 = vmatprep.subr.mxu0 0.0
    %1888 = vmatpush1.msra.mxu0 0.0
    %1889 = vmatprep.subr.mxu0 0.0
    %1890 = vmatpush1.msra.mxu0 0.0
    %1891 = vmatprep.subr.mxu0 0.0
    %1892 = vmatpush1.msra.mxu0 0.0
    %1893 = vmatprep.subr.mxu0 0.0
    %1894 = vmatpush1.msra.mxu0 0.0
    %1895 = vmatprep.subr.mxu0 0.0
    %1896 = vmatpush1.msra.mxu0 0.0
    %1897 = vmatprep.subr.mxu0 0.0
    %1898 = vmatpush1.msra.mxu0 0.0
    %1899 = vmatprep.subr.mxu0 0.0
    %1900 = vmatpush1.msra.mxu0 0.0
    %1901 = vmatprep.subr.mxu0 0.0
    %1902 = vmatpush1.msra.mxu0 0.0
    %1903 = vmatprep.subr.mxu0 0.0
    %1904 = vmatpush1.msra.mxu0 0.0
    %1905 = vmatprep.subr.mxu0 0.0
    %1906 = vmatpush1.msra.mxu0 0.0
    %1907 = vmatprep.subr.mxu0 0.0
    %1908 = vmatpush1.msra.mxu0 0.0
    %1909 = vmatprep.subr.mxu0 0.0
    %1910 = vmatpush1.msra.mxu0 0.0
    %1911 = vmatprep.subr.mxu0 0.0
    %1912 = vmatpush1.msra.mxu0 0.0
    %1913 = vmatprep.subr.mxu0 0.0
    %1914 = vmatpush1.msra.mxu0 0.0
    %1915 = vmatprep.subr.mxu0 0.0
    %1916 = vmatpush1.msra.mxu0 0.0
    %1917 = vmatprep.subr.mxu0 0.0
    %1918 = vmatpush1.msra.mxu0 0.0
    %1919 = vmatprep.subr.mxu0 0.0
    %1920 = vmatpush1.msra.mxu0 0.0
    %1921 = vmatprep.subr.mxu0 0.0
    %1922 = vmatpush1.msra.mxu0 0.0
    %1923 = vmatprep.subr.mxu0 0.0
    %1924 = vmatpush1.msra.mxu0 0.0
    %1925 = vmatprep.subr.mxu0 0.0
    %1926 = vmatpush1.msra.mxu0 0.0
    %1927 = vmatprep.subr.mxu0 0.0
    %1928 = vmatpush1.msra.mxu0 0.0
    %1929 = vmatprep.subr.mxu0 0.0
    %1930 = vmatpush1.msra.mxu0 0.0
    %1931 = vmatprep.subr.mxu0 0.0
    %1932 = vmatpush1.msra.mxu0 0.0
    %1933 = vmatprep.subr.mxu0 0.0
    %1934 = vmatpush1.msra.mxu0 0.0
    %1935 = vmatprep.subr.mxu0 0.0
    %1936 = vmatpush1.msra.mxu0 0.0
    %1937 = vmatprep.mubr.f32.mxu0 0.0
    %1938 = vmatmul.mubr.f32.gmra.mrb[0].mxu0 %v1871
    %v1939 = vpop.f32.mrb[0].mxu0
    %v1940 = vadd.f32 0.0, %v1939
    %v1941 = vpop.f32.mrb[0].mxu0
    %1942 = vdwg.mxu0
    %v1943 = vadd.f32 %v1678, %v1940
    %v1944 = vld [vmem:[#allocation16] sm:$0x1]
    %v1946 = vlaneseq
    %v1947 = vshrl.u32 %v1946, 7
    %v1948 = vsub.s32 0, %v1947
    %v1949 = vrot.slane %v1944, %v1948
    %v1951 = vadd.f32 %v1943, %v1949
    %v1952 = vld [vmem:[%s53] sm:$0xff]
    %v1953 = vld [vmem:[%s53 + $0x8] sm:$0xff]
    %v1954 = vld [vmem:[%s53 + $0x10] sm:$0xff]
    %v1955 = vld [vmem:[%s53 + $0x18] sm:$0xff]
    %1956 = vmatprep.subr.mxu0 0.0
    %1957 = vmatpush1.msra.mxu0 %v1952
    %1958 = vmatprep.subr.mxu0 0.0
    %1959 = vmatpush1.msra.mxu0 %v1953
    %1960 = vmatprep.subr.mxu0 0.0
    %1961 = vmatpush1.msra.mxu0 %v1954
    %1962 = vmatprep.subr.mxu0 0.0
    %1963 = vmatpush1.msra.mxu0 %v1955
    %1964 = vmatprep.subr.mxu0 0.0
    %1965 = vmatpush1.msra.mxu0 0.0
    %1966 = vmatprep.subr.mxu0 0.0
    %1967 = vmatpush1.msra.mxu0 0.0
    %1968 = vmatprep.subr.mxu0 0.0
    %1969 = vmatpush1.msra.mxu0 0.0
    %1970 = vmatprep.subr.mxu0 0.0
    %1971 = vmatpush1.msra.mxu0 0.0
    %1972 = vmatprep.subr.mxu0 0.0
    %1973 = vmatpush1.msra.mxu0 0.0
    %1974 = vmatprep.subr.mxu0 0.0
    %1975 = vmatpush1.msra.mxu0 0.0
    %1976 = vmatprep.subr.mxu0 0.0
    %1977 = vmatpush1.msra.mxu0 0.0
    %1978 = vmatprep.subr.mxu0 0.0
    %1979 = vmatpush1.msra.mxu0 0.0
    %1980 = vmatprep.subr.mxu0 0.0
    %1981 = vmatpush1.msra.mxu0 0.0
    %1982 = vmatprep.subr.mxu0 0.0
    %1983 = vmatpush1.msra.mxu0 0.0
    %1984 = vmatprep.subr.mxu0 0.0
    %1985 = vmatpush1.msra.mxu0 0.0
    %1986 = vmatprep.subr.mxu0 0.0
    %1987 = vmatpush1.msra.mxu0 0.0
    %1988 = vmatprep.subr.mxu0 0.0
    %1989 = vmatpush1.msra.mxu0 0.0
    %1990 = vmatprep.subr.mxu0 0.0
    %1991 = vmatpush1.msra.mxu0 0.0
    %1992 = vmatprep.subr.mxu0 0.0
    %1993 = vmatpush1.msra.mxu0 0.0
    %1994 = vmatprep.subr.mxu0 0.0
    %1995 = vmatpush1.msra.mxu0 0.0
    %1996 = vmatprep.subr.mxu0 0.0
    %1997 = vmatpush1.msra.mxu0 0.0
    %1998 = vmatprep.subr.mxu0 0.0
    %1999 = vmatpush1.msra.mxu0 0.0
    %2000 = vmatprep.subr.mxu0 0.0
    %2001 = vmatpush1.msra.mxu0 0.0
    %2002 = vmatprep.subr.mxu0 0.0
    %2003 = vmatpush1.msra.mxu0 0.0
    %2004 = vmatprep.subr.mxu0 0.0
    %2005 = vmatpush1.msra.mxu0 0.0
    %2006 = vmatprep.subr.mxu0 0.0
    %2007 = vmatpush1.msra.mxu0 0.0
    %2008 = vmatprep.subr.mxu0 0.0
    %2009 = vmatpush1.msra.mxu0 0.0
    %2010 = vmatprep.subr.mxu0 0.0
    %2011 = vmatpush1.msra.mxu0 0.0
    %2012 = vmatprep.subr.mxu0 0.0
    %2013 = vmatpush1.msra.mxu0 0.0
    %2014 = vmatprep.subr.mxu0 0.0
    %2015 = vmatpush1.msra.mxu0 0.0
    %2016 = vmatprep.subr.mxu0 0.0
    %2017 = vmatpush1.msra.mxu0 0.0
    %2018 = vmatprep.subr.mxu0 0.0
    %2019 = vmatpush1.msra.mxu0 0.0
    %2020 = vmatprep.mubr.f32.mxu0 0.0
    %2021 = vmatmul.mubr.f32.gmra.mrb[0].mxu0 %v1871
    %v2022 = vpop.f32.mrb[0].mxu0
    %v2023 = vadd.f32 0.0, %v2022
    %v2024 = vpop.f32.mrb[0].mxu0
    %2025 = vdwg.mxu0
    %v2026 = vadd.f32 %v1761, %v2023
    %v2027 = vld [vmem:[#allocation18] sm:$0x1]
    %v2029 = vlaneseq
    %v2030 = vshrl.u32 %v2029, 7
    %v2031 = vsub.s32 0, %v2030
    %v2032 = vrot.slane %v2027, %v2031
    %v2034 = vadd.f32 %v2026, %v2032
    %v2035 = vld [vmem:[#allocation19] sm:$0x1]
    %v2037 = vlaneseq
    %v2038 = vshrl.u32 %v2037, 7
    %v2039 = vsub.s32 0, %v2038
    %v2040 = vrot.slane %v2035, %v2039
    %v2042 = vadd.f32 %v2034, %v2040
    %2044 = vrot.lane.b32.xlu0 %v2042, 22
    %v2045 = vpop.permute.xlu0 %2044
    %vm2047 = vcmask 197808
    %2048 = vst.msk [vmem:[%s59] sm:$0x3] %vm2047, %v2045
    %2049 = vrot.lane.b32.xlu0 %v1081, 32
    %v2050 = vpop.permute.xlu0 %2049
    %v2052 = vadd.f32 %v1951, %v2050
    %v2053 = vtanh.pop %v2052
    %v2054 = vld [vmem:[%s45] sm:$0xff]
    %v2055 = vld [vmem:[%s45 + $0x8] sm:$0xff]
    %v2056 = vld [vmem:[%s45 + $0x10] sm:$0xff]
    %v2057 = vld [vmem:[%s45 + $0x18] sm:$0xff]
    %v2058 = vld [vmem:[#allocation13] sm:$0x1]
    %v2060 = vlaneseq
    %v2061 = vshrl.u32 %v2060, 7
    %v2062 = vsub.s32 0, %v2061
    %v2063 = vrot.slane %v2058, %v2062
    %v2066 = vsel %vm608, %v2053, 0
    %2068 = vmatprep.subr.mxu0 0.0
    %2069 = vmatpush1.msra.mxu0 %v2054
    %2070 = vmatprep.subr.mxu0 0.0
    %2071 = vmatpush1.msra.mxu0 %v2055
    %2072 = vmatprep.subr.mxu0 0.0
    %2073 = vmatpush1.msra.mxu0 %v2056
    %2074 = vmatprep.subr.mxu0 0.0
    %2075 = vmatpush1.msra.mxu0 %v2057
    %2076 = vmatprep.subr.mxu0 0.0
    %2077 = vmatpush1.msra.mxu0 0.0
    %2078 = vmatprep.subr.mxu0 0.0
    %2079 = vmatpush1.msra.mxu0 0.0
    %2080 = vmatprep.subr.mxu0 0.0
    %2081 = vmatpush1.msra.mxu0 0.0
    %2082 = vmatprep.subr.mxu0 0.0
    %2083 = vmatpush1.msra.mxu0 0.0
    %2084 = vmatprep.subr.mxu0 0.0
    %2085 = vmatpush1.msra.mxu0 0.0
    %2086 = vmatprep.subr.mxu0 0.0
    %2087 = vmatpush1.msra.mxu0 0.0
    %2088 = vmatprep.subr.mxu0 0.0
    %2089 = vmatpush1.msra.mxu0 0.0
    %2090 = vmatprep.subr.mxu0 0.0
    %2091 = vmatpush1.msra.mxu0 0.0
    %2092 = vmatprep.subr.mxu0 0.0
    %2093 = vmatpush1.msra.mxu0 0.0
    %2094 = vmatprep.subr.mxu0 0.0
    %2095 = vmatpush1.msra.mxu0 0.0
    %2096 = vmatprep.subr.mxu0 0.0
    %2097 = vmatpush1.msra.mxu0 0.0
    %2098 = vmatprep.subr.mxu0 0.0
    %2099 = vmatpush1.msra.mxu0 0.0
    %2100 = vmatprep.subr.mxu0 0.0
    %2101 = vmatpush1.msra.mxu0 0.0
    %2102 = vmatprep.subr.mxu0 0.0
    %2103 = vmatpush1.msra.mxu0 0.0
    %2104 = vmatprep.subr.mxu0 0.0
    %2105 = vmatpush1.msra.mxu0 0.0
    %2106 = vmatprep.subr.mxu0 0.0
    %2107 = vmatpush1.msra.mxu0 0.0
    %2108 = vmatprep.subr.mxu0 0.0
    %2109 = vmatpush1.msra.mxu0 0.0
    %2110 = vmatprep.subr.mxu0 0.0
    %2111 = vmatpush1.msra.mxu0 0.0
    %2112 = vmatprep.subr.mxu0 0.0
    %2113 = vmatpush1.msra.mxu0 0.0
    %2114 = vmatprep.subr.mxu0 0.0
    %2115 = vmatpush1.msra.mxu0 0.0
    %2116 = vmatprep.subr.mxu0 0.0
    %2117 = vmatpush1.msra.mxu0 0.0
    %2118 = vmatprep.subr.mxu0 0.0
    %2119 = vmatpush1.msra.mxu0 0.0
    %2120 = vmatprep.subr.mxu0 0.0
    %2121 = vmatpush1.msra.mxu0 0.0
    %2122 = vmatprep.subr.mxu0 0.0
    %2123 = vmatpush1.msra.mxu0 0.0
    %2124 = vmatprep.subr.mxu0 0.0
    %2125 = vmatpush1.msra.mxu0 0.0
    %2126 = vmatprep.subr.mxu0 0.0
    %2127 = vmatpush1.msra.mxu0 0.0
    %2128 = vmatprep.subr.mxu0 0.0
    %2129 = vmatpush1.msra.mxu0 0.0
    %2130 = vmatprep.subr.mxu0 0.0
    %2131 = vmatpush1.msra.mxu0 0.0
    %2132 = vmatprep.mubr.f32.mxu0 0.0
    %2133 = vmatmul.mubr.f32.gmra.mrb[0].mxu0 %v2066
    %v2134 = vpop.f32.mrb[0].mxu0
    %v2135 = vadd.f32 %v2063, %v2134
    %v2136 = vpop.f32.mrb[0].mxu0
    %2137 = vdwg.mxu0
    %v2138 = vtanh.pop %v2135
    %v2139 = vld [vmem:[#allocation15] sm:$0xff]
    %v2140 = vld [vmem:[#allocation15 + $0x8] sm:$0xff]
    %v2141 = vld [vmem:[#allocation15 + $0x10] sm:$0xff]
    %v2142 = vld [vmem:[#allocation15 + $0x18] sm:$0xff]
    %v2144 = vsel %vm608, %v2138, 0
    %2146 = vmatprep.subr.mxu0 0.0
    %2147 = vmatpush1.msra.mxu0 %v2139
    %2148 = vmatprep.subr.mxu0 0.0
    %2149 = vmatpush1.msra.mxu0 %v2140
    %2150 = vmatprep.subr.mxu0 0.0
    %2151 = vmatpush1.msra.mxu0 %v2141
    %2152 = vmatprep.subr.mxu0 0.0
    %2153 = vmatpush1.msra.mxu0 %v2142
    %2154 = vmatprep.subr.mxu0 0.0
    %2155 = vmatpush1.msra.mxu0 0.0
    %2156 = vmatprep.subr.mxu0 0.0
    %2157 = vmatpush1.msra.mxu0 0.0
    %2158 = vmatprep.subr.mxu0 0.0
    %2159 = vmatpush1.msra.mxu0 0.0
    %2160 = vmatprep.subr.mxu0 0.0
    %2161 = vmatpush1.msra.mxu0 0.0
    %2162 = vmatprep.subr.mxu0 0.0
    %2163 = vmatpush1.msra.mxu0 0.0
    %2164 = vmatprep.subr.mxu0 0.0
    %2165 = vmatpush1.msra.mxu0 0.0
    %2166 = vmatprep.subr.mxu0 0.0
    %2167 = vmatpush1.msra.mxu0 0.0
    %2168 = vmatprep.subr.mxu0 0.0
    %2169 = vmatpush1.msra.mxu0 0.0
    %2170 = vmatprep.subr.mxu0 0.0
    %2171 = vmatpush1.msra.mxu0 0.0
    %2172 = vmatprep.subr.mxu0 0.0
    %2173 = vmatpush1.msra.mxu0 0.0
    %2174 = vmatprep.subr.mxu0 0.0
    %2175 = vmatpush1.msra.mxu0 0.0
    %2176 = vmatprep.subr.mxu0 0.0
    %2177 = vmatpush1.msra.mxu0 0.0
    %2178 = vmatprep.subr.mxu0 0.0
    %2179 = vmatpush1.msra.mxu0 0.0
    %2180 = vmatprep.subr.mxu0 0.0
    %2181 = vmatpush1.msra.mxu0 0.0
    %2182 = vmatprep.subr.mxu0 0.0
    %2183 = vmatpush1.msra.mxu0 0.0
    %2184 = vmatprep.subr.mxu0 0.0
    %2185 = vmatpush1.msra.mxu0 0.0
    %2186 = vmatprep.subr.mxu0 0.0
    %2187 = vmatpush1.msra.mxu0 0.0
    %2188 = vmatprep.subr.mxu0 0.0
    %2189 = vmatpush1.msra.mxu0 0.0
    %2190 = vmatprep.subr.mxu0 0.0
    %2191 = vmatpush1.msra.mxu0 0.0
    %2192 = vmatprep.subr.mxu0 0.0
    %2193 = vmatpush1.msra.mxu0 0.0
    %2194 = vmatprep.subr.mxu0 0.0
    %2195 = vmatpush1.msra.mxu0 0.0
    %2196 = vmatprep.subr.mxu0 0.0
    %2197 = vmatpush1.msra.mxu0 0.0
    %2198 = vmatprep.subr.mxu0 0.0
    %2199 = vmatpush1.msra.mxu0 0.0
    %2200 = vmatprep.subr.mxu0 0.0
    %2201 = vmatpush1.msra.mxu0 0.0
    %2202 = vmatprep.subr.mxu0 0.0
    %2203 = vmatpush1.msra.mxu0 0.0
    %2204 = vmatprep.subr.mxu0 0.0
    %2205 = vmatpush1.msra.mxu0 0.0
    %2206 = vmatprep.subr.mxu0 0.0
    %2207 = vmatpush1.msra.mxu0 0.0
    %2208 = vmatprep.subr.mxu0 0.0
    %2209 = vmatpush1.msra.mxu0 0.0
    %2210 = vmatprep.mubr.f32.mxu0 0.0
    %2211 = vmatmul.mubr.f32.gmra.mrb[0].mxu0 %v2144
    %v2212 = vpop.f32.mrb[0].mxu0
    %v2213 = vadd.f32 0.0, %v2212
    %v2214 = vpop.f32.mrb[0].mxu0
    %2215 = vdwg.mxu0
    %v2216 = vadd.f32 %v1951, %v2213
    %v2217 = vld [vmem:[#allocation16] sm:$0x1]
    %v2219 = vlaneseq
    %v2220 = vshrl.u32 %v2219, 7
    %v2221 = vsub.s32 0, %v2220
    %v2222 = vrot.slane %v2217, %v2221
    %v2224 = vadd.f32 %v2216, %v2222
    %v2225 = vld [vmem:[%s53] sm:$0xff]
    %v2226 = vld [vmem:[%s53 + $0x8] sm:$0xff]
    %v2227 = vld [vmem:[%s53 + $0x10] sm:$0xff]
    %v2228 = vld [vmem:[%s53 + $0x18] sm:$0xff]
    %2229 = vmatprep.subr.mxu0 0.0
    %2230 = vmatpush1.msra.mxu0 %v2225
    %2231 = vmatprep.subr.mxu0 0.0
    %2232 = vmatpush1.msra.mxu0 %v2226
    %2233 = vmatprep.subr.mxu0 0.0
    %2234 = vmatpush1.msra.mxu0 %v2227
    %2235 = vmatprep.subr.mxu0 0.0
    %2236 = vmatpush1.msra.mxu0 %v2228
    %2237 = vmatprep.subr.mxu0 0.0
    %2238 = vmatpush1.msra.mxu0 0.0
    %2239 = vmatprep.subr.mxu0 0.0
    %2240 = vmatpush1.msra.mxu0 0.0
    %2241 = vmatprep.subr.mxu0 0.0
    %2242 = vmatpush1.msra.mxu0 0.0
    %2243 = vmatprep.subr.mxu0 0.0
    %2244 = vmatpush1.msra.mxu0 0.0
    %2245 = vmatprep.subr.mxu0 0.0
    %2246 = vmatpush1.msra.mxu0 0.0
    %2247 = vmatprep.subr.mxu0 0.0
    %2248 = vmatpush1.msra.mxu0 0.0
    %2249 = vmatprep.subr.mxu0 0.0
    %2250 = vmatpush1.msra.mxu0 0.0
    %2251 = vmatprep.subr.mxu0 0.0
    %2252 = vmatpush1.msra.mxu0 0.0
    %2253 = vmatprep.subr.mxu0 0.0
    %2254 = vmatpush1.msra.mxu0 0.0
    %2255 = vmatprep.subr.mxu0 0.0
    %2256 = vmatpush1.msra.mxu0 0.0
    %2257 = vmatprep.subr.mxu0 0.0
    %2258 = vmatpush1.msra.mxu0 0.0
    %2259 = vmatprep.subr.mxu0 0.0
    %2260 = vmatpush1.msra.mxu0 0.0
    %2261 = vmatprep.subr.mxu0 0.0
    %2262 = vmatpush1.msra.mxu0 0.0
    %2263 = vmatprep.subr.mxu0 0.0
    %2264 = vmatpush1.msra.mxu0 0.0
    %2265 = vmatprep.subr.mxu0 0.0
    %2266 = vmatpush1.msra.mxu0 0.0
    %2267 = vmatprep.subr.mxu0 0.0
    %2268 = vmatpush1.msra.mxu0 0.0
    %2269 = vmatprep.subr.mxu0 0.0
    %2270 = vmatpush1.msra.mxu0 0.0
    %2271 = vmatprep.subr.mxu0 0.0
    %2272 = vmatpush1.msra.mxu0 0.0
    %2273 = vmatprep.subr.mxu0 0.0
    %2274 = vmatpush1.msra.mxu0 0.0
    %2275 = vmatprep.subr.mxu0 0.0
    %2276 = vmatpush1.msra.mxu0 0.0
    %2277 = vmatprep.subr.mxu0 0.0
    %2278 = vmatpush1.msra.mxu0 0.0
    %2279 = vmatprep.subr.mxu0 0.0
    %2280 = vmatpush1.msra.mxu0 0.0
    %2281 = vmatprep.subr.mxu0 0.0
    %2282 = vmatpush1.msra.mxu0 0.0
    %2283 = vmatprep.subr.mxu0 0.0
    %2284 = vmatpush1.msra.mxu0 0.0
    %2285 = vmatprep.subr.mxu0 0.0
    %2286 = vmatpush1.msra.mxu0 0.0
    %2287 = vmatprep.subr.mxu0 0.0
    %2288 = vmatpush1.msra.mxu0 0.0
    %2289 = vmatprep.subr.mxu0 0.0
    %2290 = vmatpush1.msra.mxu0 0.0
    %2291 = vmatprep.subr.mxu0 0.0
    %2292 = vmatpush1.msra.mxu0 0.0
    %2293 = vmatprep.mubr.f32.mxu0 0.0
    %2294 = vmatmul.mubr.f32.gmra.mrb[0].mxu0 %v2144
    %v2295 = vpop.f32.mrb[0].mxu0
    %v2296 = vadd.f32 0.0, %v2295
    %v2297 = vpop.f32.mrb[0].mxu0
    %2298 = vdwg.mxu0
    %v2299 = vadd.f32 %v2034, %v2296
    %v2300 = vld [vmem:[#allocation18] sm:$0x1]
    %v2302 = vlaneseq
    %v2303 = vshrl.u32 %v2302, 7
    %v2304 = vsub.s32 0, %v2303
    %v2305 = vrot.slane %v2300, %v2304
    %v2307 = vadd.f32 %v2299, %v2305
    %v2308 = vld [vmem:[#allocation19] sm:$0x1]
    %v2310 = vlaneseq
    %v2311 = vshrl.u32 %v2310, 7
    %v2312 = vsub.s32 0, %v2311
    %v2313 = vrot.slane %v2308, %v2312
    %v2315 = vadd.f32 %v2307, %v2313
    %2317 = vrot.lane.b32.xlu0 %v2315, 25
    %v2318 = vpop.permute.xlu0 %2317
    %vm2320 = vcmask 222408
    %2321 = vst.msk [vmem:[%s59] sm:$0x3] %vm2320, %v2318
    %v2322 = vadd.f32 %v2224, %v1083
    %v2323 = vtanh.pop %v2322
    %v2324 = vld [vmem:[%s45] sm:$0xff]
    %v2325 = vld [vmem:[%s45 + $0x8] sm:$0xff]
    %v2326 = vld [vmem:[%s45 + $0x10] sm:$0xff]
    %v2327 = vld [vmem:[%s45 + $0x18] sm:$0xff]
    %v2328 = vld [vmem:[#allocation13] sm:$0x1]
    %v2330 = vlaneseq
    %v2331 = vshrl.u32 %v2330, 7
    %v2332 = vsub.s32 0, %v2331
    %v2333 = vrot.slane %v2328, %v2332
    %v2336 = vsel %vm608, %v2323, 0
    %2338 = vmatprep.subr.mxu0 0.0
    %2339 = vmatpush1.msra.mxu0 %v2324
    %2340 = vmatprep.subr.mxu0 0.0
    %2341 = vmatpush1.msra.mxu0 %v2325
    %2342 = vmatprep.subr.mxu0 0.0
    %2343 = vmatpush1.msra.mxu0 %v2326
    %2344 = vmatprep.subr.mxu0 0.0
    %2345 = vmatpush1.msra.mxu0 %v2327
    %2346 = vmatprep.subr.mxu0 0.0
    %2347 = vmatpush1.msra.mxu0 0.0
    %2348 = vmatprep.subr.mxu0 0.0
    %2349 = vmatpush1.msra.mxu0 0.0
    %2350 = vmatprep.subr.mxu0 0.0
    %2351 = vmatpush1.msra.mxu0 0.0
    %2352 = vmatprep.subr.mxu0 0.0
    %2353 = vmatpush1.msra.mxu0 0.0
    %2354 = vmatprep.subr.mxu0 0.0
    %2355 = vmatpush1.msra.mxu0 0.0
    %2356 = vmatprep.subr.mxu0 0.0
    %2357 = vmatpush1.msra.mxu0 0.0
    %2358 = vmatprep.subr.mxu0 0.0
    %2359 = vmatpush1.msra.mxu0 0.0
    %2360 = vmatprep.subr.mxu0 0.0
    %2361 = vmatpush1.msra.mxu0 0.0
    %2362 = vmatprep.subr.mxu0 0.0
    %2363 = vmatpush1.msra.mxu0 0.0
    %2364 = vmatprep.subr.mxu0 0.0
    %2365 = vmatpush1.msra.mxu0 0.0
    %2366 = vmatprep.subr.mxu0 0.0
    %2367 = vmatpush1.msra.mxu0 0.0
    %2368 = vmatprep.subr.mxu0 0.0
    %2369 = vmatpush1.msra.mxu0 0.0
    %2370 = vmatprep.subr.mxu0 0.0
    %2371 = vmatpush1.msra.mxu0 0.0
    %2372 = vmatprep.subr.mxu0 0.0
    %2373 = vmatpush1.msra.mxu0 0.0
    %2374 = vmatprep.subr.mxu0 0.0
    %2375 = vmatpush1.msra.mxu0 0.0
    %2376 = vmatprep.subr.mxu0 0.0
    %2377 = vmatpush1.msra.mxu0 0.0
    %2378 = vmatprep.subr.mxu0 0.0
    %2379 = vmatpush1.msra.mxu0 0.0
    %2380 = vmatprep.subr.mxu0 0.0
    %2381 = vmatpush1.msra.mxu0 0.0
    %2382 = vmatprep.subr.mxu0 0.0
    %2383 = vmatpush1.msra.mxu0 0.0
    %2384 = vmatprep.subr.mxu0 0.0
    %2385 = vmatpush1.msra.mxu0 0.0
    %2386 = vmatprep.subr.mxu0 0.0
    %2387 = vmatpush1.msra.mxu0 0.0
    %2388 = vmatprep.subr.mxu0 0.0
    %2389 = vmatpush1.msra.mxu0 0.0
    %2390 = vmatprep.subr.mxu0 0.0
    %2391 = vmatpush1.msra.mxu0 0.0
    %2392 = vmatprep.subr.mxu0 0.0
    %2393 = vmatpush1.msra.mxu0 0.0
    %2394 = vmatprep.subr.mxu0 0.0
    %2395 = vmatpush1.msra.mxu0 0.0
    %2396 = vmatprep.subr.mxu0 0.0
    %2397 = vmatpush1.msra.mxu0 0.0
    %2398 = vmatprep.subr.mxu0 0.0
    %2399 = vmatpush1.msra.mxu0 0.0
    %2400 = vmatprep.subr.mxu0 0.0
    %2401 = vmatpush1.msra.mxu0 0.0
    %2402 = vmatprep.mubr.f32.mxu0 0.0
    %2403 = vmatmul.mubr.f32.gmra.mrb[0].mxu0 %v2336
    %v2404 = vpop.f32.mrb[0].mxu0
    %v2405 = vadd.f32 %v2333, %v2404
    %v2406 = vpop.f32.mrb[0].mxu0
    %2407 = vdwg.mxu0
    %v2408 = vtanh.pop %v2405
    %v2409 = vld [vmem:[#allocation15] sm:$0xff]
    %v2410 = vld [vmem:[#allocation15 + $0x8] sm:$0xff]
    %v2411 = vld [vmem:[#allocation15 + $0x10] sm:$0xff]
    %v2412 = vld [vmem:[#allocation15 + $0x18] sm:$0xff]
    %v2414 = vsel %vm608, %v2408, 0
    %2416 = vmatprep.subr.mxu0 0.0
    %2417 = vmatpush1.msra.mxu0 %v2409
    %2418 = vmatprep.subr.mxu0 0.0
    %2419 = vmatpush1.msra.mxu0 %v2410
    %2420 = vmatprep.subr.mxu0 0.0
    %2421 = vmatpush1.msra.mxu0 %v2411
    %2422 = vmatprep.subr.mxu0 0.0
    %2423 = vmatpush1.msra.mxu0 %v2412
    %2424 = vmatprep.subr.mxu0 0.0
    %2425 = vmatpush1.msra.mxu0 0.0
    %2426 = vmatprep.subr.mxu0 0.0
    %2427 = vmatpush1.msra.mxu0 0.0
    %2428 = vmatprep.subr.mxu0 0.0
    %2429 = vmatpush1.msra.mxu0 0.0
    %2430 = vmatprep.subr.mxu0 0.0
    %2431 = vmatpush1.msra.mxu0 0.0
    %2432 = vmatprep.subr.mxu0 0.0
    %2433 = vmatpush1.msra.mxu0 0.0
    %2434 = vmatprep.subr.mxu0 0.0
    %2435 = vmatpush1.msra.mxu0 0.0
    %2436 = vmatprep.subr.mxu0 0.0
    %2437 = vmatpush1.msra.mxu0 0.0
    %2438 = vmatprep.subr.mxu0 0.0
    %2439 = vmatpush1.msra.mxu0 0.0
    %2440 = vmatprep.subr.mxu0 0.0
    %2441 = vmatpush1.msra.mxu0 0.0
    %2442 = vmatprep.subr.mxu0 0.0
    %2443 = vmatpush1.msra.mxu0 0.0
    %2444 = vmatprep.subr.mxu0 0.0
    %2445 = vmatpush1.msra.mxu0 0.0
    %2446 = vmatprep.subr.mxu0 0.0
    %2447 = vmatpush1.msra.mxu0 0.0
    %2448 = vmatprep.subr.mxu0 0.0
    %2449 = vmatpush1.msra.mxu0 0.0
    %2450 = vmatprep.subr.mxu0 0.0
    %2451 = vmatpush1.msra.mxu0 0.0
    %2452 = vmatprep.subr.mxu0 0.0
    %2453 = vmatpush1.msra.mxu0 0.0
    %2454 = vmatprep.subr.mxu0 0.0
    %2455 = vmatpush1.msra.mxu0 0.0
    %2456 = vmatprep.subr.mxu0 0.0
    %2457 = vmatpush1.msra.mxu0 0.0
    %2458 = vmatprep.subr.mxu0 0.0
    %2459 = vmatpush1.msra.mxu0 0.0
    %2460 = vmatprep.subr.mxu0 0.0
    %2461 = vmatpush1.msra.mxu0 0.0
    %2462 = vmatprep.subr.mxu0 0.0
    %2463 = vmatpush1.msra.mxu0 0.0
    %2464 = vmatprep.subr.mxu0 0.0
    %2465 = vmatpush1.msra.mxu0 0.0
    %2466 = vmatprep.subr.mxu0 0.0
    %2467 = vmatpush1.msra.mxu0 0.0
    %2468 = vmatprep.subr.mxu0 0.0
    %2469 = vmatpush1.msra.mxu0 0.0
    %2470 = vmatprep.subr.mxu0 0.0
    %2471 = vmatpush1.msra.mxu0 0.0
    %2472 = vmatprep.subr.mxu0 0.0
    %2473 = vmatpush1.msra.mxu0 0.0
    %2474 = vmatprep.subr.mxu0 0.0
    %2475 = vmatpush1.msra.mxu0 0.0
    %2476 = vmatprep.subr.mxu0 0.0
    %2477 = vmatpush1.msra.mxu0 0.0
    %2478 = vmatprep.subr.mxu0 0.0
    %2479 = vmatpush1.msra.mxu0 0.0
    %2480 = vmatprep.mubr.f32.mxu0 0.0
    %2481 = vmatmul.mubr.f32.gmra.mrb[0].mxu0 %v2414
    %v2482 = vpop.f32.mrb[0].mxu0
    %v2483 = vadd.f32 0.0, %v2482
    %v2484 = vpop.f32.mrb[0].mxu0
    %2485 = vdwg.mxu0
    %v2486 = vadd.f32 %v2224, %v2483
    %v2487 = vld [vmem:[#allocation16] sm:$0x1]
    %v2489 = vlaneseq
    %v2490 = vshrl.u32 %v2489, 7
    %v2491 = vsub.s32 0, %v2490
    %v2492 = vrot.slane %v2487, %v2491
    %v2494 = vadd.f32 %v2486, %v2492
    %v2495 = vld [vmem:[%s53] sm:$0xff]
    %v2496 = vld [vmem:[%s53 + $0x8] sm:$0xff]
    %v2497 = vld [vmem:[%s53 + $0x10] sm:$0xff]
    %v2498 = vld [vmem:[%s53 + $0x18] sm:$0xff]
    %2499 = vmatprep.subr.mxu0 0.0
    %2500 = vmatpush1.msra.mxu0 %v2495
    %2501 = vmatprep.subr.mxu0 0.0
    %2502 = vmatpush1.msra.mxu0 %v2496
    %2503 = vmatprep.subr.mxu0 0.0
    %2504 = vmatpush1.msra.mxu0 %v2497
    %2505 = vmatprep.subr.mxu0 0.0
    %2506 = vmatpush1.msra.mxu0 %v2498
    %2507 = vmatprep.subr.mxu0 0.0
    %2508 = vmatpush1.msra.mxu0 0.0
    %2509 = vmatprep.subr.mxu0 0.0
    %2510 = vmatpush1.msra.mxu0 0.0
    %2511 = vmatprep.subr.mxu0 0.0
    %2512 = vmatpush1.msra.mxu0 0.0
    %2513 = vmatprep.subr.mxu0 0.0
    %2514 = vmatpush1.msra.mxu0 0.0
    %2515 = vmatprep.subr.mxu0 0.0
    %2516 = vmatpush1.msra.mxu0 0.0
    %2517 = vmatprep.subr.mxu0 0.0
    %2518 = vmatpush1.msra.mxu0 0.0
    %2519 = vmatprep.subr.mxu0 0.0
    %2520 = vmatpush1.msra.mxu0 0.0
    %2521 = vmatprep.subr.mxu0 0.0
    %2522 = vmatpush1.msra.mxu0 0.0
    %2523 = vmatprep.subr.mxu0 0.0
    %2524 = vmatpush1.msra.mxu0 0.0
    %2525 = vmatprep.subr.mxu0 0.0
    %2526 = vmatpush1.msra.mxu0 0.0
    %2527 = vmatprep.subr.mxu0 0.0
    %2528 = vmatpush1.msra.mxu0 0.0
    %2529 = vmatprep.subr.mxu0 0.0
    %2530 = vmatpush1.msra.mxu0 0.0
    %2531 = vmatprep.subr.mxu0 0.0
    %2532 = vmatpush1.msra.mxu0 0.0
    %2533 = vmatprep.subr.mxu0 0.0
    %2534 = vmatpush1.msra.mxu0 0.0
    %2535 = vmatprep.subr.mxu0 0.0
    %2536 = vmatpush1.msra.mxu0 0.0
    %2537 = vmatprep.subr.mxu0 0.0
    %2538 = vmatpush1.msra.mxu0 0.0
    %2539 = vmatprep.subr.mxu0 0.0
    %2540 = vmatpush1.msra.mxu0 0.0
    %2541 = vmatprep.subr.mxu0 0.0
    %2542 = vmatpush1.msra.mxu0 0.0
    %2543 = vmatprep.subr.mxu0 0.0
    %2544 = vmatpush1.msra.mxu0 0.0
    %2545 = vmatprep.subr.mxu0 0.0
    %2546 = vmatpush1.msra.mxu0 0.0
    %2547 = vmatprep.subr.mxu0 0.0
    %2548 = vmatpush1.msra.mxu0 0.0
    %2549 = vmatprep.subr.mxu0 0.0
    %2550 = vmatpush1.msra.mxu0 0.0
    %2551 = vmatprep.subr.mxu0 0.0
    %2552 = vmatpush1.msra.mxu0 0.0
    %2553 = vmatprep.subr.mxu0 0.0
    %2554 = vmatpush1.msra.mxu0 0.0
    %2555 = vmatprep.subr.mxu0 0.0
    %2556 = vmatpush1.msra.mxu0 0.0
    %2557 = vmatprep.subr.mxu0 0.0
    %2558 = vmatpush1.msra.mxu0 0.0
    %2559 = vmatprep.subr.mxu0 0.0
    %2560 = vmatpush1.msra.mxu0 0.0
    %2561 = vmatprep.subr.mxu0 0.0
    %2562 = vmatpush1.msra.mxu0 0.0
    %2563 = vmatprep.mubr.f32.mxu0 0.0
    %2564 = vmatmul.mubr.f32.gmra.mrb[0].mxu0 %v2414
    %v2565 = vpop.f32.mrb[0].mxu0
    %v2566 = vadd.f32 0.0, %v2565
    %v2567 = vpop.f32.mrb[0].mxu0
    %2568 = vdwg.mxu0
    %v2569 = vadd.f32 %v2307, %v2566
    %v2570 = vld [vmem:[#allocation18] sm:$0x1]
    %v2572 = vlaneseq
    %v2573 = vshrl.u32 %v2572, 7
    %v2574 = vsub.s32 0, %v2573
    %v2575 = vrot.slane %v2570, %v2574
    %v2577 = vadd.f32 %v2569, %v2575
    %v2578 = vld [vmem:[#allocation19] sm:$0x1]
    %v2580 = vlaneseq
    %v2581 = vshrl.u32 %v2580, 7
    %v2582 = vsub.s32 0, %v2581
    %v2583 = vrot.slane %v2578, %v2582
    %v2585 = vadd.f32 %v2577, %v2583
    %2587 = vrot.lane.b32.xlu0 %v2585, 28
    %v2588 = vpop.permute.xlu0 %2587
    %vm2590 = vcmask 247008
    %2591 = vst.msk [vmem:[%s59] sm:$0x3] %vm2590, %v2588
    %2593 = vrot.lane.b32.xlu0 %v1083, 96
    %v2594 = vpop.permute.xlu0 %2593
    %v2596 = vadd.f32 %v2494, %v2594
    %v2597 = vtanh.pop %v2596
    %v2598 = vld [vmem:[%s45] sm:$0xff]
    %v2599 = vld [vmem:[%s45 + $0x8] sm:$0xff]
    %v2600 = vld [vmem:[%s45 + $0x10] sm:$0xff]
    %v2601 = vld [vmem:[%s45 + $0x18] sm:$0xff]
    %v2602 = vld [vmem:[#allocation13] sm:$0x1]
    %v2604 = vlaneseq
    %v2605 = vshrl.u32 %v2604, 7
    %v2606 = vsub.s32 0, %v2605
    %v2607 = vrot.slane %v2602, %v2606
    %v2610 = vsel %vm608, %v2597, 0
    %2612 = vmatprep.subr.mxu0 0.0
    %2613 = vmatpush1.msra.mxu0 %v2598
    %2614 = vmatprep.subr.mxu0 0.0
    %2615 = vmatpush1.msra.mxu0 %v2599
    %2616 = vmatprep.subr.mxu0 0.0
    %2617 = vmatpush1.msra.mxu0 %v2600
    %2618 = vmatprep.subr.mxu0 0.0
    %2619 = vmatpush1.msra.mxu0 %v2601
    %2620 = vmatprep.subr.mxu0 0.0
    %2621 = vmatpush1.msra.mxu0 0.0
    %2622 = vmatprep.subr.mxu0 0.0
    %2623 = vmatpush1.msra.mxu0 0.0
    %2624 = vmatprep.subr.mxu0 0.0
    %2625 = vmatpush1.msra.mxu0 0.0
    %2626 = vmatprep.subr.mxu0 0.0
    %2627 = vmatpush1.msra.mxu0 0.0
    %2628 = vmatprep.subr.mxu0 0.0
    %2629 = vmatpush1.msra.mxu0 0.0
    %2630 = vmatprep.subr.mxu0 0.0
    %2631 = vmatpush1.msra.mxu0 0.0
    %2632 = vmatprep.subr.mxu0 0.0
    %2633 = vmatpush1.msra.mxu0 0.0
    %2634 = vmatprep.subr.mxu0 0.0
    %2635 = vmatpush1.msra.mxu0 0.0
    %2636 = vmatprep.subr.mxu0 0.0
    %2637 = vmatpush1.msra.mxu0 0.0
    %2638 = vmatprep.subr.mxu0 0.0
    %2639 = vmatpush1.msra.mxu0 0.0
    %2640 = vmatprep.subr.mxu0 0.0
    %2641 = vmatpush1.msra.mxu0 0.0
    %2642 = vmatprep.subr.mxu0 0.0
    %2643 = vmatpush1.msra.mxu0 0.0
    %2644 = vmatprep.subr.mxu0 0.0
    %2645 = vmatpush1.msra.mxu0 0.0
    %2646 = vmatprep.subr.mxu0 0.0
    %2647 = vmatpush1.msra.mxu0 0.0
    %2648 = vmatprep.subr.mxu0 0.0
    %2649 = vmatpush1.msra.mxu0 0.0
    %2650 = vmatprep.subr.mxu0 0.0
    %2651 = vmatpush1.msra.mxu0 0.0
    %2652 = vmatprep.subr.mxu0 0.0
    %2653 = vmatpush1.msra.mxu0 0.0
    %2654 = vmatprep.subr.mxu0 0.0
    %2655 = vmatpush1.msra.mxu0 0.0
    %2656 = vmatprep.subr.mxu0 0.0
    %2657 = vmatpush1.msra.mxu0 0.0
    %2658 = vmatprep.subr.mxu0 0.0
    %2659 = vmatpush1.msra.mxu0 0.0
    %2660 = vmatprep.subr.mxu0 0.0
    %2661 = vmatpush1.msra.mxu0 0.0
    %2662 = vmatprep.subr.mxu0 0.0
    %2663 = vmatpush1.msra.mxu0 0.0
    %2664 = vmatprep.subr.mxu0 0.0
    %2665 = vmatpush1.msra.mxu0 0.0
    %2666 = vmatprep.subr.mxu0 0.0
    %2667 = vmatpush1.msra.mxu0 0.0
    %2668 = vmatprep.subr.mxu0 0.0
    %2669 = vmatpush1.msra.mxu0 0.0
    %2670 = vmatprep.subr.mxu0 0.0
    %2671 = vmatpush1.msra.mxu0 0.0
    %2672 = vmatprep.subr.mxu0 0.0
    %2673 = vmatpush1.msra.mxu0 0.0
    %2674 = vmatprep.subr.mxu0 0.0
    %2675 = vmatpush1.msra.mxu0 0.0
    %2676 = vmatprep.mubr.f32.mxu0 0.0
    %2677 = vmatmul.mubr.f32.gmra.mrb[0].mxu0 %v2610
    %v2678 = vpop.f32.mrb[0].mxu0
    %v2679 = vadd.f32 %v2607, %v2678
    %v2680 = vpop.f32.mrb[0].mxu0
    %2681 = vdwg.mxu0
    %v2682 = vtanh.pop %v2679
    %v2683 = vld [vmem:[#allocation15] sm:$0xff]
    %v2684 = vld [vmem:[#allocation15 + $0x8] sm:$0xff]
    %v2685 = vld [vmem:[#allocation15 + $0x10] sm:$0xff]
    %v2686 = vld [vmem:[#allocation15 + $0x18] sm:$0xff]
    %v2688 = vsel %vm608, %v2682, 0
    %2690 = vmatprep.subr.mxu0 0.0
    %2691 = vmatpush1.msra.mxu0 %v2683
    %2692 = vmatprep.subr.mxu0 0.0
    %2693 = vmatpush1.msra.mxu0 %v2684
    %2694 = vmatprep.subr.mxu0 0.0
    %2695 = vmatpush1.msra.mxu0 %v2685
    %2696 = vmatprep.subr.mxu0 0.0
    %2697 = vmatpush1.msra.mxu0 %v2686
    %2698 = vmatprep.subr.mxu0 0.0
    %2699 = vmatpush1.msra.mxu0 0.0
    %2700 = vmatprep.subr.mxu0 0.0
    %2701 = vmatpush1.msra.mxu0 0.0
    %2702 = vmatprep.subr.mxu0 0.0
    %2703 = vmatpush1.msra.mxu0 0.0
    %2704 = vmatprep.subr.mxu0 0.0
    %2705 = vmatpush1.msra.mxu0 0.0
    %2706 = vmatprep.subr.mxu0 0.0
    %2707 = vmatpush1.msra.mxu0 0.0
    %2708 = vmatprep.subr.mxu0 0.0
    %2709 = vmatpush1.msra.mxu0 0.0
    %2710 = vmatprep.subr.mxu0 0.0
    %2711 = vmatpush1.msra.mxu0 0.0
    %2712 = vmatprep.subr.mxu0 0.0
    %2713 = vmatpush1.msra.mxu0 0.0
    %2714 = vmatprep.subr.mxu0 0.0
    %2715 = vmatpush1.msra.mxu0 0.0
    %2716 = vmatprep.subr.mxu0 0.0
    %2717 = vmatpush1.msra.mxu0 0.0
    %2718 = vmatprep.subr.mxu0 0.0
    %2719 = vmatpush1.msra.mxu0 0.0
    %2720 = vmatprep.subr.mxu0 0.0
    %2721 = vmatpush1.msra.mxu0 0.0
    %2722 = vmatprep.subr.mxu0 0.0
    %2723 = vmatpush1.msra.mxu0 0.0
    %2724 = vmatprep.subr.mxu0 0.0
    %2725 = vmatpush1.msra.mxu0 0.0
    %2726 = vmatprep.subr.mxu0 0.0
    %2727 = vmatpush1.msra.mxu0 0.0
    %2728 = vmatprep.subr.mxu0 0.0
    %2729 = vmatpush1.msra.mxu0 0.0
    %2730 = vmatprep.subr.mxu0 0.0
    %2731 = vmatpush1.msra.mxu0 0.0
    %2732 = vmatprep.subr.mxu0 0.0
    %2733 = vmatpush1.msra.mxu0 0.0
    %2734 = vmatprep.subr.mxu0 0.0
    %2735 = vmatpush1.msra.mxu0 0.0
    %2736 = vmatprep.subr.mxu0 0.0
    %2737 = vmatpush1.msra.mxu0 0.0
    %2738 = vmatprep.subr.mxu0 0.0
    %2739 = vmatpush1.msra.mxu0 0.0
    %2740 = vmatprep.subr.mxu0 0.0
    %2741 = vmatpush1.msra.mxu0 0.0
    %2742 = vmatprep.subr.mxu0 0.0
    %2743 = vmatpush1.msra.mxu0 0.0
    %2744 = vmatprep.subr.mxu0 0.0
    %2745 = vmatpush1.msra.mxu0 0.0
    %2746 = vmatprep.subr.mxu0 0.0
    %2747 = vmatpush1.msra.mxu0 0.0
    %2748 = vmatprep.subr.mxu0 0.0
    %2749 = vmatpush1.msra.mxu0 0.0
    %2750 = vmatprep.subr.mxu0 0.0
    %2751 = vmatpush1.msra.mxu0 0.0
    %2752 = vmatprep.subr.mxu0 0.0
    %2753 = vmatpush1.msra.mxu0 0.0
    %2754 = vmatprep.mubr.f32.mxu0 0.0
    %2755 = vmatmul.mubr.f32.gmra.mrb[0].mxu0 %v2688
    %v2756 = vpop.f32.mrb[0].mxu0
    %v2757 = vadd.f32 0.0, %v2756
    %v2758 = vpop.f32.mrb[0].mxu0
    %2759 = vdwg.mxu0
    %v2760 = vadd.f32 %v2494, %v2757
    %v2761 = vld [vmem:[#allocation16] sm:$0x1]
    %v2763 = vlaneseq
    %v2764 = vshrl.u32 %v2763, 7
    %v2765 = vsub.s32 0, %v2764
    %v2766 = vrot.slane %v2761, %v2765
    %v2768 = vadd.f32 %v2760, %v2766
    %v2769 = vld [vmem:[%s53] sm:$0xff]
    %v2770 = vld [vmem:[%s53 + $0x8] sm:$0xff]
    %v2771 = vld [vmem:[%s53 + $0x10] sm:$0xff]
    %v2772 = vld [vmem:[%s53 + $0x18] sm:$0xff]
    %2773 = vmatprep.subr.mxu0 0.0
    %2774 = vmatpush1.msra.mxu0 %v2769
    %2775 = vmatprep.subr.mxu0 0.0
    %2776 = vmatpush1.msra.mxu0 %v2770
    %2777 = vmatprep.subr.mxu0 0.0
    %2778 = vmatpush1.msra.mxu0 %v2771
    %2779 = vmatprep.subr.mxu0 0.0
    %2780 = vmatpush1.msra.mxu0 %v2772
    %2781 = vmatprep.subr.mxu0 0.0
    %2782 = vmatpush1.msra.mxu0 0.0
    %2783 = vmatprep.subr.mxu0 0.0
    %2784 = vmatpush1.msra.mxu0 0.0
    %2785 = vmatprep.subr.mxu0 0.0
    %2786 = vmatpush1.msra.mxu0 0.0
    %2787 = vmatprep.subr.mxu0 0.0
    %2788 = vmatpush1.msra.mxu0 0.0
    %2789 = vmatprep.subr.mxu0 0.0
    %2790 = vmatpush1.msra.mxu0 0.0
    %2791 = vmatprep.subr.mxu0 0.0
    %2792 = vmatpush1.msra.mxu0 0.0
    %2793 = vmatprep.subr.mxu0 0.0
    %2794 = vmatpush1.msra.mxu0 0.0
    %2795 = vmatprep.subr.mxu0 0.0
    %2796 = vmatpush1.msra.mxu0 0.0
    %2797 = vmatprep.subr.mxu0 0.0
    %2798 = vmatpush1.msra.mxu0 0.0
    %2799 = vmatprep.subr.mxu0 0.0
    %2800 = vmatpush1.msra.mxu0 0.0
    %2801 = vmatprep.subr.mxu0 0.0
    %2802 = vmatpush1.msra.mxu0 0.0
    %2803 = vmatprep.subr.mxu0 0.0
    %2804 = vmatpush1.msra.mxu0 0.0
    %2805 = vmatprep.subr.mxu0 0.0
    %2806 = vmatpush1.msra.mxu0 0.0
    %2807 = vmatprep.subr.mxu0 0.0
    %2808 = vmatpush1.msra.mxu0 0.0
    %2809 = vmatprep.subr.mxu0 0.0
    %2810 = vmatpush1.msra.mxu0 0.0
    %2811 = vmatprep.subr.mxu0 0.0
    %2812 = vmatpush1.msra.mxu0 0.0
    %2813 = vmatprep.subr.mxu0 0.0
    %2814 = vmatpush1.msra.mxu0 0.0
    %2815 = vmatprep.subr.mxu0 0.0
    %2816 = vmatpush1.msra.mxu0 0.0
    %2817 = vmatprep.subr.mxu0 0.0
    %2818 = vmatpush1.msra.mxu0 0.0
    %2819 = vmatprep.subr.mxu0 0.0
    %2820 = vmatpush1.msra.mxu0 0.0
    %2821 = vmatprep.subr.mxu0 0.0
    %2822 = vmatpush1.msra.mxu0 0.0
    %2823 = vmatprep.subr.mxu0 0.0
    %2824 = vmatpush1.msra.mxu0 0.0
    %2825 = vmatprep.subr.mxu0 0.0
    %2826 = vmatpush1.msra.mxu0 0.0
    %2827 = vmatprep.subr.mxu0 0.0
    %2828 = vmatpush1.msra.mxu0 0.0
    %2829 = vmatprep.subr.mxu0 0.0
    %2830 = vmatpush1.msra.mxu0 0.0
    %2831 = vmatprep.subr.mxu0 0.0
    %2832 = vmatpush1.msra.mxu0 0.0
    %2833 = vmatprep.subr.mxu0 0.0
    %2834 = vmatpush1.msra.mxu0 0.0
    %2835 = vmatprep.subr.mxu0 0.0
    %2836 = vmatpush1.msra.mxu0 0.0
    %2837 = vmatprep.mubr.f32.mxu0 0.0
    %2838 = vmatmul.mubr.f32.gmra.mrb[0].mxu0 %v2688
    %v2839 = vpop.f32.mrb[0].mxu0
    %v2840 = vadd.f32 0.0, %v2839
    %v2841 = vpop.f32.mrb[0].mxu0
    %2842 = vdwg.mxu0
    %v2843 = vadd.f32 %v2577, %v2840
    %v2844 = vld [vmem:[#allocation18] sm:$0x1]
    %v2846 = vlaneseq
    %v2847 = vshrl.u32 %v2846, 7
    %v2848 = vsub.s32 0, %v2847
    %v2849 = vrot.slane %v2844, %v2848
    %v2851 = vadd.f32 %v2843, %v2849
    %v2852 = vld [vmem:[#allocation19] sm:$0x1]
    %v2854 = vlaneseq
    %v2855 = vshrl.u32 %v2854, 7
    %v2856 = vsub.s32 0, %v2855
    %v2857 = vrot.slane %v2852, %v2856
    %v2859 = vadd.f32 %v2851, %v2857
    %2861 = vrot.lane.b32.xlu0 %v2859, 31
    %v2862 = vpop.permute.xlu0 %2861
    %vm2864 = vcmask 271608
    %2865 = vst.msk [vmem:[%s59] sm:$0x3] %vm2864, %v2862
    %2866 = vrot.lane.b32.xlu0 %v1083, 64
    %v2867 = vpop.permute.xlu0 %2866
    %v2869 = vadd.f32 %v2768, %v2867
    %v2870 = vtanh.pop %v2869
    %v2871 = vld [vmem:[%s45] sm:$0xff]
    %v2872 = vld [vmem:[%s45 + $0x8] sm:$0xff]
    %v2873 = vld [vmem:[%s45 + $0x10] sm:$0xff]
    %v2874 = vld [vmem:[%s45 + $0x18] sm:$0xff]
    %v2875 = vld [vmem:[#allocation13] sm:$0x1]
    %v2877 = vlaneseq
    %v2878 = vshrl.u32 %v2877, 7
    %v2879 = vsub.s32 0, %v2878
    %v2880 = vrot.slane %v2875, %v2879
    %v2883 = vsel %vm608, %v2870, 0
    %2885 = vmatprep.subr.mxu0 0.0
    %2886 = vmatpush1.msra.mxu0 %v2871
    %2887 = vmatprep.subr.mxu0 0.0
    %2888 = vmatpush1.msra.mxu0 %v2872
    %2889 = vmatprep.subr.mxu0 0.0
    %2890 = vmatpush1.msra.mxu0 %v2873
    %2891 = vmatprep.subr.mxu0 0.0
    %2892 = vmatpush1.msra.mxu0 %v2874
    %2893 = vmatprep.subr.mxu0 0.0
    %2894 = vmatpush1.msra.mxu0 0.0
    %2895 = vmatprep.subr.mxu0 0.0
    %2896 = vmatpush1.msra.mxu0 0.0
    %2897 = vmatprep.subr.mxu0 0.0
    %2898 = vmatpush1.msra.mxu0 0.0
    %2899 = vmatprep.subr.mxu0 0.0
    %2900 = vmatpush1.msra.mxu0 0.0
    %2901 = vmatprep.subr.mxu0 0.0
    %2902 = vmatpush1.msra.mxu0 0.0
    %2903 = vmatprep.subr.mxu0 0.0
    %2904 = vmatpush1.msra.mxu0 0.0
    %2905 = vmatprep.subr.mxu0 0.0
    %2906 = vmatpush1.msra.mxu0 0.0
    %2907 = vmatprep.subr.mxu0 0.0
    %2908 = vmatpush1.msra.mxu0 0.0
    %2909 = vmatprep.subr.mxu0 0.0
    %2910 = vmatpush1.msra.mxu0 0.0
    %2911 = vmatprep.subr.mxu0 0.0
    %2912 = vmatpush1.msra.mxu0 0.0
    %2913 = vmatprep.subr.mxu0 0.0
    %2914 = vmatpush1.msra.mxu0 0.0
    %2915 = vmatprep.subr.mxu0 0.0
    %2916 = vmatpush1.msra.mxu0 0.0
    %2917 = vmatprep.subr.mxu0 0.0
    %2918 = vmatpush1.msra.mxu0 0.0
    %2919 = vmatprep.subr.mxu0 0.0
    %2920 = vmatpush1.msra.mxu0 0.0
    %2921 = vmatprep.subr.mxu0 0.0
    %2922 = vmatpush1.msra.mxu0 0.0
    %2923 = vmatprep.subr.mxu0 0.0
    %2924 = vmatpush1.msra.mxu0 0.0
    %2925 = vmatprep.subr.mxu0 0.0
    %2926 = vmatpush1.msra.mxu0 0.0
    %2927 = vmatprep.subr.mxu0 0.0
    %2928 = vmatpush1.msra.mxu0 0.0
    %2929 = vmatprep.subr.mxu0 0.0
    %2930 = vmatpush1.msra.mxu0 0.0
    %2931 = vmatprep.subr.mxu0 0.0
    %2932 = vmatpush1.msra.mxu0 0.0
    %2933 = vmatprep.subr.mxu0 0.0
    %2934 = vmatpush1.msra.mxu0 0.0
    %2935 = vmatprep.subr.mxu0 0.0
    %2936 = vmatpush1.msra.mxu0 0.0
    %2937 = vmatprep.subr.mxu0 0.0
    %2938 = vmatpush1.msra.mxu0 0.0
    %2939 = vmatprep.subr.mxu0 0.0
    %2940 = vmatpush1.msra.mxu0 0.0
    %2941 = vmatprep.subr.mxu0 0.0
    %2942 = vmatpush1.msra.mxu0 0.0
    %2943 = vmatprep.subr.mxu0 0.0
    %2944 = vmatpush1.msra.mxu0 0.0
    %2945 = vmatprep.subr.mxu0 0.0
    %2946 = vmatpush1.msra.mxu0 0.0
    %2947 = vmatprep.subr.mxu0 0.0
    %2948 = vmatpush1.msra.mxu0 0.0
    %2949 = vmatprep.mubr.f32.mxu0 0.0
    %2950 = vmatmul.mubr.f32.gmra.mrb[0].mxu0 %v2883
    %v2951 = vpop.f32.mrb[0].mxu0
    %v2952 = vadd.f32 %v2880, %v2951
    %v2953 = vpop.f32.mrb[0].mxu0
    %2954 = vdwg.mxu0
    %v2955 = vtanh.pop %v2952
    %v2956 = vld [vmem:[#allocation15] sm:$0xff]
    %v2957 = vld [vmem:[#allocation15 + $0x8] sm:$0xff]
    %v2958 = vld [vmem:[#allocation15 + $0x10] sm:$0xff]
    %v2959 = vld [vmem:[#allocation15 + $0x18] sm:$0xff]
    %v2961 = vsel %vm608, %v2955, 0
    %2963 = vmatprep.subr.mxu0 0.0
    %2964 = vmatpush1.msra.mxu0 %v2956
    %2965 = vmatprep.subr.mxu0 0.0
    %2966 = vmatpush1.msra.mxu0 %v2957
    %2967 = vmatprep.subr.mxu0 0.0
    %2968 = vmatpush1.msra.mxu0 %v2958
    %2969 = vmatprep.subr.mxu0 0.0
    %2970 = vmatpush1.msra.mxu0 %v2959
    %2971 = vmatprep.subr.mxu0 0.0
    %2972 = vmatpush1.msra.mxu0 0.0
    %2973 = vmatprep.subr.mxu0 0.0
    %2974 = vmatpush1.msra.mxu0 0.0
    %2975 = vmatprep.subr.mxu0 0.0
    %2976 = vmatpush1.msra.mxu0 0.0
    %2977 = vmatprep.subr.mxu0 0.0
    %2978 = vmatpush1.msra.mxu0 0.0
    %2979 = vmatprep.subr.mxu0 0.0
    %2980 = vmatpush1.msra.mxu0 0.0
    %2981 = vmatprep.subr.mxu0 0.0
    %2982 = vmatpush1.msra.mxu0 0.0
    %2983 = vmatprep.subr.mxu0 0.0
    %2984 = vmatpush1.msra.mxu0 0.0
    %2985 = vmatprep.subr.mxu0 0.0
    %2986 = vmatpush1.msra.mxu0 0.0
    %2987 = vmatprep.subr.mxu0 0.0
    %2988 = vmatpush1.msra.mxu0 0.0
    %2989 = vmatprep.subr.mxu0 0.0
    %2990 = vmatpush1.msra.mxu0 0.0
    %2991 = vmatprep.subr.mxu0 0.0
    %2992 = vmatpush1.msra.mxu0 0.0
    %2993 = vmatprep.subr.mxu0 0.0
    %2994 = vmatpush1.msra.mxu0 0.0
    %2995 = vmatprep.subr.mxu0 0.0
    %2996 = vmatpush1.msra.mxu0 0.0
    %2997 = vmatprep.subr.mxu0 0.0
    %2998 = vmatpush1.msra.mxu0 0.0
    %2999 = vmatprep.subr.mxu0 0.0
    %3000 = vmatpush1.msra.mxu0 0.0
    %3001 = vmatprep.subr.mxu0 0.0
    %3002 = vmatpush1.msra.mxu0 0.0
    %3003 = vmatprep.subr.mxu0 0.0
    %3004 = vmatpush1.msra.mxu0 0.0
    %3005 = vmatprep.subr.mxu0 0.0
    %3006 = vmatpush1.msra.mxu0 0.0
    %3007 = vmatprep.subr.mxu0 0.0
    %3008 = vmatpush1.msra.mxu0 0.0
    %3009 = vmatprep.subr.mxu0 0.0
    %3010 = vmatpush1.msra.mxu0 0.0
    %3011 = vmatprep.subr.mxu0 0.0
    %3012 = vmatpush1.msra.mxu0 0.0
    %3013 = vmatprep.subr.mxu0 0.0
    %3014 = vmatpush1.msra.mxu0 0.0
    %3015 = vmatprep.subr.mxu0 0.0
    %3016 = vmatpush1.msra.mxu0 0.0
    %3017 = vmatprep.subr.mxu0 0.0
    %3018 = vmatpush1.msra.mxu0 0.0
    %3019 = vmatprep.subr.mxu0 0.0
    %3020 = vmatpush1.msra.mxu0 0.0
    %3021 = vmatprep.subr.mxu0 0.0
    %3022 = vmatpush1.msra.mxu0 0.0
    %3023 = vmatprep.subr.mxu0 0.0
    %3024 = vmatpush1.msra.mxu0 0.0
    %3025 = vmatprep.subr.mxu0 0.0
    %3026 = vmatpush1.msra.mxu0 0.0
    %3027 = vmatprep.mubr.f32.mxu0 0.0
    %3028 = vmatmul.mubr.f32.gmra.mrb[0].mxu0 %v2961
    %v3029 = vpop.f32.mrb[0].mxu0
    %v3030 = vadd.f32 0.0, %v3029
    %v3031 = vpop.f32.mrb[0].mxu0
    %3032 = vdwg.mxu0
    %v3033 = vadd.f32 %v2768, %v3030
    %v3034 = vld [vmem:[#allocation16] sm:$0x1]
    %v3036 = vlaneseq
    %v3037 = vshrl.u32 %v3036, 7
    %v3038 = vsub.s32 0, %v3037
    %v3039 = vrot.slane %v3034, %v3038
    %v3041 = vadd.f32 %v3033, %v3039
    %v3042 = vld [vmem:[%s53] sm:$0xff]
    %v3043 = vld [vmem:[%s53 + $0x8] sm:$0xff]
    %v3044 = vld [vmem:[%s53 + $0x10] sm:$0xff]
    %v3045 = vld [vmem:[%s53 + $0x18] sm:$0xff]
    %3046 = vmatprep.subr.mxu0 0.0
    %3047 = vmatpush1.msra.mxu0 %v3042
    %3048 = vmatprep.subr.mxu0 0.0
    %3049 = vmatpush1.msra.mxu0 %v3043
    %3050 = vmatprep.subr.mxu0 0.0
    %3051 = vmatpush1.msra.mxu0 %v3044
    %3052 = vmatprep.subr.mxu0 0.0
    %3053 = vmatpush1.msra.mxu0 %v3045
    %3054 = vmatprep.subr.mxu0 0.0
    %3055 = vmatpush1.msra.mxu0 0.0
    %3056 = vmatprep.subr.mxu0 0.0
    %3057 = vmatpush1.msra.mxu0 0.0
    %3058 = vmatprep.subr.mxu0 0.0
    %3059 = vmatpush1.msra.mxu0 0.0
    %3060 = vmatprep.subr.mxu0 0.0
    %3061 = vmatpush1.msra.mxu0 0.0
    %3062 = vmatprep.subr.mxu0 0.0
    %3063 = vmatpush1.msra.mxu0 0.0
    %3064 = vmatprep.subr.mxu0 0.0
    %3065 = vmatpush1.msra.mxu0 0.0
    %3066 = vmatprep.subr.mxu0 0.0
    %3067 = vmatpush1.msra.mxu0 0.0
    %3068 = vmatprep.subr.mxu0 0.0
    %3069 = vmatpush1.msra.mxu0 0.0
    %3070 = vmatprep.subr.mxu0 0.0
    %3071 = vmatpush1.msra.mxu0 0.0
    %3072 = vmatprep.subr.mxu0 0.0
    %3073 = vmatpush1.msra.mxu0 0.0
    %3074 = vmatprep.subr.mxu0 0.0
    %3075 = vmatpush1.msra.mxu0 0.0
    %3076 = vmatprep.subr.mxu0 0.0
    %3077 = vmatpush1.msra.mxu0 0.0
    %3078 = vmatprep.subr.mxu0 0.0
    %3079 = vmatpush1.msra.mxu0 0.0
    %3080 = vmatprep.subr.mxu0 0.0
    %3081 = vmatpush1.msra.mxu0 0.0
    %3082 = vmatprep.subr.mxu0 0.0
    %3083 = vmatpush1.msra.mxu0 0.0
    %3084 = vmatprep.subr.mxu0 0.0
    %3085 = vmatpush1.msra.mxu0 0.0
    %3086 = vmatprep.subr.mxu0 0.0
    %3087 = vmatpush1.msra.mxu0 0.0
    %3088 = vmatprep.subr.mxu0 0.0
    %3089 = vmatpush1.msra.mxu0 0.0
    %3090 = vmatprep.subr.mxu0 0.0
    %3091 = vmatpush1.msra.mxu0 0.0
    %3092 = vmatprep.subr.mxu0 0.0
    %3093 = vmatpush1.msra.mxu0 0.0
    %3094 = vmatprep.subr.mxu0 0.0
    %3095 = vmatpush1.msra.mxu0 0.0
    %3096 = vmatprep.subr.mxu0 0.0
    %3097 = vmatpush1.msra.mxu0 0.0
    %3098 = vmatprep.subr.mxu0 0.0
    %3099 = vmatpush1.msra.mxu0 0.0
    %3100 = vmatprep.subr.mxu0 0.0
    %3101 = vmatpush1.msra.mxu0 0.0
    %3102 = vmatprep.subr.mxu0 0.0
    %3103 = vmatpush1.msra.mxu0 0.0
    %3104 = vmatprep.subr.mxu0 0.0
    %3105 = vmatpush1.msra.mxu0 0.0
    %3106 = vmatprep.subr.mxu0 0.0
    %3107 = vmatpush1.msra.mxu0 0.0
    %3108 = vmatprep.subr.mxu0 0.0
    %3109 = vmatpush1.msra.mxu0 0.0
    %3110 = vmatprep.mubr.f32.mxu0 0.0
    %3111 = vmatmul.mubr.f32.gmra.mrb[0].mxu0 %v2961
    %v3112 = vpop.f32.mrb[0].mxu0
    %v3113 = vadd.f32 0.0, %v3112
    %v3114 = vpop.f32.mrb[0].mxu0
    %3115 = vdwg.mxu0
    %v3116 = vadd.f32 %v2851, %v3113
    %v3117 = vld [vmem:[#allocation18] sm:$0x1]
    %v3119 = vlaneseq
    %v3120 = vshrl.u32 %v3119, 7
    %v3121 = vsub.s32 0, %v3120
    %v3122 = vrot.slane %v3117, %v3121
    %v3124 = vadd.f32 %v3116, %v3122
    %v3125 = vld [vmem:[#allocation19] sm:$0x1]
    %v3127 = vlaneseq
    %v3128 = vshrl.u32 %v3127, 7
    %v3129 = vsub.s32 0, %v3128
    %v3130 = vrot.slane %v3125, %v3129
    %v3132 = vadd.f32 %v3124, %v3130
    %3134 = vrot.lane.b32.xlu0 %v3132, 34
    %v3135 = vpop.permute.xlu0 %3134
    %vm3137 = vcmask 296208
    %3138 = vst.msk [vmem:[%s59] sm:$0x3] %vm3137, %v3135
    %3139 = vrot.lane.b32.xlu0 %v1083, 32
    %v3140 = vpop.permute.xlu0 %3139
    %v3142 = vadd.f32 %v3041, %v3140
    %v3143 = vtanh.pop %v3142
    %v3144 = vld [vmem:[%s45] sm:$0xff]
    %v3145 = vld [vmem:[%s45 + $0x8] sm:$0xff]
    %v3146 = vld [vmem:[%s45 + $0x10] sm:$0xff]
    %v3147 = vld [vmem:[%s45 + $0x18] sm:$0xff]
    %v3148 = vld [vmem:[#allocation13] sm:$0x1]
    %v3150 = vlaneseq
    %v3151 = vshrl.u32 %v3150, 7
    %v3152 = vsub.s32 0, %v3151
    %v3153 = vrot.slane %v3148, %v3152
    %v3156 = vsel %vm608, %v3143, 0
    %3158 = vmatprep.subr.mxu0 0.0
    %3159 = vmatpush1.msra.mxu0 %v3144
    %3160 = vmatprep.subr.mxu0 0.0
    %3161 = vmatpush1.msra.mxu0 %v3145
    %3162 = vmatprep.subr.mxu0 0.0
    %3163 = vmatpush1.msra.mxu0 %v3146
    %3164 = vmatprep.subr.mxu0 0.0
    %3165 = vmatpush1.msra.mxu0 %v3147
    %3166 = vmatprep.subr.mxu0 0.0
    %3167 = vmatpush1.msra.mxu0 0.0
    %3168 = vmatprep.subr.mxu0 0.0
    %3169 = vmatpush1.msra.mxu0 0.0
    %3170 = vmatprep.subr.mxu0 0.0
    %3171 = vmatpush1.msra.mxu0 0.0
    %3172 = vmatprep.subr.mxu0 0.0
    %3173 = vmatpush1.msra.mxu0 0.0
    %3174 = vmatprep.subr.mxu0 0.0
    %3175 = vmatpush1.msra.mxu0 0.0
    %3176 = vmatprep.subr.mxu0 0.0
    %3177 = vmatpush1.msra.mxu0 0.0
    %3178 = vmatprep.subr.mxu0 0.0
    %3179 = vmatpush1.msra.mxu0 0.0
    %3180 = vmatprep.subr.mxu0 0.0
    %3181 = vmatpush1.msra.mxu0 0.0
    %3182 = vmatprep.subr.mxu0 0.0
    %3183 = vmatpush1.msra.mxu0 0.0
    %3184 = vmatprep.subr.mxu0 0.0
    %3185 = vmatpush1.msra.mxu0 0.0
    %3186 = vmatprep.subr.mxu0 0.0
    %3187 = vmatpush1.msra.mxu0 0.0
    %3188 = vmatprep.subr.mxu0 0.0
    %3189 = vmatpush1.msra.mxu0 0.0
    %3190 = vmatprep.subr.mxu0 0.0
    %3191 = vmatpush1.msra.mxu0 0.0
    %3192 = vmatprep.subr.mxu0 0.0
    %3193 = vmatpush1.msra.mxu0 0.0
    %3194 = vmatprep.subr.mxu0 0.0
    %3195 = vmatpush1.msra.mxu0 0.0
    %3196 = vmatprep.subr.mxu0 0.0
    %3197 = vmatpush1.msra.mxu0 0.0
    %3198 = vmatprep.subr.mxu0 0.0
    %3199 = vmatpush1.msra.mxu0 0.0
    %3200 = vmatprep.subr.mxu0 0.0
    %3201 = vmatpush1.msra.mxu0 0.0
    %3202 = vmatprep.subr.mxu0 0.0
    %3203 = vmatpush1.msra.mxu0 0.0
    %3204 = vmatprep.subr.mxu0 0.0
    %3205 = vmatpush1.msra.mxu0 0.0
    %3206 = vmatprep.subr.mxu0 0.0
    %3207 = vmatpush1.msra.mxu0 0.0
    %3208 = vmatprep.subr.mxu0 0.0
    %3209 = vmatpush1.msra.mxu0 0.0
    %3210 = vmatprep.subr.mxu0 0.0
    %3211 = vmatpush1.msra.mxu0 0.0
    %3212 = vmatprep.subr.mxu0 0.0
    %3213 = vmatpush1.msra.mxu0 0.0
    %3214 = vmatprep.subr.mxu0 0.0
    %3215 = vmatpush1.msra.mxu0 0.0
    %3216 = vmatprep.subr.mxu0 0.0
    %3217 = vmatpush1.msra.mxu0 0.0
    %3218 = vmatprep.subr.mxu0 0.0
    %3219 = vmatpush1.msra.mxu0 0.0
    %3220 = vmatprep.subr.mxu0 0.0
    %3221 = vmatpush1.msra.mxu0 0.0
    %3222 = vmatprep.mubr.f32.mxu0 0.0
    %3223 = vmatmul.mubr.f32.gmra.mrb[0].mxu0 %v3156
    %v3224 = vpop.f32.mrb[0].mxu0
    %v3225 = vadd.f32 %v3153, %v3224
    %v3226 = vpop.f32.mrb[0].mxu0
    %3227 = vdwg.mxu0
    %v3228 = vtanh.pop %v3225
    %v3229 = vld [vmem:[%s53] sm:$0xff]
    %v3230 = vld [vmem:[%s53 + $0x8] sm:$0xff]
    %v3231 = vld [vmem:[%s53 + $0x10] sm:$0xff]
    %v3232 = vld [vmem:[%s53 + $0x18] sm:$0xff]
    %v3234 = vsel %vm608, %v3228, 0
    %3236 = vmatprep.subr.mxu0 0.0
    %3237 = vmatpush1.msra.mxu0 %v3229
    %3238 = vmatprep.subr.mxu0 0.0
    %3239 = vmatpush1.msra.mxu0 %v3230
    %3240 = vmatprep.subr.mxu0 0.0
    %3241 = vmatpush1.msra.mxu0 %v3231
    %3242 = vmatprep.subr.mxu0 0.0
    %3243 = vmatpush1.msra.mxu0 %v3232
    %3244 = vmatprep.subr.mxu0 0.0
    %3245 = vmatpush1.msra.mxu0 0.0
    %3246 = vmatprep.subr.mxu0 0.0
    %3247 = vmatpush1.msra.mxu0 0.0
    %3248 = vmatprep.subr.mxu0 0.0
    %3249 = vmatpush1.msra.mxu0 0.0
    %3250 = vmatprep.subr.mxu0 0.0
    %3251 = vmatpush1.msra.mxu0 0.0
    %3252 = vmatprep.subr.mxu0 0.0
    %3253 = vmatpush1.msra.mxu0 0.0
    %3254 = vmatprep.subr.mxu0 0.0
    %3255 = vmatpush1.msra.mxu0 0.0
    %3256 = vmatprep.subr.mxu0 0.0
    %3257 = vmatpush1.msra.mxu0 0.0
    %3258 = vmatprep.subr.mxu0 0.0
    %3259 = vmatpush1.msra.mxu0 0.0
    %3260 = vmatprep.subr.mxu0 0.0
    %3261 = vmatpush1.msra.mxu0 0.0
    %3262 = vmatprep.subr.mxu0 0.0
    %3263 = vmatpush1.msra.mxu0 0.0
    %3264 = vmatprep.subr.mxu0 0.0
    %3265 = vmatpush1.msra.mxu0 0.0
    %3266 = vmatprep.subr.mxu0 0.0
    %3267 = vmatpush1.msra.mxu0 0.0
    %3268 = vmatprep.subr.mxu0 0.0
    %3269 = vmatpush1.msra.mxu0 0.0
    %3270 = vmatprep.subr.mxu0 0.0
    %3271 = vmatpush1.msra.mxu0 0.0
    %3272 = vmatprep.subr.mxu0 0.0
    %3273 = vmatpush1.msra.mxu0 0.0
    %3274 = vmatprep.subr.mxu0 0.0
    %3275 = vmatpush1.msra.mxu0 0.0
    %3276 = vmatprep.subr.mxu0 0.0
    %3277 = vmatpush1.msra.mxu0 0.0
    %3278 = vmatprep.subr.mxu0 0.0
    %3279 = vmatpush1.msra.mxu0 0.0
    %3280 = vmatprep.subr.mxu0 0.0
    %3281 = vmatpush1.msra.mxu0 0.0
    %3282 = vmatprep.subr.mxu0 0.0
    %3283 = vmatpush1.msra.mxu0 0.0
    %3284 = vmatprep.subr.mxu0 0.0
    %3285 = vmatpush1.msra.mxu0 0.0
    %3286 = vmatprep.subr.mxu0 0.0
    %3287 = vmatpush1.msra.mxu0 0.0
    %3288 = vmatprep.subr.mxu0 0.0
    %3289 = vmatpush1.msra.mxu0 0.0
    %3290 = vmatprep.subr.mxu0 0.0
    %3291 = vmatpush1.msra.mxu0 0.0
    %3292 = vmatprep.subr.mxu0 0.0
    %3293 = vmatpush1.msra.mxu0 0.0
    %3294 = vmatprep.subr.mxu0 0.0
    %3295 = vmatpush1.msra.mxu0 0.0
    %3296 = vmatprep.subr.mxu0 0.0
    %3297 = vmatpush1.msra.mxu0 0.0
    %3298 = vmatprep.subr.mxu0 0.0
    %3299 = vmatpush1.msra.mxu0 0.0
    %3300 = vmatprep.mubr.f32.mxu0 0.0
    %3301 = vmatmul.mubr.f32.gmra.mrb[0].mxu0 %v3234
    %v3302 = vpop.f32.mrb[0].mxu0
    %v3303 = vadd.f32 0.0, %v3302
    %v3304 = vpop.f32.mrb[0].mxu0
    %3305 = vdwg.mxu0
    %v3306 = vadd.f32 %v3124, %v3303
    %v3307 = vld [vmem:[#allocation18] sm:$0x1]
    %v3309 = vlaneseq
    %v3310 = vshrl.u32 %v3309, 7
    %v3311 = vsub.s32 0, %v3310
    %v3312 = vrot.slane %v3307, %v3311
    %v3314 = vadd.f32 %v3306, %v3312
    %v3315 = vld [vmem:[#allocation19] sm:$0x1]
    %v3317 = vlaneseq
    %v3318 = vshrl.u32 %v3317, 7
    %v3319 = vsub.s32 0, %v3318
    %v3320 = vrot.slane %v3315, %v3319
    %v3322 = vadd.f32 %v3314, %v3320
    %3324 = vrot.lane.b32.xlu0 %v3322, 37
    %v3325 = vpop.permute.xlu0 %3324
    %vm3327 = vcmask 320808
    %3328 = vst.msk [vmem:[%s59] sm:$0x3] %vm3327, %v3325
    // Predicated region
    $region166: #{siflow_off_forward.1} parent=1 // pred_check
      _
    $region167: #{siflow_off_forward.1} parent=1 // pred_check_branch
      %3330 = sbr.rel (0) target = $region169
    $region168: #{siflow_off_forward.1} parent=1 // pred_region
      _
    $region169: #{siflow_off_forward.1} parent=1 // pred_fallthru
      _
    // Predicated region
    $region170: #{siflow_off_forward.1} parent=1 // pred_check
      _
    $region171: #{siflow_off_forward.1} parent=1 // pred_check_branch
      %3332 = sbr.rel (0) target = $region173
    $region172: #{siflow_off_forward.1} parent=1 // pred_region
      _
    $region173: #{siflow_off_forward.1} parent=1 // pred_fallthru
      _
    %3333 = vsyncpa [#allocation3], 1
    %3334 = vsyncpa [#allocation5], 1
    %3335 = vsyncpa [#allocation8], 1
    %3336 = vsyncpa [#allocation11], 1
    %3337 = vsyncpa [#allocation14], 1
    %3338 = vsyncpa [#allocation17], 1
    %3339 = vsyncpa [#allocation20], 1

</llo_original>
